<compile_context>
chip_gen: v6e
topology: v6e:2x2x1
jax: 0.10.0
libtpu: 0.0.40
codegen_flags: <defaults>
</compile_context>

<pallas_src>
import functools
import math

import numpy as np
import jax
import jax.numpy as jnp
from jax import lax
from jax.experimental import pallas as pl
from jax.experimental.pallas import tpu as pltpu


# Dynamics hyper-parameters fixed by the reference module.
_LR = 0.5
_WD = 0.5
_BETA1 = 0.9
_BETA2 = 0.999
_EPS = 1e-8

_LANE = 128


def _pad_to(n, mult):
    return ((n + mult - 1) // mult) * mult


# ---------------------------------------------------------------------------
# One-time conv(x): im2col in XLA (one-time), matmul in a Pallas kernel.
# Output orientation (Cout, B*Hp*Wp) keeps the store lane-dense.
# ---------------------------------------------------------------------------

def _conv_matmul_kernel(w_ref, p_ref, b_ref, o_ref):
    o_ref[...] = (jnp.dot(w_ref[...], p_ref[...],
                          preferred_element_type=jnp.float32)
                  + b_ref[...])


def conv2d_nchw(x, w, b, stride=1, padding=1):
    """PyTorch-equivalent Conv2d (cross-correlation, bias)."""
    B, Cin, H, W = x.shape
    Cout, _, kh, kw = w.shape
    Hp = (H + 2 * padding - kh) // stride + 1
    Wp = (W + 2 * padding - kw) // stride + 1
    xp = jnp.pad(x, ((0, 0), (0, 0), (padding, padding), (padding, padding)))
    cols = []
    for di in range(kh):
        for dj in range(kw):
            cols.append(xp[:, :, di:di + stride * Hp:stride,
                              dj:dj + stride * Wp:stride])
    pat = jnp.stack(cols, axis=2)                      # (B, Cin, kh*kw, Hp, Wp)
    K = Cin * kh * kw
    N = B * Hp * Wp
    patT = pat.transpose(1, 2, 0, 3, 4).reshape(K, N)  # (K, B*Hp*Wp)
    w_flat = w.reshape(Cout, K)

    # Tile over the lane-dense N axis only; Cout and K stay whole blocks.
    tn = N
    for cand in (2048, 1024, 512, 256, 128):
        if N % cand == 0:
            tn = cand
            break

    out_t = pl.pallas_call(
        _conv_matmul_kernel,
        out_shape=jax.ShapeDtypeStruct((Cout, N), jnp.float32),
        grid=(N // tn,),
        in_specs=[
            pl.BlockSpec((Cout, K), lambda j: (0, 0)),
            pl.BlockSpec((K, tn), lambda j: (0, j)),
            pl.BlockSpec((Cout, 1), lambda j: (0, 0)),
        ],
        out_specs=pl.BlockSpec((Cout, tn), lambda j: (0, j)),
        compiler_params=pltpu.CompilerParams(
            dimension_semantics=("parallel",)),
    )(w_flat, patT, b.reshape(Cout, 1))

    return out_t.reshape(Cout, B, Hp, Wp).transpose(1, 0, 2, 3)


# ---------------------------------------------------------------------------
# Fused T-step dynamics kernel: drives + Adam + hard_sigmoid, all in VMEM.
# ---------------------------------------------------------------------------

def _make_dynamics_kernel(num_fc, T, beta):
    n_layers = num_fc + 1

    def kernel(*refs):
        it = iter(refs)
        ss_ref = next(it)        # (T,) f32 SMEM: lr / (1 - beta1**step)
        rbc2_ref = next(it)      # (T,) f32 SMEM: 1 / sqrt(1 - beta2**step)
        conv_ref = next(it)      # (bb, P0) f32: conv(x) drive (constant)
        w_bu_ref, w_td_ref, b_ref = [], [], []
        for _ in range(num_fc):
            w_bu_ref.append(next(it))    # (P[k],   P[k+1])  mxu dtype
            w_td_ref.append(next(it))    # (P[k+1], P[k])    mxu dtype
            b_ref.append(next(it))       # (1, P[k+1])       f32
        ytgt_ref = next(it)              # (bb, P[-1]) f32 padded one-hot target
        n_in = [next(it) for _ in range(n_layers)]
        n_out = [next(it) for _ in range(n_layers)]

        mxu_dt = w_bu_ref[0].dtype

        # Hoist all loop-invariant reads out of the T-step loop: weights,
        # biases, conv drive and target are loaded once and stay VMEM-resident.
        w_bu = [r[...] for r in w_bu_ref]
        w_td = [r[...] for r in w_td_ref]
        bias = [r[...] for r in b_ref]
        conv_dr = conv_ref[...]
        ytgt = ytgt_ref[...] if beta != 0.0 else None

        def mm(a, w):                # f32 activations -> MXU dtype, f32 accum
            return jnp.dot(a.astype(mxu_dt), w,
                           preferred_element_type=jnp.float32)

        def step(t, carry):
            ns, ms, vs = carry
            ss = ss_ref[t]           # step size  lr / bc1(t)
            rbc2 = rbc2_ref[t]       # 1 / sqrt(bc2(t))

            # drives = dPhi/d(neuron), all evaluated at the current state
            drives = [conv_dr + mm(ns[1], w_td[0])]
            for k in range(num_fc):
                d = mm(ns[k], w_bu[k]) + bias[k]
                if k + 1 < num_fc:
                    d = d + mm(ns[k + 2], w_td[k + 1])
                drives.append(d)
            if beta != 0.0:          # MSE nudge: Phi -= beta*0.5*||n_L - y||^2
                drives[-1] = drives[-1] - beta * (ns[-1] - ytgt)

            # fused Adam(lr=0.5, wd=0.5) step + hard_sigmoid clamp
            new_ns, new_ms, new_vs = [], [], []
            for n, m, v, d in zip(ns, ms, vs, drives):
                g = -d + _WD * n
                m = _BETA1 * m + (1.0 - _BETA1) * g
                v = _BETA2 * v + (1.0 - _BETA2) * (g * g)
                denom = jnp.sqrt(v) * rbc2 + _EPS
                n = n - ss * (m / denom)
                # hard_sigmoid(x) = (1 + hardtanh(2x-1))/2 = clamp(x, 0, 1)
                new_ns.append(jnp.clip(n, 0.0, 1.0))
                new_ms.append(m)
                new_vs.append(v)
            return new_ns, new_ms, new_vs

        ns0 = [r[...] for r in n_in]
        ns, _, _ = lax.fori_loop(
            0, T, step,
            (ns0, [jnp.zeros_like(n) for n in ns0],
                  [jnp.zeros_like(n) for n in ns0]))
        for r, n in zip(n_out, ns):
            r[...] = n

    return kernel


def _fused_dynamics(conv_pad, w_bu, w_td, b_pad, ytgt_pad, n_pads,
                    ss_tab, rbc2_tab, *, T, beta, bb):
    num_fc = len(w_bu)
    Bp, P0 = conv_pad.shape
    P = [P0] + [w.shape[1] for w in w_bu]

    smem = pl.BlockSpec(memory_space=pltpu.MemorySpace.SMEM)

    def batch_spec(width):
        return pl.BlockSpec((bb, width), lambda i: (i, 0))

    def whole_spec(shape):
        return pl.BlockSpec(shape, lambda i: (0,) * len(shape))

    in_specs = [smem, smem, batch_spec(P[0])]
    args = [ss_tab, rbc2_tab, conv_pad]
    for k in range(num_fc):
        in_specs += [whole_spec(w_bu[k].shape), whole_spec(w_td[k].shape),
                     whole_spec(b_pad[k].shape)]
        args += [w_bu[k], w_td[k], b_pad[k]]
    in_specs.append(batch_spec(P[-1]))
    args.append(ytgt_pad)
    for k in range(num_fc + 1):
        in_specs.append(batch_spec(P[k]))
        args.append(n_pads[k])

    out_specs = tuple(batch_spec(P[k]) for k in range(num_fc + 1))
    out_shape = tuple(jax.ShapeDtypeStruct((Bp, P[k]), jnp.float32)
                      for k in range(num_fc + 1))

    return pl.pallas_call(
        _make_dynamics_kernel(num_fc, T, beta),
        out_shape=out_shape,
        grid=(Bp // bb,),
        in_specs=in_specs,
        out_specs=out_specs,
        compiler_params=pltpu.CompilerParams(
            dimension_semantics=("parallel",),
            vmem_limit_bytes=32 * 1024 * 1024),
    )(*args)


# ---------------------------------------------------------------------------
# Whole forward (conv once + padding + fused dynamics), jitted.
# ---------------------------------------------------------------------------

@functools.partial(jax.jit,
                   static_argnames=("T", "beta", "stride", "padding", "bb"))
def _forward_jit(conv_w, conv_b, w_bu, w_td, b_pad, x, y, n_inits,
                 ss_tab, rbc2_tab, *, T, beta, stride, padding, bb):
    B = x.shape[0]
    conv = conv2d_nchw(x, conv_w, conv_b, stride=stride, padding=padding)
    _, cout, hh, ww = conv.shape
    cflat = cout * hh * ww
    conv_flat = conv.reshape(B, cflat)

    num_fc = len(w_bu)
    P = [w_bu[0].shape[0]] + [w_bu[k].shape[1] for k in range(num_fc)]
    S = [cflat] + [n_inits[k + 1].shape[1] for k in range(num_fc)]
    Bp = _pad_to(B, bb)

    def pad2(a, rows, cols):
        out = jnp.zeros((rows, cols), jnp.float32)
        return out.at[:a.shape[0], :a.shape[1]].set(a.astype(jnp.float32))

    conv_pad = pad2(conv_flat, Bp, P[0])
    n_pads = [pad2(n_inits[0].reshape(B, cflat), Bp, P[0])]
    for k in range(num_fc):
        n_pads.append(pad2(n_inits[k + 1], Bp, P[k + 1]))
    y1h = jax.nn.one_hot(y, S[-1], dtype=jnp.float32)
    ytgt_pad = pad2(y1h, Bp, P[-1])

    outs = _fused_dynamics(conv_pad, list(w_bu), list(w_td), list(b_pad),
                           ytgt_pad, n_pads, ss_tab, rbc2_tab,
                           T=T, beta=beta, bb=bb)

    result = [outs[0][:B, :cflat].reshape(B, cout, hh, ww)]
    for k in range(num_fc):
        result.append(outs[k + 1][:B, :S[k + 1]])
    return result


# ---------------------------------------------------------------------------
# Module port
# ---------------------------------------------------------------------------

class PCNNStochastic:
    """JAX/Pallas port of P_CNN_Stochastic: one conv layer + fc stack,
    Identity pools, hard_sigmoid activation, MSE criterion, Adam dynamics."""

    def __init__(self, in_size, channels, kernels, strides, fc, paddings, key,
                 pools=None, mxu_dtype=jnp.bfloat16):
        assert len(channels) == 2, "demo supports a single conv layer"
        # TODO(synk): Max/Avg pooling layers and the softmax/CrossEntropy
        # read-out are not implemented; demo config uses Identity pools
        # (class name has no 'Pool'), matching the reference size math.
        self.in_size = in_size
        self.channels = channels
        self.kernels = kernels
        self.strides = strides
        self.paddings = paddings
        self.fc = list(fc)
        self.nc = fc[-1]
        self.mxu_dtype = mxu_dtype

        size = in_size
        for idx in range(len(channels) - 1):
            size = (size + 2 * paddings[idx] - kernels[idx]) // strides[idx] + 1
        self.conv_out_size = size
        cflat = size * size * channels[-1]
        self.fc_sizes = [cflat] + list(fc)

        keys = jax.random.split(key, 2 * (len(channels) - 1 + len(fc)))
        ki = 0
        self.conv_w, self.conv_b = [], []
        for idx in range(len(channels) - 1):
            fan_in = channels[idx] * kernels[idx] * kernels[idx]
            bound = 1.0 / math.sqrt(fan_in)
            w = jax.random.uniform(keys[ki], (channels[idx + 1], channels[idx],
                                              kernels[idx], kernels[idx]),
                                   jnp.float32, -bound, bound); ki += 1
            b = jax.random.uniform(keys[ki], (channels[idx + 1],),
                                   jnp.float32, -bound, bound); ki += 1
            self.conv_w.append(w); self.conv_b.append(b)

        self.fc_w, self.fc_b = [], []
        for idx in range(len(fc)):
            fan_in = self.fc_sizes[idx]
            bound = 1.0 / math.sqrt(fan_in)
            w = jax.random.uniform(keys[ki],
                                   (self.fc_sizes[idx + 1], self.fc_sizes[idx]),
                                   jnp.float32, -bound, bound); ki += 1
            b = jax.random.uniform(keys[ki], (self.fc_sizes[idx + 1],),
                                   jnp.float32, -bound, bound); ki += 1
            self.fc_w.append(w); self.fc_b.append(b)

        # Lane-padded (multiples of 128), pre-transposed weights for the fused
        # dynamics kernel: both orientations built ONCE here, so the T-step
        # loop never re-transposes; cast to bf16 for the MXU (state stays f32).
        self.P = [_pad_to(s, _LANE) for s in self.fc_sizes]
        self.fc_w_bu, self.fc_w_td, self.fc_b_pad = [], [], []
        for k in range(len(fc)):
            Pk, Pk1 = self.P[k], self.P[k + 1]
            w = self.fc_w[k]                               # (S[k+1], S[k])
            w_td = jnp.zeros((Pk1, Pk), jnp.float32
                             ).at[:w.shape[0], :w.shape[1]].set(w)
            self.fc_w_td.append(w_td.astype(mxu_dtype))    # n_{k+1} @ w_td
            self.fc_w_bu.append(w_td.T.astype(mxu_dtype))  # n_k @ w_bu
            self.fc_b_pad.append(
                jnp.zeros((1, Pk1), jnp.float32
                          ).at[0, :self.fc_sizes[k + 1]].set(self.fc_b[k]))

    def init_neurons(self, mbs):
        s = self.conv_out_size
        neurons = [jnp.zeros((mbs, self.channels[-1], s, s), jnp.float32)]
        for width in self.fc:
            neurons.append(jnp.zeros((mbs, width), jnp.float32))
        return neurons

    def forward(self, x, y, neurons, T, beta=0.0):
        T = int(T)
        steps = max(T, 1)
        B = x.shape[0]
        # Batch tile: full sublanes always; up to 128 rows per tile so larger
        # batches feed the MXU with a full M while still sharding across cores.
        bb = min(_pad_to(B, 8), 128)
        # Per-step Adam scalars (exact, host-side doubles) -> SMEM tables.
        ss_tab = jnp.asarray(np.array(
            [_LR / (1.0 - _BETA1 ** (t + 1)) for t in range(steps)],
            dtype=np.float32))
        rbc2_tab = jnp.asarray(np.array(
            [1.0 / math.sqrt(1.0 - _BETA2 ** (t + 1)) for t in range(steps)],
            dtype=np.float32))
        return _forward_jit(
            self.conv_w[0], self.conv_b[0],
            tuple(self.fc_w_bu), tuple(self.fc_w_td), tuple(self.fc_b_pad),
            x, y, tuple(neurons), ss_tab, rbc2_tab,
            T=T, beta=float(beta),
            stride=self.strides[0], padding=self.paddings[0], bb=bb)


if __name__ == "__main__":
    key = jax.random.PRNGKey(0)
    k_param, k_x, k_y = jax.random.split(key, 3)

    B, Cin, H = 2, 4, 16
    model = PCNNStochastic(in_size=H, channels=[Cin, 8], kernels=[3],
                           strides=[1], fc=[10], paddings=[1], key=k_param)

    x = jax.random.normal(k_x, (B, Cin, H, H), jnp.float32)
    y = jax.random.randint(k_y, (B,), 0, 10)

    # free phase (beta = 0) and a nudged phase (beta != 0)
    neurons = model.init_neurons(B)
    free = model.forward(x, y, neurons, T=5, beta=0.0)
    free = [jax.block_until_ready(n) for n in free]
    nudged = model.forward(x, y, free, T=3, beta=0.5)
    nudged = [jax.block_until_ready(n) for n in nudged]

    assert free[0].shape == (B, 8, H, H) and free[1].shape == (B, 10)
    assert nudged[0].shape == (B, 8, H, H) and nudged[1].shape == (B, 10)
    assert all(bool(jnp.all(jnp.isfinite(n))) for n in free + nudged)
    print("KERNEL_OK")
</pallas_src>

<mosaic_0001>
module attributes {stable_mosaic.version = 11 : i64} {
  func.func @_conv_matmul_kernel(%arg0: i32, %arg1: memref<8x36xf32, #tpu.memory_space<vmem>>, %arg2: memref<36x512xf32, #tpu.memory_space<vmem>>, %arg3: memref<8x1xf32, #tpu.memory_space<vmem>>, %arg4: memref<8x512xf32, #tpu.memory_space<vmem>>) attributes {dimension_semantics = [#tpu.dimension_semantics<parallel>], iteration_bounds = array<i64: 1>, scalar_prefetch = 0 : i64, scratch_operands = 0 : i64, tpu.core_type = #tpu.core_type<tc>, window_params = [{pipeline_mode = #tpu.pipeline_mode<synchronous>, transform_indices = @transform_0, window_bounds = array<i64: 8, 36>}, {transform_indices = @transform_1, window_bounds = array<i64: 36, 512>}, {pipeline_mode = #tpu.pipeline_mode<synchronous>, transform_indices = @transform_2, window_bounds = array<i64: 8, 1>}, {transform_indices = @transform_3, window_bounds = array<i64: 8, 512>}]} {
    %c0 = arith.constant 0 : index
    %c0_0 = arith.constant 0 : index
    %0 = vector.load %arg1[%c0, %c0_0] : memref<8x36xf32, #tpu.memory_space<vmem>>, vector<8x36xf32>
    %c0_1 = arith.constant 0 : index
    %c0_2 = arith.constant 0 : index
    %1 = vector.load %arg2[%c0_1, %c0_2] : memref<36x512xf32, #tpu.memory_space<vmem>>, vector<36x512xf32>
    %cst = arith.constant dense<0.000000e+00> : vector<8x512xf32>
    %2 = tpu.matmul %0, %1, %cst {dimension_numbers = #tpu.dot_dimension_numbers<[1], [0], [0], [1], [0, 0, 1, 1], [], []>} : vector<8x36xf32>, vector<36x512xf32>, vector<8x512xf32> -> vector<8x512xf32>
    %c0_3 = arith.constant 0 : index
    %c0_4 = arith.constant 0 : index
    %3 = vector.load %arg3[%c0_3, %c0_4] : memref<8x1xf32, #tpu.memory_space<vmem>>, vector<8x1xf32>
    %4 = vector.broadcast %3 : vector<8x1xf32> to vector<8x512xf32>
    %5 = arith.addf %2, %4 : vector<8x512xf32>
    %c0_5 = arith.constant 0 : index
    %c0_6 = arith.constant 0 : index
    %6 = vector.load %arg4[%c0_5, %c0_6] : memref<8x512xf32, #tpu.memory_space<vmem>>, vector<8x512xf32>
    tpu.vector_store %arg4[%c0_5, %c0_6], %5 {strides = array<i32>} : memref<8x512xf32, #tpu.memory_space<vmem>>, vector<8x512xf32>,
    return
  }
  func.func @transform_0(%arg0: i32) -> (i32, i32) {
    %c0_i32 = arith.constant 0 : i32
    %c0_i32_0 = arith.constant 0 : i32
    %c0_i32_1 = arith.constant 0 : i32
    return %c0_i32, %c0_i32_0 : i32, i32
  }
  func.func @transform_1(%arg0: i32) -> (i32, i32) {
    %c0_i32 = arith.constant 0 : i32
    %c0_i32_0 = arith.constant 0 : i32
    return %c0_i32, %arg0 : i32, i32
  }
  func.func @transform_2(%arg0: i32) -> (i32, i32) {
    %c0_i32 = arith.constant 0 : i32
    %c0_i32_0 = arith.constant 0 : i32
    %c0_i32_1 = arith.constant 0 : i32
    return %c0_i32, %c0_i32_0 : i32, i32
  }
  func.func @transform_3(%arg0: i32) -> (i32, i32) {
    %c0_i32 = arith.constant 0 : i32
    %c0_i32_0 = arith.constant 0 : i32
    return %c0_i32, %arg0 : i32, i32
  }
}

module attributes {stable_mosaic.version = 11 : i64} {
  func.func @kernel(%arg0: i32, %arg1: memref<5xf32, #tpu.memory_space<smem>>, %arg2: memref<5xf32, #tpu.memory_space<smem>>, %arg3: memref<8x2048xf32, #tpu.memory_space<vmem>>, %arg4: memref<2048x128xbf16, #tpu.memory_space<vmem>>, %arg5: memref<128x2048xbf16, #tpu.memory_space<vmem>>, %arg6: memref<1x128xf32, #tpu.memory_space<vmem>>, %arg7: memref<8x128xf32, #tpu.memory_space<vmem>>, %arg8: memref<8x2048xf32, #tpu.memory_space<vmem>>, %arg9: memref<8x128xf32, #tpu.memory_space<vmem>>, %arg10: memref<8x2048xf32, #tpu.memory_space<vmem>>, %arg11: memref<8x128xf32, #tpu.memory_space<vmem>>) attributes {dimension_semantics = [#tpu.dimension_semantics<parallel>], iteration_bounds = array<i64: 1>, scalar_prefetch = 0 : i64, scratch_operands = 0 : i64, tpu.core_type = #tpu.core_type<tc>, window_params = [{transform_indices = @transform_0, window_bounds = array<i64: 5>}, {transform_indices = @transform_1, window_bounds = array<i64: 5>}, {transform_indices = @transform_2, window_bounds = array<i64: 8, 2048>}, {pipeline_mode = #tpu.pipeline_mode<synchronous>, transform_indices = @transform_3, window_bounds = array<i64: 2048, 128>}, {pipeline_mode = #tpu.pipeline_mode<synchronous>, transform_indices = @transform_4, window_bounds = array<i64: 128, 2048>}, {pipeline_mode = #tpu.pipeline_mode<synchronous>, transform_indices = @transform_5, window_bounds = array<i64: 1, 128>}, {transform_indices = @transform_6, window_bounds = array<i64: 8, 128>}, {transform_indices = @transform_7, window_bounds = array<i64: 8, 2048>}, {transform_indices = @transform_8, window_bounds = array<i64: 8, 128>}, {transform_indices = @transform_9, window_bounds = array<i64: 8, 2048>}, {transform_indices = @transform_10, window_bounds = array<i64: 8, 128>}]} {
    %c0 = arith.constant 0 : index
    %c0_0 = arith.constant 0 : index
    %0 = vector.load %arg4[%c0, %c0_0] : memref<2048x128xbf16, #tpu.memory_space<vmem>>, vector<2048x128xbf16>
    %c0_1 = arith.constant 0 : index
    %c0_2 = arith.constant 0 : index
    %1 = vector.load %arg5[%c0_1, %c0_2] : memref<128x2048xbf16, #tpu.memory_space<vmem>>, vector<128x2048xbf16>
    %c0_3 = arith.constant 0 : index
    %c0_4 = arith.constant 0 : index
    %2 = vector.load %arg6[%c0_3, %c0_4] : memref<1x128xf32, #tpu.memory_space<vmem>>, vector<1x128xf32>
    %c0_5 = arith.constant 0 : index
    %c0_6 = arith.constant 0 : index
    %3 = vector.load %arg3[%c0_5, %c0_6] : memref<8x2048xf32, #tpu.memory_space<vmem>>, vector<8x2048xf32>
    %c0_7 = arith.constant 0 : index
    %c0_8 = arith.constant 0 : index
    %4 = vector.load %arg8[%c0_7, %c0_8] : memref<8x2048xf32, #tpu.memory_space<vmem>>, vector<8x2048xf32>
    %c0_9 = arith.constant 0 : index
    %c0_10 = arith.constant 0 : index
    %5 = vector.load %arg9[%c0_9, %c0_10] : memref<8x128xf32, #tpu.memory_space<vmem>>, vector<8x128xf32>
    %cst = arith.constant 0.000000e+00 : f32
    %6 = vector.broadcast %cst : f32 to vector<8x2048xf32>
    %cst_11 = arith.constant 0.000000e+00 : f32
    %7 = vector.broadcast %cst_11 : f32 to vector<8x128xf32>
    %cst_12 = arith.constant 0.000000e+00 : f32
    %8 = vector.broadcast %cst_12 : f32 to vector<8x2048xf32>
    %cst_13 = arith.constant 0.000000e+00 : f32
    %9 = vector.broadcast %cst_13 : f32 to vector<8x128xf32>
    %c0_i32 = arith.constant 0 : i32
    %c5_i32 = arith.constant 5 : i32
    %10 = arith.addi %c0_i32, %c5_i32 : i32
    %c1_i32 = arith.constant 1 : i32
    %11:6 = scf.for %arg12 = %c0_i32 to %10 step %c1_i32 iter_args(%arg13 = %4, %arg14 = %5, %arg15 = %6, %arg16 = %7, %arg17 = %8, %arg18 = %9) -> (vector<8x2048xf32>, vector<8x128xf32>, vector<8x2048xf32>, vector<8x128xf32>, vector<8x2048xf32>, vector<8x128xf32>)  : i32 {
      %14 = arith.index_cast %arg12 : i32 to index
      %15 = memref.load %arg1[%14] : memref<5xf32, #tpu.memory_space<smem>>
      %16 = arith.index_cast %arg12 : i32 to index
      %17 = memref.load %arg2[%16] : memref<5xf32, #tpu.memory_space<smem>>
      %18 = arith.truncf %arg14 : vector<8x128xf32> to vector<8x128xbf16>
      %cst_19 = arith.constant dense<0.000000e+00> : vector<8x2048xf32>
      %19 = tpu.matmul %18, %1, %cst_19 {dimension_numbers = #tpu.dot_dimension_numbers<[1], [0], [0], [1], [0, 0, 1, 1], [], []>} : vector<8x128xbf16>, vector<128x2048xbf16>, vector<8x2048xf32> -> vector<8x2048xf32>
      %20 = arith.addf %3, %19 : vector<8x2048xf32>
      %21 = arith.truncf %arg13 : vector<8x2048xf32> to vector<8x2048xbf16>
      %cst_20 = arith.constant dense<0.000000e+00> : vector<8x128xf32>
      %22 = tpu.matmul %21, %0, %cst_20 {dimension_numbers = #tpu.dot_dimension_numbers<[1], [0], [0], [1], [0, 0, 1, 1], [], []>} : vector<8x2048xbf16>, vector<2048x128xbf16>, vector<8x128xf32> -> vector<8x128xf32>
      %23 = vector.broadcast %2 : vector<1x128xf32> to vector<8x128xf32>
      %24 = arith.addf %22, %23 : vector<8x128xf32>
      %cst_21 = arith.constant 0.000000e+00 : f32
      %25 = vector.broadcast %cst_21 : f32 to vector<8x2048xf32>
      %26 = arith.subf %25, %20 : vector<8x2048xf32>
      %cst_22 = arith.constant 5.000000e-01 : f32
      %27 = vector.broadcast %cst_22 : f32 to vector<8x2048xf32>
      %28 = arith.mulf %27, %arg13 : vector<8x2048xf32>
      %29 = arith.addf %26, %28 : vector<8x2048xf32>
      %cst_23 = arith.constant 0.899999976 : f32
      %30 = vector.broadcast %cst_23 : f32 to vector<8x2048xf32>
      %31 = arith.mulf %30, %arg15 : vector<8x2048xf32>
      %cst_24 = arith.constant 1.000000e-01 : f32
      %32 = vector.broadcast %cst_24 : f32 to vector<8x2048xf32>
      %33 = arith.mulf %32, %29 : vector<8x2048xf32>
      %34 = arith.addf %31, %33 : vector<8x2048xf32>
      %cst_25 = arith.constant 9.990000e-01 : f32
      %35 = vector.broadcast %cst_25 : f32 to vector<8x2048xf32>
      %36 = arith.mulf %35, %arg17 : vector<8x2048xf32>
      %37 = arith.mulf %29, %29 : vector<8x2048xf32>
      %cst_26 = arith.constant 1.000000e-03 : f32
      %38 = vector.broadcast %cst_26 : f32 to vector<8x2048xf32>
      %39 = arith.mulf %38, %37 : vector<8x2048xf32>
      %40 = arith.addf %36, %39 : vector<8x2048xf32>
      %41 = math.sqrt %40 : vector<8x2048xf32>
      %42 = vector.broadcast %17 : f32 to vector<8x2048xf32>
      %43 = arith.mulf %41, %42 : vector<8x2048xf32>
      %cst_27 = arith.constant 9.99999993E-9 : f32
      %44 = vector.broadcast %cst_27 : f32 to vector<8x2048xf32>
      %45 = arith.addf %43, %44 : vector<8x2048xf32>
      %46 = arith.divf %34, %45 : vector<8x2048xf32>
      %47 = vector.broadcast %15 : f32 to vector<8x2048xf32>
      %48 = arith.mulf %47, %46 : vector<8x2048xf32>
      %49 = arith.subf %arg13, %48 : vector<8x2048xf32>
      %cst_28 = arith.constant 0.000000e+00 : f32
      %cst_29 = arith.constant 1.000000e+00 : f32
      %50 = vector.broadcast %cst_28 : f32 to vector<8x2048xf32>
      %51 = arith.maximumf %50, %49 : vector<8x2048xf32>
      %52 = vector.broadcast %cst_29 : f32 to vector<8x2048xf32>
      %53 = arith.minimumf %52, %51 : vector<8x2048xf32>
      %cst_30 = arith.constant 0.000000e+00 : f32
      %54 = vector.broadcast %cst_30 : f32 to vector<8x128xf32>
      %55 = arith.subf %54, %24 : vector<8x128xf32>
      %cst_31 = arith.constant 5.000000e-01 : f32
      %56 = vector.broadcast %cst_31 : f32 to vector<8x128xf32>
      %57 = arith.mulf %56, %arg14 : vector<8x128xf32>
      %58 = arith.addf %55, %57 : vector<8x128xf32>
      %cst_32 = arith.constant 0.899999976 : f32
      %59 = vector.broadcast %cst_32 : f32 to vector<8x128xf32>
      %60 = arith.mulf %59, %arg16 : vector<8x128xf32>
      %cst_33 = arith.constant 1.000000e-01 : f32
      %61 = vector.broadcast %cst_33 : f32 to vector<8x128xf32>
      %62 = arith.mulf %61, %58 : vector<8x128xf32>
      %63 = arith.addf %60, %62 : vector<8x128xf32>
      %cst_34 = arith.constant 9.990000e-01 : f32
      %64 = vector.broadcast %cst_34 : f32 to vector<8x128xf32>
      %65 = arith.mulf %64, %arg18 : vector<8x128xf32>
      %66 = arith.mulf %58, %58 : vector<8x128xf32>
      %cst_35 = arith.constant 1.000000e-03 : f32
      %67 = vector.broadcast %cst_35 : f32 to vector<8x128xf32>
      %68 = arith.mulf %67, %66 : vector<8x128xf32>
      %69 = arith.addf %65, %68 : vector<8x128xf32>
      %70 = math.sqrt %69 : vector<8x128xf32>
      %71 = vector.broadcast %17 : f32 to vector<8x128xf32>
      %72 = arith.mulf %70, %71 : vector<8x128xf32>
      %cst_36 = arith.constant 9.99999993E-9 : f32
      %73 = vector.broadcast %cst_36 : f32 to vector<8x128xf32>
      %74 = arith.addf %72, %73 : vector<8x128xf32>
      %75 = arith.divf %63, %74 : vector<8x128xf32>
      %76 = vector.broadcast %15 : f32 to vector<8x128xf32>
      %77 = arith.mulf %76, %75 : vector<8x128xf32>
      %78 = arith.subf %arg14, %77 : vector<8x128xf32>
      %cst_37 = arith.constant 0.000000e+00 : f32
      %cst_38 = arith.constant 1.000000e+00 : f32
      %79 = vector.broadcast %cst_37 : f32 to vector<8x128xf32>
      %80 = arith.maximumf %79, %78 : vector<8x128xf32>
      %81 = vector.broadcast %cst_38 : f32 to vector<8x128xf32>
      %82 = arith.minimumf %81, %80 : vector<8x128xf32>
      scf.yield %53, %82, %34, %63, %40, %69 : vector<8x2048xf32>, vector<8x128xf32>, vector<8x2048xf32>, vector<8x128xf32>, vector<8x2048xf32>, vector<8x128xf32>
    }
    %c5_i32_14 = arith.constant 5 : i32
    %c0_15 = arith.constant 0 : index
    %c0_16 = arith.constant 0 : index
    %12 = vector.load %arg10[%c0_15, %c0_16] : memref<8x2048xf32, #tpu.memory_space<vmem>>, vector<8x2048xf32>
    tpu.vector_store %arg10[%c0_15, %c0_16], %11#0 {strides = array<i32>} : memref<8x2048xf32, #tpu.memory_space<vmem>>, vector<8x2048xf32>,
    %c0_17 = arith.constant 0 : index
    %c0_18 = arith.constant 0 : index
    %13 = vector.load %arg11[%c0_17, %c0_18] : memref<8x128xf32, #tpu.memory_space<vmem>>, vector<8x128xf32>
    tpu.vector_store %arg11[%c0_17, %c0_18], %11#1 {strides = array<i32>} : memref<8x128xf32, #tpu.memory_space<vmem>>, vector<8x128xf32>,
    return
  }
  func.func @transform_0(%arg0: i32) -> i32 {
    %c0_i32 = arith.constant 0 : i32
    %c0_i32_0 = arith.constant 0 : i32
    return %c0_i32 : i32
  }
  func.func @transform_1(%arg0: i32) -> i32 {
    %c0_i32 = arith.constant 0 : i32
    %c0_i32_0 = arith.constant 0 : i32
    return %c0_i32 : i32
  }
  func.func @transform_2(%arg0: i32) -> (i32, i32) {
    %c0_i32 = arith.constant 0 : i32
    %c0_i32_0 = arith.constant 0 : i32
    return %arg0, %c0_i32 : i32, i32
  }
  func.func @transform_3(%arg0: i32) -> (i32, i32) {
    %c0_i32 = arith.constant 0 : i32
    %c0_i32_0 = arith.constant 0 : i32
    %c0_i32_1 = arith.constant 0 : i32
    return %c0_i32, %c0_i32_0 : i32, i32
  }
  func.func @transform_4(%arg0: i32) -> (i32, i32) {
    %c0_i32 = arith.constant 0 : i32
    %c0_i32_0 = arith.constant 0 : i32
    %c0_i32_1 = arith.constant 0 : i32
    return %c0_i32, %c0_i32_0 : i32, i32
  }
  func.func @transform_5(%arg0: i32) -> (i32, i32) {
    %c0_i32 = arith.constant 0 : i32
    %c0_i32_0 = arith.constant 0 : i32
    %c0_i32_1 = arith.constant 0 : i32
    return %c0_i32, %c0_i32_0 : i32, i32
  }
  func.func @transform_6(%arg0: i32) -> (i32, i32) {
    %c0_i32 = arith.constant 0 : i32
    %c0_i32_0 = arith.constant 0 : i32
    return %arg0, %c0_i32 : i32, i32
  }
  func.func @transform_7(%arg0: i32) -> (i32, i32) {
    %c0_i32 = arith.constant 0 : i32
    %c0_i32_0 = arith.constant 0 : i32
    return %arg0, %c0_i32 : i32, i32
  }
  func.func @transform_8(%arg0: i32) -> (i32, i32) {
    %c0_i32 = arith.constant 0 : i32
    %c0_i32_0 = arith.constant 0 : i32
    return %arg0, %c0_i32 : i32, i32
  }
  func.func @transform_9(%arg0: i32) -> (i32, i32) {
    %c0_i32 = arith.constant 0 : i32
    %c0_i32_0 = arith.constant 0 : i32
    return %arg0, %c0_i32 : i32, i32
  }
  func.func @transform_10(%arg0: i32) -> (i32, i32) {
    %c0_i32 = arith.constant 0 : i32
    %c0_i32_0 = arith.constant 0 : i32
    return %arg0, %c0_i32 : i32, i32
  }
}

</mosaic_0001>

<llo_original>
// kernel: _forward_jit.2
$region0: #{_forward_jit.2}
  #allocation0 [shape = 'u32[]', space=smem, size = 0x4, offset = 0x4, fixed_abs, tag = 'smem constant byte address 0x4 - core index']
  #allocation1 [shape = 'u32[144,128]{1,0:T(1,128)}', space=vmem, size = 0x12000, scoped, tag = 'internal scratch']
  %s0 = inlined_call_operand.vmem [shape: f32[8,36], index: 0, kind: input, shape index: {}]
  %s1 = inlined_call_operand.vmem [shape: f32[36,512], index: 1, kind: input, shape index: {}]
  %s2 = inlined_call_operand.vmem [shape: f32[8,1], index: 2, kind: input, shape index: {}]
  %s3 = inlined_call_operand.vmem [shape: f32[8,512], index: 3, kind: output, shape index: {}]
  %s4 = sld [smem:[#allocation0]]
  $region22: #{_forward_jit.2} parent=0
    _
  %s6 = ssub.s32 1, %s4
  %s7 = scalar_select 0, %s6, %s4
  // Predicated region
  $region2: #{_forward_jit.2} parent=0 // pred_check
    _
  $region3: #{_forward_jit.2} parent=0 // pred_check_branch
    %9 = sbr.rel (0) target = $region5
  $region4: #{_forward_jit.2} parent=0 // pred_region
    _
  $region5: #{_forward_jit.2} parent=0 // pred_fallthru
    _
  // Predicated region
  $region6: #{_forward_jit.2} parent=0 // pred_check
    _
  $region7: #{_forward_jit.2} parent=0 // pred_check_branch
    %11 = sbr.rel (0) target = $region9
  $region8: #{_forward_jit.2} parent=0 // pred_region
    _
  $region9: #{_forward_jit.2} parent=0 // pred_fallthru
    _
  // Predicated region
  $region10: #{_forward_jit.2} parent=0 // pred_check
    _
  $region11: #{_forward_jit.2} parent=0 // pred_check_branch
    %13 = sbr.rel (0) target = $region13
  $region12: #{_forward_jit.2} parent=0 // pred_region
    _
  $region13: #{_forward_jit.2} parent=0 // pred_fallthru
    _
  %v14 = vld [vmem:[%s0] sm:$0xff]
  %v15 = vld [vmem:[%s1] sm:$0xff]
  %v16 = vld [vmem:[%s1 + $0x8] sm:$0xff]
  %v17 = vld [vmem:[%s1 + $0x10] sm:$0xff]
  %v18 = vld [vmem:[%s1 + $0x18] sm:$0xff]
  %v19 = vld [vmem:[%s1 + $0x20] sm:$0xff]
  %v20 = vld [vmem:[%s1 + $0x28] sm:$0xff]
  %v21 = vld [vmem:[%s1 + $0x30] sm:$0xff]
  %v22 = vld [vmem:[%s1 + $0x38] sm:$0xff]
  %v23 = vld [vmem:[%s1 + $0x40] sm:$0xff]
  %v24 = vld [vmem:[%s1 + $0x48] sm:$0xff]
  %v25 = vld [vmem:[%s1 + $0x50] sm:$0xff]
  %v26 = vld [vmem:[%s1 + $0x58] sm:$0xff]
  %v27 = vld [vmem:[%s1 + $0x60] sm:$0xff]
  %v28 = vld [vmem:[%s1 + $0x68] sm:$0xff]
  %v29 = vld [vmem:[%s1 + $0x70] sm:$0xff]
  %v30 = vld [vmem:[%s1 + $0x78] sm:$0xff]
  %v31 = vld [vmem:[%s1 + $0x80] sm:$0xf]
  %v32 = vld [vmem:[%s1 + $0x88] sm:$0xf]
  %v33 = vld [vmem:[%s1 + $0x90] sm:$0xf]
  %v34 = vld [vmem:[%s1 + $0x98] sm:$0xf]
  %v35 = vld [vmem:[%s2] sm:$0xff]
  %37 = vset.pattern.permute.xlu0 0
  %38 = vperm.xlu0 %37, %v35
  %v39 = vpop.permute.xlu0 %38
  %vm41 = vcmask 293888
  %v43 = vsel %vm41, %v14, 0
  %vm45 = vcmask 1043456
  %v47 = vsel %vm45, %v31, 0
  %v50 = vsel %vm45, %v32, 0
  %v53 = vsel %vm45, %v33, 0
  %v56 = vsel %vm45, %v34, 0
  %58 = vmatprep.subr.mxu0 0.0
  %59 = vmatpush1.msra.mxu0 0.0
  %60 = vmatprep.subr.mxu0 0.0
  %61 = vmatpush1.msra.mxu0 0.0
  %62 = vmatprep.subr.mxu0 0.0
  %63 = vmatpush1.msra.mxu0 0.0
  %64 = vmatprep.subr.mxu0 0.0
  %65 = vmatpush1.msra.mxu0 0.0
  %66 = vmatprep.subr.mxu0 0.0
  %67 = vmatpush1.msra.mxu0 0.0
  %68 = vmatprep.subr.mxu0 0.0
  %69 = vmatpush1.msra.mxu0 0.0
  %70 = vmatprep.subr.mxu0 0.0
  %71 = vmatpush1.msra.mxu0 0.0
  %72 = vmatprep.subr.mxu0 0.0
  %73 = vmatpush1.msra.mxu0 0.0
  %74 = vmatprep.subr.mxu0 0.0
  %75 = vmatpush1.msra.mxu0 0.0
  %76 = vmatprep.subr.mxu0 0.0
  %77 = vmatpush1.msra.mxu0 0.0
  %78 = vmatprep.subr.mxu0 0.0
  %79 = vmatpush1.msra.mxu0 0.0
  %80 = vmatprep.subr.mxu0 %v50
  %81 = vmatpush1.msra.mxu0 %v47
  %82 = vmatprep.subr.mxu0 %v28
  %83 = vmatpush1.msra.mxu0 %v27
  %84 = vmatprep.subr.mxu0 %v24
  %85 = vmatpush1.msra.mxu0 %v23
  %86 = vmatprep.subr.mxu0 %v20
  %87 = vmatpush1.msra.mxu0 %v19
  %88 = vmatprep.subr.mxu0 %v16
  %89 = vmatpush1.msra.mxu0 %v15
  %90 = vmatprep.subr.mxu0 0.0
  %91 = vmatpush2.msra.mxu0 0.0
  %92 = vmatprep.subr.mxu0 0.0
  %93 = vmatpush2.msra.mxu0 0.0
  %94 = vmatprep.subr.mxu0 0.0
  %95 = vmatpush2.msra.mxu0 0.0
  %96 = vmatprep.subr.mxu0 0.0
  %97 = vmatpush2.msra.mxu0 0.0
  %98 = vmatprep.subr.mxu0 0.0
  %99 = vmatpush2.msra.mxu0 0.0
  %100 = vmatprep.subr.mxu0 0.0
  %101 = vmatpush2.msra.mxu0 0.0
  %102 = vmatprep.subr.mxu0 0.0
  %103 = vmatpush2.msra.mxu0 0.0
  %104 = vmatprep.subr.mxu0 0.0
  %105 = vmatpush2.msra.mxu0 0.0
  %106 = vmatprep.subr.mxu0 0.0
  %107 = vmatpush2.msra.mxu0 0.0
  %108 = vmatprep.subr.mxu0 0.0
  %109 = vmatpush2.msra.mxu0 0.0
  %110 = vmatprep.subr.mxu0 0.0
  %111 = vmatpush2.msra.mxu0 0.0
  %112 = vmatprep.subr.mxu0 0.0
  %113 = vmatpush2.msra.mxu0 0.0
  %114 = vmatprep.subr.mxu0 0.0
  %115 = vmatpush2.msra.mxu0 0.0
  %116 = vmatprep.subr.mxu0 0.0
  %117 = vmatpush2.msra.mxu0 0.0
  %118 = vmatprep.subr.mxu0 0.0
  %119 = vmatpush2.msra.mxu0 0.0
  %120 = vmatprep.subr.mxu0 0.0
  %121 = vmatpush2.msra.mxu0 0.0
  %122 = vmatprep.mubr.f32.mxu0 0.0
  %123 = vmatmul.mubr.f32.gmra.mxu0 %v43
  %v124 = vpop.f32.mrf.mxu0
  %v125 = vadd.f32 %v39, %v124
  %v126 = vpop.f32.mrf.mxu0
  %v127 = vadd.f32 %v39, %v126
  %128 = vdwg.mxu0
  %129 = vmatprep.subr.mxu0 0.0
  %130 = vmatpush1.msra.mxu0 0.0
  %131 = vmatprep.subr.mxu0 0.0
  %132 = vmatpush1.msra.mxu0 0.0
  %133 = vmatprep.subr.mxu0 0.0
  %134 = vmatpush1.msra.mxu0 0.0
  %135 = vmatprep.subr.mxu0 0.0
  %136 = vmatpush1.msra.mxu0 0.0
  %137 = vmatprep.subr.mxu0 0.0
  %138 = vmatpush1.msra.mxu0 0.0
  %139 = vmatprep.subr.mxu0 0.0
  %140 = vmatpush1.msra.mxu0 0.0
  %141 = vmatprep.subr.mxu0 0.0
  %142 = vmatpush1.msra.mxu0 0.0
  %143 = vmatprep.subr.mxu0 0.0
  %144 = vmatpush1.msra.mxu0 0.0
  %145 = vmatprep.subr.mxu0 0.0
  %146 = vmatpush1.msra.mxu0 0.0
  %147 = vmatprep.subr.mxu0 0.0
  %148 = vmatpush1.msra.mxu0 0.0
  %149 = vmatprep.subr.mxu0 0.0
  %150 = vmatpush1.msra.mxu0 0.0
  %151 = vmatprep.subr.mxu0 %v56
  %152 = vmatpush1.msra.mxu0 %v53
  %153 = vmatprep.subr.mxu0 %v30
  %154 = vmatpush1.msra.mxu0 %v29
  %155 = vmatprep.subr.mxu0 %v26
  %156 = vmatpush1.msra.mxu0 %v25
  %157 = vmatprep.subr.mxu0 %v22
  %158 = vmatpush1.msra.mxu0 %v21
  %159 = vmatprep.subr.mxu0 %v18
  %160 = vmatpush1.msra.mxu0 %v17
  %161 = vmatprep.subr.mxu0 0.0
  %162 = vmatpush2.msra.mxu0 0.0
  %163 = vmatprep.subr.mxu0 0.0
  %164 = vmatpush2.msra.mxu0 0.0
  %165 = vmatprep.subr.mxu0 0.0
  %166 = vmatpush2.msra.mxu0 0.0
  %167 = vmatprep.subr.mxu0 0.0
  %168 = vmatpush2.msra.mxu0 0.0
  %169 = vmatprep.subr.mxu0 0.0
  %170 = vmatpush2.msra.mxu0 0.0
  %171 = vmatprep.subr.mxu0 0.0
  %172 = vmatpush2.msra.mxu0 0.0
  %173 = vmatprep.subr.mxu0 0.0
  %174 = vmatpush2.msra.mxu0 0.0
  %175 = vmatprep.subr.mxu0 0.0
  %176 = vmatpush2.msra.mxu0 0.0
  %177 = vmatprep.subr.mxu0 0.0
  %178 = vmatpush2.msra.mxu0 0.0
  %179 = vmatprep.subr.mxu0 0.0
  %180 = vmatpush2.msra.mxu0 0.0
  %181 = vmatprep.subr.mxu0 0.0
  %182 = vmatpush2.msra.mxu0 0.0
  %183 = vmatprep.subr.mxu0 0.0
  %184 = vmatpush2.msra.mxu0 0.0
  %185 = vmatprep.subr.mxu0 0.0
  %186 = vmatpush2.msra.mxu0 0.0
  %187 = vmatprep.subr.mxu0 0.0
  %188 = vmatpush2.msra.mxu0 0.0
  %189 = vmatprep.subr.mxu0 0.0
  %190 = vmatpush2.msra.mxu0 0.0
  %191 = vmatprep.subr.mxu0 0.0
  %192 = vmatpush2.msra.mxu0 0.0
  %193 = vmatprep.mubr.f32.mxu0 0.0
  %194 = vmatmul.mubr.f32.gmra.mxu0 %v43
  %v195 = vpop.f32.mrf.mxu0
  %v196 = vadd.f32 %v39, %v195
  %v197 = vpop.f32.mrf.mxu0
  %v198 = vadd.f32 %v39, %v197
  %199 = vdwg.mxu0
  %200 = vst [vmem:[%s3] sm:$0xff] %v125
  %201 = vst [vmem:[%s3 + $0x8] sm:$0xff] %v127
  %202 = vst [vmem:[%s3 + $0x10] sm:$0xff] %v196
  %203 = vst [vmem:[%s3 + $0x18] sm:$0xff] %v198
  // Predicated region
  $region14: #{_forward_jit.2} parent=0 // pred_check
    _
  $region15: #{_forward_jit.2} parent=0 // pred_check_branch
    %205 = sbr.rel (0) target = $region17
  $region16: #{_forward_jit.2} parent=0 // pred_region
    _
  $region17: #{_forward_jit.2} parent=0 // pred_fallthru
    _
  // Predicated region
  $region18: #{_forward_jit.2} parent=0 // pred_check
    _
  $region19: #{_forward_jit.2} parent=0 // pred_check_branch
    %207 = sbr.rel (0) target = $region21
  $region20: #{_forward_jit.2} parent=0 // pred_region
    _
  $region21: #{_forward_jit.2} parent=0 // pred_fallthru
    _

// kernel: _forward_jit.3
$region0: #{_forward_jit.3}
  #allocation0 [shape = 'u32[]', space=smem, size = 0x4, offset = 0x4, fixed_abs, tag = 'smem constant byte address 0x4 - core index']
  #allocation1 [shape = 'u32[144,128]{1,0:T(1,128)}', space=vmem, size = 0x12000, scoped, tag = 'internal scratch']
  %s0 = inlined_call_operand.vmem [shape: f32[5], index: 0, kind: input, shape index: {}]
  %s1 = inlined_call_operand.vmem [shape: f32[5], index: 1, kind: input, shape index: {}]
  %s2 = inlined_call_operand.vmem [shape: f32[8,2048], index: 2, kind: input, shape index: {}]
  %s3 = inlined_call_operand.vmem [shape: bf16[2048,128], index: 3, kind: input, shape index: {}]
  %s4 = inlined_call_operand.vmem [shape: bf16[128,2048], index: 4, kind: input, shape index: {}]
  %s5 = inlined_call_operand.vmem [shape: f32[1,128], index: 5, kind: input, shape index: {}]
  %s6 = inlined_call_operand.vmem [shape: f32[8,128], index: 6, kind: input, shape index: {}]
  %s7 = inlined_call_operand.vmem [shape: f32[8,2048], index: 7, kind: input, shape index: {}]
  %s8 = inlined_call_operand.vmem [shape: f32[8,128], index: 8, kind: input, shape index: {}]
  %s9 = inlined_call_operand.vmem [shape: f32[8,2048], index: 9, kind: output, shape index: {0}]
  %s10 = inlined_call_operand.vmem [shape: f32[8,128], index: 10, kind: output, shape index: {1}]
  %11 = xla_tuple %s9, %s10
  %s12 = sld [smem:[#allocation0]]
  $region69: #{_forward_jit.3} parent=0
    _
  %s14 = ssub.s32 1, %s12
  %s15 = scalar_select 0, %s14, %s12
  $region1: #{_forward_jit.3} parent=0
    #allocation2 [shape = 'u8[512]{0}', space=smem, size = 0x200, scoped, tag = 'input window, operand 0, single buffered']
    #allocation3 [shape = 's32[1]{0}', space=sflag, size = 0x4, scoped, tag = 'scoped memory for _forward_jit.3']
    #allocation4 [shape = 'u8[512]{0}', space=smem, size = 0x200, scoped, tag = 'input window, operand 1, single buffered']
    #allocation5 [shape = 's32[1]{0}', space=sflag, size = 0x4, scoped, tag = 'scoped memory for _forward_jit.3']
    %16 = vsyncpa [#allocation3], 0
    %17 = vsyncpa [#allocation5], 0
    // Predicated region
    $region2: #{_forward_jit.3} parent=1 // pred_check
      _
    $region3: #{_forward_jit.3} parent=1 // pred_check_branch
      %19 = sbr.rel (0) target = $region5
    $region4: #{_forward_jit.3} parent=1 // pred_region
      %s21 = ssub.s32 16, 16
      %22 = vsyncadd [#allocation3], %s21
      %s24 = sshll.u32 %s0, 4
      %s25 = int_to_ptr.vmem [resolvable:$true] %s24
      %27 = dma.vmem_to_smem %s25, 16, [#allocation2], [#allocation3]
    $region5: #{_forward_jit.3} parent=1 // pred_fallthru
      _
    // Predicated region
    $region6: #{_forward_jit.3} parent=1 // pred_check
      _
    $region7: #{_forward_jit.3} parent=1 // pred_check_branch
      %29 = sbr.rel (0) target = $region9
    $region8: #{_forward_jit.3} parent=1 // pred_region
      %s31 = ssub.s32 16, 16
      %32 = vsyncadd [#allocation5], %s31
      %s34 = sshll.u32 %s1, 4
      %s35 = int_to_ptr.vmem [resolvable:$true] %s34
      %37 = dma.vmem_to_smem %s35, 16, [#allocation4], [#allocation5]
    $region9: #{_forward_jit.3} parent=1 // pred_fallthru
      _
    // Predicated region
    $region10: #{_forward_jit.3} parent=1 // pred_check
      _
    $region11: #{_forward_jit.3} parent=1 // pred_check_branch
      %39 = sbr.rel (0) target = $region13
    $region12: #{_forward_jit.3} parent=1 // pred_region
      _
    $region13: #{_forward_jit.3} parent=1 // pred_fallthru
      _
    // Predicated region
    $region14: #{_forward_jit.3} parent=1 // pred_check
      _
    $region15: #{_forward_jit.3} parent=1 // pred_check_branch
      %41 = sbr.rel (0) target = $region17
    $region16: #{_forward_jit.3} parent=1 // pred_region
      _
    $region17: #{_forward_jit.3} parent=1 // pred_fallthru
      _
    // Predicated region
    $region18: #{_forward_jit.3} parent=1 // pred_check
      _
    $region19: #{_forward_jit.3} parent=1 // pred_check_branch
      %43 = sbr.rel (0) target = $region21
    $region20: #{_forward_jit.3} parent=1 // pred_region
      _
    $region21: #{_forward_jit.3} parent=1 // pred_fallthru
      _
    // Predicated region
    $region22: #{_forward_jit.3} parent=1 // pred_check
      _
    $region23: #{_forward_jit.3} parent=1 // pred_check_branch
      %45 = sbr.rel (0) target = $region25
    $region24: #{_forward_jit.3} parent=1 // pred_region
      _
    $region25: #{_forward_jit.3} parent=1 // pred_fallthru
      _
    // Predicated region
    $region26: #{_forward_jit.3} parent=1 // pred_check
      _
    $region27: #{_forward_jit.3} parent=1 // pred_check_branch
      %47 = sbr.rel (0) target = $region29
    $region28: #{_forward_jit.3} parent=1 // pred_region
      _
    $region29: #{_forward_jit.3} parent=1 // pred_fallthru
      _
    // Predicated region
    $region30: #{_forward_jit.3} parent=1 // pred_check
      _
    $region31: #{_forward_jit.3} parent=1 // pred_check_branch
      %49 = sbr.rel (0) target = $region33
    $region32: #{_forward_jit.3} parent=1 // pred_region
      _
    $region33: #{_forward_jit.3} parent=1 // pred_fallthru
      _
    // Predicated region
    $region34: #{_forward_jit.3} parent=1 // pred_check
      _
    $region35: #{_forward_jit.3} parent=1 // pred_check_branch
      %51 = sbr.rel (0) target = $region37
    $region36: #{_forward_jit.3} parent=1 // pred_region
      _
    $region37: #{_forward_jit.3} parent=1 // pred_fallthru
      _
    // Predicated region
    $region38: #{_forward_jit.3} parent=1 // pred_check
      _
    $region39: #{_forward_jit.3} parent=1 // pred_check_branch
      %53 = sbr.rel (0) target = $region41
    $region40: #{_forward_jit.3} parent=1 // pred_region
      %54 = dma.done [#allocation3], 16
    $region41: #{_forward_jit.3} parent=1 // pred_fallthru
      _
    // Predicated region
    $region42: #{_forward_jit.3} parent=1 // pred_check
      _
    $region43: #{_forward_jit.3} parent=1 // pred_check_branch
      %56 = sbr.rel (0) target = $region45
    $region44: #{_forward_jit.3} parent=1 // pred_region
      %57 = dma.done [#allocation5], 16
    $region45: #{_forward_jit.3} parent=1 // pred_fallthru
      _
    %58 = sfence
    %v60 = vld [vmem:[%s3] sm:$0xf]
    %v61 = vld [vmem:[%s3 + $0x4] sm:$0xf]
    %v62 = vld [vmem:[%s3 + $0x8] sm:$0xf]
    %v63 = vld [vmem:[%s3 + $0xc] sm:$0xf]
    %v64 = vld [vmem:[%s3 + $0x10] sm:$0xf]
    %v65 = vld [vmem:[%s3 + $0x14] sm:$0xf]
    %v66 = vld [vmem:[%s3 + $0x18] sm:$0xf]
    %v67 = vld [vmem:[%s3 + $0x1c] sm:$0xf]
    %v68 = vld [vmem:[%s3 + $0x20] sm:$0xf]
    %v69 = vld [vmem:[%s3 + $0x24] sm:$0xf]
    %v70 = vld [vmem:[%s3 + $0x28] sm:$0xf]
    %v71 = vld [vmem:[%s3 + $0x2c] sm:$0xf]
    %v72 = vld [vmem:[%s3 + $0x30] sm:$0xf]
    %v73 = vld [vmem:[%s3 + $0x34] sm:$0xf]
    %v74 = vld [vmem:[%s3 + $0x38] sm:$0xf]
    %v75 = vld [vmem:[%s3 + $0x3c] sm:$0xf]
    %v76 = vld [vmem:[%s3 + $0x40] sm:$0xf]
    %v77 = vld [vmem:[%s3 + $0x44] sm:$0xf]
    %v78 = vld [vmem:[%s3 + $0x48] sm:$0xf]
    %v79 = vld [vmem:[%s3 + $0x4c] sm:$0xf]
    %v80 = vld [vmem:[%s3 + $0x50] sm:$0xf]
    %v81 = vld [vmem:[%s3 + $0x54] sm:$0xf]
    %v82 = vld [vmem:[%s3 + $0x58] sm:$0xf]
    %v83 = vld [vmem:[%s3 + $0x5c] sm:$0xf]
    %v84 = vld [vmem:[%s3 + $0x60] sm:$0xf]
    %v85 = vld [vmem:[%s3 + $0x64] sm:$0xf]
    %v86 = vld [vmem:[%s3 + $0x68] sm:$0xf]
    %v87 = vld [vmem:[%s3 + $0x6c] sm:$0xf]
    %v88 = vld [vmem:[%s3 + $0x70] sm:$0xf]
    %v89 = vld [vmem:[%s3 + $0x74] sm:$0xf]
    %v90 = vld [vmem:[%s3 + $0x78] sm:$0xf]
    %v91 = vld [vmem:[%s3 + $0x7c] sm:$0xf]
    %v92 = vld [vmem:[%s3 + $0x80] sm:$0xf]
    %v93 = vld [vmem:[%s3 + $0x84] sm:$0xf]
    %v94 = vld [vmem:[%s3 + $0x88] sm:$0xf]
    %v95 = vld [vmem:[%s3 + $0x8c] sm:$0xf]
    %v96 = vld [vmem:[%s3 + $0x90] sm:$0xf]
    %v97 = vld [vmem:[%s3 + $0x94] sm:$0xf]
    %v98 = vld [vmem:[%s3 + $0x98] sm:$0xf]
    %v99 = vld [vmem:[%s3 + $0x9c] sm:$0xf]
    %v100 = vld [vmem:[%s3 + $0xa0] sm:$0xf]
    %v101 = vld [vmem:[%s3 + $0xa4] sm:$0xf]
    %v102 = vld [vmem:[%s3 + $0xa8] sm:$0xf]
    %v103 = vld [vmem:[%s3 + $0xac] sm:$0xf]
    %v104 = vld [vmem:[%s3 + $0xb0] sm:$0xf]
    %v105 = vld [vmem:[%s3 + $0xb4] sm:$0xf]
    %v106 = vld [vmem:[%s3 + $0xb8] sm:$0xf]
    %v107 = vld [vmem:[%s3 + $0xbc] sm:$0xf]
    %v108 = vld [vmem:[%s3 + $0xc0] sm:$0xf]
    %v109 = vld [vmem:[%s3 + $0xc4] sm:$0xf]
    %v110 = vld [vmem:[%s3 + $0xc8] sm:$0xf]
    %v111 = vld [vmem:[%s3 + $0xcc] sm:$0xf]
    %v112 = vld [vmem:[%s3 + $0xd0] sm:$0xf]
    %v113 = vld [vmem:[%s3 + $0xd4] sm:$0xf]
    %v114 = vld [vmem:[%s3 + $0xd8] sm:$0xf]
    %v115 = vld [vmem:[%s3 + $0xdc] sm:$0xf]
    %v116 = vld [vmem:[%s3 + $0xe0] sm:$0xf]
    %v117 = vld [vmem:[%s3 + $0xe4] sm:$0xf]
    %v118 = vld [vmem:[%s3 + $0xe8] sm:$0xf]
    %v119 = vld [vmem:[%s3 + $0xec] sm:$0xf]
    %v120 = vld [vmem:[%s3 + $0xf0] sm:$0xf]
    %v121 = vld [vmem:[%s3 + $0xf4] sm:$0xf]
    %v122 = vld [vmem:[%s3 + $0xf8] sm:$0xf]
    %v123 = vld [vmem:[%s3 + $0xfc] sm:$0xf]
    %v124 = vld [vmem:[%s3 + $0x100] sm:$0xf]
    %v125 = vld [vmem:[%s3 + $0x104] sm:$0xf]
    %v126 = vld [vmem:[%s3 + $0x108] sm:$0xf]
    %v127 = vld [vmem:[%s3 + $0x10c] sm:$0xf]
    %v128 = vld [vmem:[%s3 + $0x110] sm:$0xf]
    %v129 = vld [vmem:[%s3 + $0x114] sm:$0xf]
    %v130 = vld [vmem:[%s3 + $0x118] sm:$0xf]
    %v131 = vld [vmem:[%s3 + $0x11c] sm:$0xf]
    %v132 = vld [vmem:[%s3 + $0x120] sm:$0xf]
    %v133 = vld [vmem:[%s3 + $0x124] sm:$0xf]
    %v134 = vld [vmem:[%s3 + $0x128] sm:$0xf]
    %v135 = vld [vmem:[%s3 + $0x12c] sm:$0xf]
    %v136 = vld [vmem:[%s3 + $0x130] sm:$0xf]
    %v137 = vld [vmem:[%s3 + $0x134] sm:$0xf]
    %v138 = vld [vmem:[%s3 + $0x138] sm:$0xf]
    %v139 = vld [vmem:[%s3 + $0x13c] sm:$0xf]
    %v140 = vld [vmem:[%s3 + $0x140] sm:$0xf]
    %v141 = vld [vmem:[%s3 + $0x144] sm:$0xf]
    %v142 = vld [vmem:[%s3 + $0x148] sm:$0xf]
    %v143 = vld [vmem:[%s3 + $0x14c] sm:$0xf]
    %v144 = vld [vmem:[%s3 + $0x150] sm:$0xf]
    %v145 = vld [vmem:[%s3 + $0x154] sm:$0xf]
    %v146 = vld [vmem:[%s3 + $0x158] sm:$0xf]
    %v147 = vld [vmem:[%s3 + $0x15c] sm:$0xf]
    %v148 = vld [vmem:[%s3 + $0x160] sm:$0xf]
    %v149 = vld [vmem:[%s3 + $0x164] sm:$0xf]
    %v150 = vld [vmem:[%s3 + $0x168] sm:$0xf]
    %v151 = vld [vmem:[%s3 + $0x16c] sm:$0xf]
    %v152 = vld [vmem:[%s3 + $0x170] sm:$0xf]
    %v153 = vld [vmem:[%s3 + $0x174] sm:$0xf]
    %v154 = vld [vmem:[%s3 + $0x178] sm:$0xf]
    %v155 = vld [vmem:[%s3 + $0x17c] sm:$0xf]
    %v156 = vld [vmem:[%s3 + $0x180] sm:$0xf]
    %v157 = vld [vmem:[%s3 + $0x184] sm:$0xf]
    %v158 = vld [vmem:[%s3 + $0x188] sm:$0xf]
    %v159 = vld [vmem:[%s3 + $0x18c] sm:$0xf]
    %v160 = vld [vmem:[%s3 + $0x190] sm:$0xf]
    %v161 = vld [vmem:[%s3 + $0x194] sm:$0xf]
    %v162 = vld [vmem:[%s3 + $0x198] sm:$0xf]
    %v163 = vld [vmem:[%s3 + $0x19c] sm:$0xf]
    %v164 = vld [vmem:[%s3 + $0x1a0] sm:$0xf]
    %v165 = vld [vmem:[%s3 + $0x1a4] sm:$0xf]
    %v166 = vld [vmem:[%s3 + $0x1a8] sm:$0xf]
    %v167 = vld [vmem:[%s3 + $0x1ac] sm:$0xf]
    %v168 = vld [vmem:[%s3 + $0x1b0] sm:$0xf]
    %v169 = vld [vmem:[%s3 + $0x1b4] sm:$0xf]
    %v170 = vld [vmem:[%s3 + $0x1b8] sm:$0xf]
    %v171 = vld [vmem:[%s3 + $0x1bc] sm:$0xf]
    %v172 = vld [vmem:[%s3 + $0x1c0] sm:$0xf]
    %v173 = vld [vmem:[%s3 + $0x1c4] sm:$0xf]
    %v174 = vld [vmem:[%s3 + $0x1c8] sm:$0xf]
    %v175 = vld [vmem:[%s3 + $0x1cc] sm:$0xf]
    %v176 = vld [vmem:[%s3 + $0x1d0] sm:$0xf]
    %v177 = vld [vmem:[%s3 + $0x1d4] sm:$0xf]
    %v178 = vld [vmem:[%s3 + $0x1d8] sm:$0xf]
    %v179 = vld [vmem:[%s3 + $0x1dc] sm:$0xf]
    %v180 = vld [vmem:[%s3 + $0x1e0] sm:$0xf]
    %v181 = vld [vmem:[%s3 + $0x1e4] sm:$0xf]
    %v182 = vld [vmem:[%s3 + $0x1e8] sm:$0xf]
    %v183 = vld [vmem:[%s3 + $0x1ec] sm:$0xf]
    %v184 = vld [vmem:[%s3 + $0x1f0] sm:$0xf]
    %v185 = vld [vmem:[%s3 + $0x1f4] sm:$0xf]
    %v186 = vld [vmem:[%s3 + $0x1f8] sm:$0xf]
    %v187 = vld [vmem:[%s3 + $0x1fc] sm:$0xf]
    %v188 = vld [vmem:[%s3 + $0x200] sm:$0xf]
    %v189 = vld [vmem:[%s3 + $0x204] sm:$0xf]
    %v190 = vld [vmem:[%s3 + $0x208] sm:$0xf]
    %v191 = vld [vmem:[%s3 + $0x20c] sm:$0xf]
    %v192 = vld [vmem:[%s3 + $0x210] sm:$0xf]
    %v193 = vld [vmem:[%s3 + $0x214] sm:$0xf]
    %v194 = vld [vmem:[%s3 + $0x218] sm:$0xf]
    %v195 = vld [vmem:[%s3 + $0x21c] sm:$0xf]
    %v196 = vld [vmem:[%s3 + $0x220] sm:$0xf]
    %v197 = vld [vmem:[%s3 + $0x224] sm:$0xf]
    %v198 = vld [vmem:[%s3 + $0x228] sm:$0xf]
    %v199 = vld [vmem:[%s3 + $0x22c] sm:$0xf]
    %v200 = vld [vmem:[%s3 + $0x230] sm:$0xf]
    %v201 = vld [vmem:[%s3 + $0x234] sm:$0xf]
    %v202 = vld [vmem:[%s3 + $0x238] sm:$0xf]
    %v203 = vld [vmem:[%s3 + $0x23c] sm:$0xf]
    %v204 = vld [vmem:[%s3 + $0x240] sm:$0xf]
    %v205 = vld [vmem:[%s3 + $0x244] sm:$0xf]
    %v206 = vld [vmem:[%s3 + $0x248] sm:$0xf]
    %v207 = vld [vmem:[%s3 + $0x24c] sm:$0xf]
    %v208 = vld [vmem:[%s3 + $0x250] sm:$0xf]
    %v209 = vld [vmem:[%s3 + $0x254] sm:$0xf]
    %v210 = vld [vmem:[%s3 + $0x258] sm:$0xf]
    %v211 = vld [vmem:[%s3 + $0x25c] sm:$0xf]
    %v212 = vld [vmem:[%s3 + $0x260] sm:$0xf]
    %v213 = vld [vmem:[%s3 + $0x264] sm:$0xf]
    %v214 = vld [vmem:[%s3 + $0x268] sm:$0xf]
    %v215 = vld [vmem:[%s3 + $0x26c] sm:$0xf]
    %v216 = vld [vmem:[%s3 + $0x270] sm:$0xf]
    %v217 = vld [vmem:[%s3 + $0x274] sm:$0xf]
    %v218 = vld [vmem:[%s3 + $0x278] sm:$0xf]
    %v219 = vld [vmem:[%s3 + $0x27c] sm:$0xf]
    %v220 = vld [vmem:[%s3 + $0x280] sm:$0xf]
    %v221 = vld [vmem:[%s3 + $0x284] sm:$0xf]
    %v222 = vld [vmem:[%s3 + $0x288] sm:$0xf]
    %v223 = vld [vmem:[%s3 + $0x28c] sm:$0xf]
    %v224 = vld [vmem:[%s3 + $0x290] sm:$0xf]
    %v225 = vld [vmem:[%s3 + $0x294] sm:$0xf]
    %v226 = vld [vmem:[%s3 + $0x298] sm:$0xf]
    %v227 = vld [vmem:[%s3 + $0x29c] sm:$0xf]
    %v228 = vld [vmem:[%s3 + $0x2a0] sm:$0xf]
    %v229 = vld [vmem:[%s3 + $0x2a4] sm:$0xf]
    %v230 = vld [vmem:[%s3 + $0x2a8] sm:$0xf]
    %v231 = vld [vmem:[%s3 + $0x2ac] sm:$0xf]
    %v232 = vld [vmem:[%s3 + $0x2b0] sm:$0xf]
    %v233 = vld [vmem:[%s3 + $0x2b4] sm:$0xf]
    %v234 = vld [vmem:[%s3 + $0x2b8] sm:$0xf]
    %v235 = vld [vmem:[%s3 + $0x2bc] sm:$0xf]
    %v236 = vld [vmem:[%s3 + $0x2c0] sm:$0xf]
    %v237 = vld [vmem:[%s3 + $0x2c4] sm:$0xf]
    %v238 = vld [vmem:[%s3 + $0x2c8] sm:$0xf]
    %v239 = vld [vmem:[%s3 + $0x2cc] sm:$0xf]
    %v240 = vld [vmem:[%s3 + $0x2d0] sm:$0xf]
    %v241 = vld [vmem:[%s3 + $0x2d4] sm:$0xf]
    %v242 = vld [vmem:[%s3 + $0x2d8] sm:$0xf]
    %v243 = vld [vmem:[%s3 + $0x2dc] sm:$0xf]
    %v244 = vld [vmem:[%s3 + $0x2e0] sm:$0xf]
    %v245 = vld [vmem:[%s3 + $0x2e4] sm:$0xf]
    %v246 = vld [vmem:[%s3 + $0x2e8] sm:$0xf]
    %v247 = vld [vmem:[%s3 + $0x2ec] sm:$0xf]
    %v248 = vld [vmem:[%s3 + $0x2f0] sm:$0xf]
    %v249 = vld [vmem:[%s3 + $0x2f4] sm:$0xf]
    %v250 = vld [vmem:[%s3 + $0x2f8] sm:$0xf]
    %v251 = vld [vmem:[%s3 + $0x2fc] sm:$0xf]
    %v252 = vld [vmem:[%s3 + $0x300] sm:$0xf]
    %v253 = vld [vmem:[%s3 + $0x304] sm:$0xf]
    %v254 = vld [vmem:[%s3 + $0x308] sm:$0xf]
    %v255 = vld [vmem:[%s3 + $0x30c] sm:$0xf]
    %v256 = vld [vmem:[%s3 + $0x310] sm:$0xf]
    %v257 = vld [vmem:[%s3 + $0x314] sm:$0xf]
    %v258 = vld [vmem:[%s3 + $0x318] sm:$0xf]
    %v259 = vld [vmem:[%s3 + $0x31c] sm:$0xf]
    %v260 = vld [vmem:[%s3 + $0x320] sm:$0xf]
    %v261 = vld [vmem:[%s3 + $0x324] sm:$0xf]
    %v262 = vld [vmem:[%s3 + $0x328] sm:$0xf]
    %v263 = vld [vmem:[%s3 + $0x32c] sm:$0xf]
    %v264 = vld [vmem:[%s3 + $0x330] sm:$0xf]
    %v265 = vld [vmem:[%s3 + $0x334] sm:$0xf]
    %v266 = vld [vmem:[%s3 + $0x338] sm:$0xf]
    %v267 = vld [vmem:[%s3 + $0x33c] sm:$0xf]
    %v268 = vld [vmem:[%s3 + $0x340] sm:$0xf]
    %v269 = vld [vmem:[%s3 + $0x344] sm:$0xf]
    %v270 = vld [vmem:[%s3 + $0x348] sm:$0xf]
    %v271 = vld [vmem:[%s3 + $0x34c] sm:$0xf]
    %v272 = vld [vmem:[%s3 + $0x350] sm:$0xf]
    %v273 = vld [vmem:[%s3 + $0x354] sm:$0xf]
    %v274 = vld [vmem:[%s3 + $0x358] sm:$0xf]
    %v275 = vld [vmem:[%s3 + $0x35c] sm:$0xf]
    %v276 = vld [vmem:[%s3 + $0x360] sm:$0xf]
    %v277 = vld [vmem:[%s3 + $0x364] sm:$0xf]
    %v278 = vld [vmem:[%s3 + $0x368] sm:$0xf]
    %v279 = vld [vmem:[%s3 + $0x36c] sm:$0xf]
    %v280 = vld [vmem:[%s3 + $0x370] sm:$0xf]
    %v281 = vld [vmem:[%s3 + $0x374] sm:$0xf]
    %v282 = vld [vmem:[%s3 + $0x378] sm:$0xf]
    %v283 = vld [vmem:[%s3 + $0x37c] sm:$0xf]
    %v284 = vld [vmem:[%s3 + $0x380] sm:$0xf]
    %v285 = vld [vmem:[%s3 + $0x384] sm:$0xf]
    %v286 = vld [vmem:[%s3 + $0x388] sm:$0xf]
    %v287 = vld [vmem:[%s3 + $0x38c] sm:$0xf]
    %v288 = vld [vmem:[%s3 + $0x390] sm:$0xf]
    %v289 = vld [vmem:[%s3 + $0x394] sm:$0xf]
    %v290 = vld [vmem:[%s3 + $0x398] sm:$0xf]
    %v291 = vld [vmem:[%s3 + $0x39c] sm:$0xf]
    %v292 = vld [vmem:[%s3 + $0x3a0] sm:$0xf]
    %v293 = vld [vmem:[%s3 + $0x3a4] sm:$0xf]
    %v294 = vld [vmem:[%s3 + $0x3a8] sm:$0xf]
    %v295 = vld [vmem:[%s3 + $0x3ac] sm:$0xf]
    %v296 = vld [vmem:[%s3 + $0x3b0] sm:$0xf]
    %v297 = vld [vmem:[%s3 + $0x3b4] sm:$0xf]
    %v298 = vld [vmem:[%s3 + $0x3b8] sm:$0xf]
    %v299 = vld [vmem:[%s3 + $0x3bc] sm:$0xf]
    %v300 = vld [vmem:[%s3 + $0x3c0] sm:$0xf]
    %v301 = vld [vmem:[%s3 + $0x3c4] sm:$0xf]
    %v302 = vld [vmem:[%s3 + $0x3c8] sm:$0xf]
    %v303 = vld [vmem:[%s3 + $0x3cc] sm:$0xf]
    %v304 = vld [vmem:[%s3 + $0x3d0] sm:$0xf]
    %v305 = vld [vmem:[%s3 + $0x3d4] sm:$0xf]
    %v306 = vld [vmem:[%s3 + $0x3d8] sm:$0xf]
    %v307 = vld [vmem:[%s3 + $0x3dc] sm:$0xf]
    %v308 = vld [vmem:[%s3 + $0x3e0] sm:$0xf]
    %v309 = vld [vmem:[%s3 + $0x3e4] sm:$0xf]
    %v310 = vld [vmem:[%s3 + $0x3e8] sm:$0xf]
    %v311 = vld [vmem:[%s3 + $0x3ec] sm:$0xf]
    %v312 = vld [vmem:[%s3 + $0x3f0] sm:$0xf]
    %v313 = vld [vmem:[%s3 + $0x3f4] sm:$0xf]
    %v314 = vld [vmem:[%s3 + $0x3f8] sm:$0xf]
    %v315 = vld [vmem:[%s3 + $0x3fc] sm:$0xf]
    %v316 = vld [vmem:[%s4] sm:$0xff]
    %v317 = vld [vmem:[%s4 + $0x8] sm:$0xff]
    %v318 = vld [vmem:[%s4 + $0x10] sm:$0xff]
    %v319 = vld [vmem:[%s4 + $0x18] sm:$0xff]
    %v320 = vld [vmem:[%s4 + $0x20] sm:$0xff]
    %v321 = vld [vmem:[%s4 + $0x28] sm:$0xff]
    %v322 = vld [vmem:[%s4 + $0x30] sm:$0xff]
    %v323 = vld [vmem:[%s4 + $0x38] sm:$0xff]
    %v324 = vld [vmem:[%s4 + $0x40] sm:$0xff]
    %v325 = vld [vmem:[%s4 + $0x48] sm:$0xff]
    %v326 = vld [vmem:[%s4 + $0x50] sm:$0xff]
    %v327 = vld [vmem:[%s4 + $0x58] sm:$0xff]
    %v328 = vld [vmem:[%s4 + $0x60] sm:$0xff]
    %v329 = vld [vmem:[%s4 + $0x68] sm:$0xff]
    %v330 = vld [vmem:[%s4 + $0x70] sm:$0xff]
    %v331 = vld [vmem:[%s4 + $0x78] sm:$0xff]
    %v332 = vld [vmem:[%s4 + $0x80] sm:$0xff]
    %v333 = vld [vmem:[%s4 + $0x88] sm:$0xff]
    %v334 = vld [vmem:[%s4 + $0x90] sm:$0xff]
    %v335 = vld [vmem:[%s4 + $0x98] sm:$0xff]
    %v336 = vld [vmem:[%s4 + $0xa0] sm:$0xff]
    %v337 = vld [vmem:[%s4 + $0xa8] sm:$0xff]
    %v338 = vld [vmem:[%s4 + $0xb0] sm:$0xff]
    %v339 = vld [vmem:[%s4 + $0xb8] sm:$0xff]
    %v340 = vld [vmem:[%s4 + $0xc0] sm:$0xff]
    %v341 = vld [vmem:[%s4 + $0xc8] sm:$0xff]
    %v342 = vld [vmem:[%s4 + $0xd0] sm:$0xff]
    %v343 = vld [vmem:[%s4 + $0xd8] sm:$0xff]
    %v344 = vld [vmem:[%s4 + $0xe0] sm:$0xff]
    %v345 = vld [vmem:[%s4 + $0xe8] sm:$0xff]
    %v346 = vld [vmem:[%s4 + $0xf0] sm:$0xff]
    %v347 = vld [vmem:[%s4 + $0xf8] sm:$0xff]
    %v348 = vld [vmem:[%s4 + $0x100] sm:$0xff]
    %v349 = vld [vmem:[%s4 + $0x108] sm:$0xff]
    %v350 = vld [vmem:[%s4 + $0x110] sm:$0xff]
    %v351 = vld [vmem:[%s4 + $0x118] sm:$0xff]
    %v352 = vld [vmem:[%s4 + $0x120] sm:$0xff]
    %v353 = vld [vmem:[%s4 + $0x128] sm:$0xff]
    %v354 = vld [vmem:[%s4 + $0x130] sm:$0xff]
    %v355 = vld [vmem:[%s4 + $0x138] sm:$0xff]
    %v356 = vld [vmem:[%s4 + $0x140] sm:$0xff]
    %v357 = vld [vmem:[%s4 + $0x148] sm:$0xff]
    %v358 = vld [vmem:[%s4 + $0x150] sm:$0xff]
    %v359 = vld [vmem:[%s4 + $0x158] sm:$0xff]
    %v360 = vld [vmem:[%s4 + $0x160] sm:$0xff]
    %v361 = vld [vmem:[%s4 + $0x168] sm:$0xff]
    %v362 = vld [vmem:[%s4 + $0x170] sm:$0xff]
    %v363 = vld [vmem:[%s4 + $0x178] sm:$0xff]
    %v364 = vld [vmem:[%s4 + $0x180] sm:$0xff]
    %v365 = vld [vmem:[%s4 + $0x188] sm:$0xff]
    %v366 = vld [vmem:[%s4 + $0x190] sm:$0xff]
    %v367 = vld [vmem:[%s4 + $0x198] sm:$0xff]
    %v368 = vld [vmem:[%s4 + $0x1a0] sm:$0xff]
    %v369 = vld [vmem:[%s4 + $0x1a8] sm:$0xff]
    %v370 = vld [vmem:[%s4 + $0x1b0] sm:$0xff]
    %v371 = vld [vmem:[%s4 + $0x1b8] sm:$0xff]
    %v372 = vld [vmem:[%s4 + $0x1c0] sm:$0xff]
    %v373 = vld [vmem:[%s4 + $0x1c8] sm:$0xff]
    %v374 = vld [vmem:[%s4 + $0x1d0] sm:$0xff]
    %v375 = vld [vmem:[%s4 + $0x1d8] sm:$0xff]
    %v376 = vld [vmem:[%s4 + $0x1e0] sm:$0xff]
    %v377 = vld [vmem:[%s4 + $0x1e8] sm:$0xff]
    %v378 = vld [vmem:[%s4 + $0x1f0] sm:$0xff]
    %v379 = vld [vmem:[%s4 + $0x1f8] sm:$0xff]
    %v380 = vld [vmem:[%s4 + $0x200] sm:$0xff]
    %v381 = vld [vmem:[%s4 + $0x208] sm:$0xff]
    %v382 = vld [vmem:[%s4 + $0x210] sm:$0xff]
    %v383 = vld [vmem:[%s4 + $0x218] sm:$0xff]
    %v384 = vld [vmem:[%s4 + $0x220] sm:$0xff]
    %v385 = vld [vmem:[%s4 + $0x228] sm:$0xff]
    %v386 = vld [vmem:[%s4 + $0x230] sm:$0xff]
    %v387 = vld [vmem:[%s4 + $0x238] sm:$0xff]
    %v388 = vld [vmem:[%s4 + $0x240] sm:$0xff]
    %v389 = vld [vmem:[%s4 + $0x248] sm:$0xff]
    %v390 = vld [vmem:[%s4 + $0x250] sm:$0xff]
    %v391 = vld [vmem:[%s4 + $0x258] sm:$0xff]
    %v392 = vld [vmem:[%s4 + $0x260] sm:$0xff]
    %v393 = vld [vmem:[%s4 + $0x268] sm:$0xff]
    %v394 = vld [vmem:[%s4 + $0x270] sm:$0xff]
    %v395 = vld [vmem:[%s4 + $0x278] sm:$0xff]
    %v396 = vld [vmem:[%s4 + $0x280] sm:$0xff]
    %v397 = vld [vmem:[%s4 + $0x288] sm:$0xff]
    %v398 = vld [vmem:[%s4 + $0x290] sm:$0xff]
    %v399 = vld [vmem:[%s4 + $0x298] sm:$0xff]
    %v400 = vld [vmem:[%s4 + $0x2a0] sm:$0xff]
    %v401 = vld [vmem:[%s4 + $0x2a8] sm:$0xff]
    %v402 = vld [vmem:[%s4 + $0x2b0] sm:$0xff]
    %v403 = vld [vmem:[%s4 + $0x2b8] sm:$0xff]
    %v404 = vld [vmem:[%s4 + $0x2c0] sm:$0xff]
    %v405 = vld [vmem:[%s4 + $0x2c8] sm:$0xff]
    %v406 = vld [vmem:[%s4 + $0x2d0] sm:$0xff]
    %v407 = vld [vmem:[%s4 + $0x2d8] sm:$0xff]
    %v408 = vld [vmem:[%s4 + $0x2e0] sm:$0xff]
    %v409 = vld [vmem:[%s4 + $0x2e8] sm:$0xff]
    %v410 = vld [vmem:[%s4 + $0x2f0] sm:$0xff]
    %v411 = vld [vmem:[%s4 + $0x2f8] sm:$0xff]
    %v412 = vld [vmem:[%s4 + $0x300] sm:$0xff]
    %v413 = vld [vmem:[%s4 + $0x308] sm:$0xff]
    %v414 = vld [vmem:[%s4 + $0x310] sm:$0xff]
    %v415 = vld [vmem:[%s4 + $0x318] sm:$0xff]
    %v416 = vld [vmem:[%s4 + $0x320] sm:$0xff]
    %v417 = vld [vmem:[%s4 + $0x328] sm:$0xff]
    %v418 = vld [vmem:[%s4 + $0x330] sm:$0xff]
    %v419 = vld [vmem:[%s4 + $0x338] sm:$0xff]
    %v420 = vld [vmem:[%s4 + $0x340] sm:$0xff]
    %v421 = vld [vmem:[%s4 + $0x348] sm:$0xff]
    %v422 = vld [vmem:[%s4 + $0x350] sm:$0xff]
    %v423 = vld [vmem:[%s4 + $0x358] sm:$0xff]
    %v424 = vld [vmem:[%s4 + $0x360] sm:$0xff]
    %v425 = vld [vmem:[%s4 + $0x368] sm:$0xff]
    %v426 = vld [vmem:[%s4 + $0x370] sm:$0xff]
    %v427 = vld [vmem:[%s4 + $0x378] sm:$0xff]
    %v428 = vld [vmem:[%s4 + $0x380] sm:$0xff]
    %v429 = vld [vmem:[%s4 + $0x388] sm:$0xff]
    %v430 = vld [vmem:[%s4 + $0x390] sm:$0xff]
    %v431 = vld [vmem:[%s4 + $0x398] sm:$0xff]
    %v432 = vld [vmem:[%s4 + $0x3a0] sm:$0xff]
    %v433 = vld [vmem:[%s4 + $0x3a8] sm:$0xff]
    %v434 = vld [vmem:[%s4 + $0x3b0] sm:$0xff]
    %v435 = vld [vmem:[%s4 + $0x3b8] sm:$0xff]
    %v436 = vld [vmem:[%s4 + $0x3c0] sm:$0xff]
    %v437 = vld [vmem:[%s4 + $0x3c8] sm:$0xff]
    %v438 = vld [vmem:[%s4 + $0x3d0] sm:$0xff]
    %v439 = vld [vmem:[%s4 + $0x3d8] sm:$0xff]
    %v440 = vld [vmem:[%s4 + $0x3e0] sm:$0xff]
    %v441 = vld [vmem:[%s4 + $0x3e8] sm:$0xff]
    %v442 = vld [vmem:[%s4 + $0x3f0] sm:$0xff]
    %v443 = vld [vmem:[%s4 + $0x3f8] sm:$0xff]
    %v444 = vld [vmem:[%s5] sm:$0x1]
    %v445 = vld [vmem:[%s2] sm:$0xff]
    %v446 = vld [vmem:[%s2 + $0x8] sm:$0xff]
    %v447 = vld [vmem:[%s2 + $0x10] sm:$0xff]
    %v448 = vld [vmem:[%s2 + $0x18] sm:$0xff]
    %v449 = vld [vmem:[%s2 + $0x20] sm:$0xff]
    %v450 = vld [vmem:[%s2 + $0x28] sm:$0xff]
    %v451 = vld [vmem:[%s2 + $0x30] sm:$0xff]
    %v452 = vld [vmem:[%s2 + $0x38] sm:$0xff]
    %v453 = vld [vmem:[%s2 + $0x40] sm:$0xff]
    %v454 = vld [vmem:[%s2 + $0x48] sm:$0xff]
    %v455 = vld [vmem:[%s2 + $0x50] sm:$0xff]
    %v456 = vld [vmem:[%s2 + $0x58] sm:$0xff]
    %v457 = vld [vmem:[%s2 + $0x60] sm:$0xff]
    %v458 = vld [vmem:[%s2 + $0x68] sm:$0xff]
    %v459 = vld [vmem:[%s2 + $0x70] sm:$0xff]
    %v460 = vld [vmem:[%s2 + $0x78] sm:$0xff]
    %v461 = vld [vmem:[%s7] sm:$0xff]
    %v462 = vld [vmem:[%s7 + $0x8] sm:$0xff]
    %v463 = vld [vmem:[%s7 + $0x10] sm:$0xff]
    %v464 = vld [vmem:[%s7 + $0x18] sm:$0xff]
    %v465 = vld [vmem:[%s7 + $0x20] sm:$0xff]
    %v466 = vld [vmem:[%s7 + $0x28] sm:$0xff]
    %v467 = vld [vmem:[%s7 + $0x30] sm:$0xff]
    %v468 = vld [vmem:[%s7 + $0x38] sm:$0xff]
    %v469 = vld [vmem:[%s7 + $0x40] sm:$0xff]
    %v470 = vld [vmem:[%s7 + $0x48] sm:$0xff]
    %v471 = vld [vmem:[%s7 + $0x50] sm:$0xff]
    %v472 = vld [vmem:[%s7 + $0x58] sm:$0xff]
    %v473 = vld [vmem:[%s7 + $0x60] sm:$0xff]
    %v474 = vld [vmem:[%s7 + $0x68] sm:$0xff]
    %v475 = vld [vmem:[%s7 + $0x70] sm:$0xff]
    %v476 = vld [vmem:[%s7 + $0x78] sm:$0xff]
    %v477 = vld [vmem:[%s8] sm:$0xff]
    loop: start=0, step=1, limit=5
    $region46: #{_forward_jit.3} parent=1 // loop_pre_header
      _
    $region47: #{_forward_jit.3} parent=1 // loop_header
      %s479 = sphi 0, %s483
      %p480 = scmp.ge.s32.totalorder %s479, 5
      %v484 = vphi %v461, %v3018
      %v485 = vphi %v462, %v3019
      %v486 = vphi %v463, %v3020
      %v487 = vphi %v464, %v3021
      %v488 = vphi %v465, %v3022
      %v489 = vphi %v466, %v3023
      %v490 = vphi %v467, %v3024
      %v491 = vphi %v468, %v3025
      %v492 = vphi %v469, %v3026
      %v493 = vphi %v470, %v3027
      %v494 = vphi %v471, %v3028
      %v495 = vphi %v472, %v3029
      %v496 = vphi %v473, %v3030
      %v497 = vphi %v474, %v3031
      %v498 = vphi %v475, %v3032
      %v499 = vphi %v476, %v3033
      %v500 = vphi %v477, %v3058
      %v501 = vphi 0.0, %v2712
      %v502 = vphi 0.0, %v2713
      %v503 = vphi 0.0, %v2714
      %v504 = vphi 0.0, %v2715
      %v505 = vphi 0.0, %v2716
      %v506 = vphi 0.0, %v2717
      %v507 = vphi 0.0, %v2718
      %v508 = vphi 0.0, %v2719
      %v509 = vphi 0.0, %v2720
      %v510 = vphi 0.0, %v2721
      %v511 = vphi 0.0, %v2722
      %v512 = vphi 0.0, %v2723
      %v513 = vphi 0.0, %v2724
      %v514 = vphi 0.0, %v2725
      %v515 = vphi 0.0, %v2726
      %v516 = vphi 0.0, %v2727
      %v517 = vphi 0.0, %v3039
      %v518 = vphi 0.0, %v2776
      %v519 = vphi 0.0, %v2777
      %v520 = vphi 0.0, %v2778
      %v521 = vphi 0.0, %v2779
      %v522 = vphi 0.0, %v2780
      %v523 = vphi 0.0, %v2781
      %v524 = vphi 0.0, %v2782
      %v525 = vphi 0.0, %v2783
      %v526 = vphi 0.0, %v2784
      %v527 = vphi 0.0, %v2785
      %v528 = vphi 0.0, %v2786
      %v529 = vphi 0.0, %v2787
      %v530 = vphi 0.0, %v2788
      %v531 = vphi 0.0, %v2789
      %v532 = vphi 0.0, %v2790
      %v533 = vphi 0.0, %v2791
      %v534 = vphi 0.0, %v3043
    $region48: #{_forward_jit.3} parent=1 // loop_header_branch
      %482 = sbr.rel (%p480) target = $region52
    $region49: #{_forward_jit.3} parent=1 // loop_body
      %s535 = sld [smem:[#allocation2 + %s479]]
      %s536 = sld [smem:[#allocation4 + %s479]]
      %v537 = vpack.c.bf16 %v500, %v500
      %v666 = vunpack.c.l.b16 %v316
      %v667 = vunpack.c.h.b16 %v316
      %v668 = vunpack.c.l.b16 %v317
      %v669 = vunpack.c.h.b16 %v317
      %v670 = vunpack.c.l.b16 %v318
      %v671 = vunpack.c.h.b16 %v318
      %v672 = vunpack.c.l.b16 %v319
      %v673 = vunpack.c.h.b16 %v319
      %v674 = vunpack.c.l.b16 %v320
      %v675 = vunpack.c.h.b16 %v320
      %v676 = vunpack.c.l.b16 %v321
      %v677 = vunpack.c.h.b16 %v321
      %v678 = vunpack.c.l.b16 %v322
      %v679 = vunpack.c.h.b16 %v322
      %v680 = vunpack.c.l.b16 %v323
      %v681 = vunpack.c.h.b16 %v323
      %v682 = vunpack.c.l.b16 %v324
      %v683 = vunpack.c.h.b16 %v324
      %v684 = vunpack.c.l.b16 %v325
      %v685 = vunpack.c.h.b16 %v325
      %v686 = vunpack.c.l.b16 %v326
      %v687 = vunpack.c.h.b16 %v326
      %v688 = vunpack.c.l.b16 %v327
      %v689 = vunpack.c.h.b16 %v327
      %v690 = vunpack.c.l.b16 %v328
      %v691 = vunpack.c.h.b16 %v328
      %v692 = vunpack.c.l.b16 %v329
      %v693 = vunpack.c.h.b16 %v329
      %v694 = vunpack.c.l.b16 %v330
      %v695 = vunpack.c.h.b16 %v330
      %v696 = vunpack.c.l.b16 %v331
      %v697 = vunpack.c.h.b16 %v331
      %v698 = vunpack.c.l.b16 %v332
      %v699 = vunpack.c.h.b16 %v332
      %v700 = vunpack.c.l.b16 %v333
      %v701 = vunpack.c.h.b16 %v333
      %v702 = vunpack.c.l.b16 %v334
      %v703 = vunpack.c.h.b16 %v334
      %v704 = vunpack.c.l.b16 %v335
      %v705 = vunpack.c.h.b16 %v335
      %v706 = vunpack.c.l.b16 %v336
      %v707 = vunpack.c.h.b16 %v336
      %v708 = vunpack.c.l.b16 %v337
      %v709 = vunpack.c.h.b16 %v337
      %v710 = vunpack.c.l.b16 %v338
      %v711 = vunpack.c.h.b16 %v338
      %v712 = vunpack.c.l.b16 %v339
      %v713 = vunpack.c.h.b16 %v339
      %v714 = vunpack.c.l.b16 %v340
      %v715 = vunpack.c.h.b16 %v340
      %v716 = vunpack.c.l.b16 %v341
      %v717 = vunpack.c.h.b16 %v341
      %v718 = vunpack.c.l.b16 %v342
      %v719 = vunpack.c.h.b16 %v342
      %v720 = vunpack.c.l.b16 %v343
      %v721 = vunpack.c.h.b16 %v343
      %v722 = vunpack.c.l.b16 %v344
      %v723 = vunpack.c.h.b16 %v344
      %v724 = vunpack.c.l.b16 %v345
      %v725 = vunpack.c.h.b16 %v345
      %v726 = vunpack.c.l.b16 %v346
      %v727 = vunpack.c.h.b16 %v346
      %v728 = vunpack.c.l.b16 %v347
      %v729 = vunpack.c.h.b16 %v347
      %v730 = vunpack.c.l.b16 %v348
      %v731 = vunpack.c.h.b16 %v348
      %v732 = vunpack.c.l.b16 %v349
      %v733 = vunpack.c.h.b16 %v349
      %v734 = vunpack.c.l.b16 %v350
      %v735 = vunpack.c.h.b16 %v350
      %v736 = vunpack.c.l.b16 %v351
      %v737 = vunpack.c.h.b16 %v351
      %v738 = vunpack.c.l.b16 %v352
      %v739 = vunpack.c.h.b16 %v352
      %v740 = vunpack.c.l.b16 %v353
      %v741 = vunpack.c.h.b16 %v353
      %v742 = vunpack.c.l.b16 %v354
      %v743 = vunpack.c.h.b16 %v354
      %v744 = vunpack.c.l.b16 %v355
      %v745 = vunpack.c.h.b16 %v355
      %v746 = vunpack.c.l.b16 %v356
      %v747 = vunpack.c.h.b16 %v356
      %v748 = vunpack.c.l.b16 %v357
      %v749 = vunpack.c.h.b16 %v357
      %v750 = vunpack.c.l.b16 %v358
      %v751 = vunpack.c.h.b16 %v358
      %v752 = vunpack.c.l.b16 %v359
      %v753 = vunpack.c.h.b16 %v359
      %v754 = vunpack.c.l.b16 %v360
      %v755 = vunpack.c.h.b16 %v360
      %v756 = vunpack.c.l.b16 %v361
      %v757 = vunpack.c.h.b16 %v361
      %v758 = vunpack.c.l.b16 %v362
      %v759 = vunpack.c.h.b16 %v362
      %v760 = vunpack.c.l.b16 %v363
      %v761 = vunpack.c.h.b16 %v363
      %v762 = vunpack.c.l.b16 %v364
      %v763 = vunpack.c.h.b16 %v364
      %v764 = vunpack.c.l.b16 %v365
      %v765 = vunpack.c.h.b16 %v365
      %v766 = vunpack.c.l.b16 %v366
      %v767 = vunpack.c.h.b16 %v366
      %v768 = vunpack.c.l.b16 %v367
      %v769 = vunpack.c.h.b16 %v367
      %v770 = vunpack.c.l.b16 %v368
      %v771 = vunpack.c.h.b16 %v368
      %v772 = vunpack.c.l.b16 %v369
      %v773 = vunpack.c.h.b16 %v369
      %v774 = vunpack.c.l.b16 %v370
      %v775 = vunpack.c.h.b16 %v370
      %v776 = vunpack.c.l.b16 %v371
      %v777 = vunpack.c.h.b16 %v371
      %v778 = vunpack.c.l.b16 %v372
      %v779 = vunpack.c.h.b16 %v372
      %v780 = vunpack.c.l.b16 %v373
      %v781 = vunpack.c.h.b16 %v373
      %v782 = vunpack.c.l.b16 %v374
      %v783 = vunpack.c.h.b16 %v374
      %v784 = vunpack.c.l.b16 %v375
      %v785 = vunpack.c.h.b16 %v375
      %v786 = vunpack.c.l.b16 %v376
      %v787 = vunpack.c.h.b16 %v376
      %v788 = vunpack.c.l.b16 %v377
      %v789 = vunpack.c.h.b16 %v377
      %v790 = vunpack.c.l.b16 %v378
      %v791 = vunpack.c.h.b16 %v378
      %v792 = vunpack.c.l.b16 %v379
      %v793 = vunpack.c.h.b16 %v379
      %v794 = vunpack.c.l.b16 %v380
      %v795 = vunpack.c.h.b16 %v380
      %v796 = vunpack.c.l.b16 %v381
      %v797 = vunpack.c.h.b16 %v381
      %v798 = vunpack.c.l.b16 %v382
      %v799 = vunpack.c.h.b16 %v382
      %v800 = vunpack.c.l.b16 %v383
      %v801 = vunpack.c.h.b16 %v383
      %v802 = vunpack.c.l.b16 %v384
      %v803 = vunpack.c.h.b16 %v384
      %v804 = vunpack.c.l.b16 %v385
      %v805 = vunpack.c.h.b16 %v385
      %v806 = vunpack.c.l.b16 %v386
      %v807 = vunpack.c.h.b16 %v386
      %v808 = vunpack.c.l.b16 %v387
      %v809 = vunpack.c.h.b16 %v387
      %v810 = vunpack.c.l.b16 %v388
      %v811 = vunpack.c.h.b16 %v388
      %v812 = vunpack.c.l.b16 %v389
      %v813 = vunpack.c.h.b16 %v389
      %v814 = vunpack.c.l.b16 %v390
      %v815 = vunpack.c.h.b16 %v390
      %v816 = vunpack.c.l.b16 %v391
      %v817 = vunpack.c.h.b16 %v391
      %v818 = vunpack.c.l.b16 %v392
      %v819 = vunpack.c.h.b16 %v392
      %v820 = vunpack.c.l.b16 %v393
      %v821 = vunpack.c.h.b16 %v393
      %v822 = vunpack.c.l.b16 %v394
      %v823 = vunpack.c.h.b16 %v394
      %v824 = vunpack.c.l.b16 %v395
      %v825 = vunpack.c.h.b16 %v395
      %v826 = vunpack.c.l.b16 %v396
      %v827 = vunpack.c.h.b16 %v396
      %v828 = vunpack.c.l.b16 %v397
      %v829 = vunpack.c.h.b16 %v397
      %v830 = vunpack.c.l.b16 %v398
      %v831 = vunpack.c.h.b16 %v398
      %v832 = vunpack.c.l.b16 %v399
      %v833 = vunpack.c.h.b16 %v399
      %v834 = vunpack.c.l.b16 %v400
      %v835 = vunpack.c.h.b16 %v400
      %v836 = vunpack.c.l.b16 %v401
      %v837 = vunpack.c.h.b16 %v401
      %v838 = vunpack.c.l.b16 %v402
      %v839 = vunpack.c.h.b16 %v402
      %v840 = vunpack.c.l.b16 %v403
      %v841 = vunpack.c.h.b16 %v403
      %v842 = vunpack.c.l.b16 %v404
      %v843 = vunpack.c.h.b16 %v404
      %v844 = vunpack.c.l.b16 %v405
      %v845 = vunpack.c.h.b16 %v405
      %v846 = vunpack.c.l.b16 %v406
      %v847 = vunpack.c.h.b16 %v406
      %v848 = vunpack.c.l.b16 %v407
      %v849 = vunpack.c.h.b16 %v407
      %v850 = vunpack.c.l.b16 %v408
      %v851 = vunpack.c.h.b16 %v408
      %v852 = vunpack.c.l.b16 %v409
      %v853 = vunpack.c.h.b16 %v409
      %v854 = vunpack.c.l.b16 %v410
      %v855 = vunpack.c.h.b16 %v410
      %v856 = vunpack.c.l.b16 %v411
      %v857 = vunpack.c.h.b16 %v411
      %v858 = vunpack.c.l.b16 %v412
      %v859 = vunpack.c.h.b16 %v412
      %v860 = vunpack.c.l.b16 %v413
      %v861 = vunpack.c.h.b16 %v413
      %v862 = vunpack.c.l.b16 %v414
      %v863 = vunpack.c.h.b16 %v414
      %v864 = vunpack.c.l.b16 %v415
      %v865 = vunpack.c.h.b16 %v415
      %v866 = vunpack.c.l.b16 %v416
      %v867 = vunpack.c.h.b16 %v416
      %v868 = vunpack.c.l.b16 %v417
      %v869 = vunpack.c.h.b16 %v417
      %v870 = vunpack.c.l.b16 %v418
      %v871 = vunpack.c.h.b16 %v418
      %v872 = vunpack.c.l.b16 %v419
      %v873 = vunpack.c.h.b16 %v419
      %v874 = vunpack.c.l.b16 %v420
      %v875 = vunpack.c.h.b16 %v420
      %v876 = vunpack.c.l.b16 %v421
      %v877 = vunpack.c.h.b16 %v421
      %v878 = vunpack.c.l.b16 %v422
      %v879 = vunpack.c.h.b16 %v422
      %v880 = vunpack.c.l.b16 %v423
      %v881 = vunpack.c.h.b16 %v423
      %v882 = vunpack.c.l.b16 %v424
      %v883 = vunpack.c.h.b16 %v424
      %v884 = vunpack.c.l.b16 %v425
      %v885 = vunpack.c.h.b16 %v425
      %v886 = vunpack.c.l.b16 %v426
      %v887 = vunpack.c.h.b16 %v426
      %v888 = vunpack.c.l.b16 %v427
      %v889 = vunpack.c.h.b16 %v427
      %v890 = vunpack.c.l.b16 %v428
      %v891 = vunpack.c.h.b16 %v428
      %v892 = vunpack.c.l.b16 %v429
      %v893 = vunpack.c.h.b16 %v429
      %v894 = vunpack.c.l.b16 %v430
      %v895 = vunpack.c.h.b16 %v430
      %v896 = vunpack.c.l.b16 %v431
      %v897 = vunpack.c.h.b16 %v431
      %v898 = vunpack.c.l.b16 %v432
      %v899 = vunpack.c.h.b16 %v432
      %v900 = vunpack.c.l.b16 %v433
      %v901 = vunpack.c.h.b16 %v433
      %v902 = vunpack.c.l.b16 %v434
      %v903 = vunpack.c.h.b16 %v434
      %v904 = vunpack.c.l.b16 %v435
      %v905 = vunpack.c.h.b16 %v435
      %v906 = vunpack.c.l.b16 %v436
      %v907 = vunpack.c.h.b16 %v436
      %v908 = vunpack.c.l.b16 %v437
      %v909 = vunpack.c.h.b16 %v437
      %v910 = vunpack.c.l.b16 %v438
      %v911 = vunpack.c.h.b16 %v438
      %v912 = vunpack.c.l.b16 %v439
      %v913 = vunpack.c.h.b16 %v439
      %v914 = vunpack.c.l.b16 %v440
      %v915 = vunpack.c.h.b16 %v440
      %v916 = vunpack.c.l.b16 %v441
      %v917 = vunpack.c.h.b16 %v441
      %v918 = vunpack.c.l.b16 %v442
      %v919 = vunpack.c.h.b16 %v442
      %v920 = vunpack.c.l.b16 %v443
      %v921 = vunpack.c.h.b16 %v443
      %v922 = vpack.c.b16 %v682, %v666
      %v923 = vpack.c.b16 %v683, %v667
      %v924 = vpack.c.b16 %v684, %v668
      %v925 = vpack.c.b16 %v685, %v669
      %v926 = vpack.c.b16 %v686, %v670
      %v927 = vpack.c.b16 %v687, %v671
      %v928 = vpack.c.b16 %v688, %v672
      %v929 = vpack.c.b16 %v689, %v673
      %v930 = vpack.c.b16 %v690, %v674
      %v931 = vpack.c.b16 %v691, %v675
      %v932 = vpack.c.b16 %v692, %v676
      %v933 = vpack.c.b16 %v693, %v677
      %v934 = vpack.c.b16 %v694, %v678
      %v935 = vpack.c.b16 %v695, %v679
      %v936 = vpack.c.b16 %v696, %v680
      %v937 = vpack.c.b16 %v697, %v681
      %v938 = vpack.c.b16 %v714, %v698
      %v939 = vpack.c.b16 %v715, %v699
      %v940 = vpack.c.b16 %v716, %v700
      %v941 = vpack.c.b16 %v717, %v701
      %v942 = vpack.c.b16 %v718, %v702
      %v943 = vpack.c.b16 %v719, %v703
      %v944 = vpack.c.b16 %v720, %v704
      %v945 = vpack.c.b16 %v721, %v705
      %v946 = vpack.c.b16 %v722, %v706
      %v947 = vpack.c.b16 %v723, %v707
      %v948 = vpack.c.b16 %v724, %v708
      %v949 = vpack.c.b16 %v725, %v709
      %v950 = vpack.c.b16 %v726, %v710
      %v951 = vpack.c.b16 %v727, %v711
      %v952 = vpack.c.b16 %v728, %v712
      %v953 = vpack.c.b16 %v729, %v713
      %v954 = vpack.c.b16 %v746, %v730
      %v955 = vpack.c.b16 %v747, %v731
      %v956 = vpack.c.b16 %v748, %v732
      %v957 = vpack.c.b16 %v749, %v733
      %v958 = vpack.c.b16 %v750, %v734
      %v959 = vpack.c.b16 %v751, %v735
      %v960 = vpack.c.b16 %v752, %v736
      %v961 = vpack.c.b16 %v753, %v737
      %v962 = vpack.c.b16 %v754, %v738
      %v963 = vpack.c.b16 %v755, %v739
      %v964 = vpack.c.b16 %v756, %v740
      %v965 = vpack.c.b16 %v757, %v741
      %v966 = vpack.c.b16 %v758, %v742
      %v967 = vpack.c.b16 %v759, %v743
      %v968 = vpack.c.b16 %v760, %v744
      %v969 = vpack.c.b16 %v761, %v745
      %v970 = vpack.c.b16 %v778, %v762
      %v971 = vpack.c.b16 %v779, %v763
      %v972 = vpack.c.b16 %v780, %v764
      %v973 = vpack.c.b16 %v781, %v765
      %v974 = vpack.c.b16 %v782, %v766
      %v975 = vpack.c.b16 %v783, %v767
      %v976 = vpack.c.b16 %v784, %v768
      %v977 = vpack.c.b16 %v785, %v769
      %v978 = vpack.c.b16 %v786, %v770
      %v979 = vpack.c.b16 %v787, %v771
      %v980 = vpack.c.b16 %v788, %v772
      %v981 = vpack.c.b16 %v789, %v773
      %v982 = vpack.c.b16 %v790, %v774
      %v983 = vpack.c.b16 %v791, %v775
      %v984 = vpack.c.b16 %v792, %v776
      %v985 = vpack.c.b16 %v793, %v777
      %v986 = vpack.c.b16 %v810, %v794
      %v987 = vpack.c.b16 %v811, %v795
      %v988 = vpack.c.b16 %v812, %v796
      %v989 = vpack.c.b16 %v813, %v797
      %v990 = vpack.c.b16 %v814, %v798
      %v991 = vpack.c.b16 %v815, %v799
      %v992 = vpack.c.b16 %v816, %v800
      %v993 = vpack.c.b16 %v817, %v801
      %v994 = vpack.c.b16 %v818, %v802
      %v995 = vpack.c.b16 %v819, %v803
      %v996 = vpack.c.b16 %v820, %v804
      %v997 = vpack.c.b16 %v821, %v805
      %v998 = vpack.c.b16 %v822, %v806
      %v999 = vpack.c.b16 %v823, %v807
      %v1000 = vpack.c.b16 %v824, %v808
      %v1001 = vpack.c.b16 %v825, %v809
      %v1002 = vpack.c.b16 %v842, %v826
      %v1003 = vpack.c.b16 %v843, %v827
      %v1004 = vpack.c.b16 %v844, %v828
      %v1005 = vpack.c.b16 %v845, %v829
      %v1006 = vpack.c.b16 %v846, %v830
      %v1007 = vpack.c.b16 %v847, %v831
      %v1008 = vpack.c.b16 %v848, %v832
      %v1009 = vpack.c.b16 %v849, %v833
      %v1010 = vpack.c.b16 %v850, %v834
      %v1011 = vpack.c.b16 %v851, %v835
      %v1012 = vpack.c.b16 %v852, %v836
      %v1013 = vpack.c.b16 %v853, %v837
      %v1014 = vpack.c.b16 %v854, %v838
      %v1015 = vpack.c.b16 %v855, %v839
      %v1016 = vpack.c.b16 %v856, %v840
      %v1017 = vpack.c.b16 %v857, %v841
      %v1018 = vpack.c.b16 %v874, %v858
      %v1019 = vpack.c.b16 %v875, %v859
      %v1020 = vpack.c.b16 %v876, %v860
      %v1021 = vpack.c.b16 %v877, %v861
      %v1022 = vpack.c.b16 %v878, %v862
      %v1023 = vpack.c.b16 %v879, %v863
      %v1024 = vpack.c.b16 %v880, %v864
      %v1025 = vpack.c.b16 %v881, %v865
      %v1026 = vpack.c.b16 %v882, %v866
      %v1027 = vpack.c.b16 %v883, %v867
      %v1028 = vpack.c.b16 %v884, %v868
      %v1029 = vpack.c.b16 %v885, %v869
      %v1030 = vpack.c.b16 %v886, %v870
      %v1031 = vpack.c.b16 %v887, %v871
      %v1032 = vpack.c.b16 %v888, %v872
      %v1033 = vpack.c.b16 %v889, %v873
      %v1034 = vpack.c.b16 %v906, %v890
      %v1035 = vpack.c.b16 %v907, %v891
      %v1036 = vpack.c.b16 %v908, %v892
      %v1037 = vpack.c.b16 %v909, %v893
      %v1038 = vpack.c.b16 %v910, %v894
      %v1039 = vpack.c.b16 %v911, %v895
      %v1040 = vpack.c.b16 %v912, %v896
      %v1041 = vpack.c.b16 %v913, %v897
      %v1042 = vpack.c.b16 %v914, %v898
      %v1043 = vpack.c.b16 %v915, %v899
      %v1044 = vpack.c.b16 %v916, %v900
      %v1045 = vpack.c.b16 %v917, %v901
      %v1046 = vpack.c.b16 %v918, %v902
      %v1047 = vpack.c.b16 %v919, %v903
      %v1048 = vpack.c.b16 %v920, %v904
      %v1049 = vpack.c.b16 %v921, %v905
      %1178 = vmatprep.subr.bf16.mxu0 %v1035
      %1179 = vmatpush1.bf16.msra.mxu0 %v1034
      %1180 = vmatprep.subr.bf16.mxu0 %v1019
      %1181 = vmatpush1.bf16.msra.mxu0 %v1018
      %1182 = vmatprep.subr.bf16.mxu0 %v1003
      %1183 = vmatpush1.bf16.msra.mxu0 %v1002
      %1184 = vmatprep.subr.bf16.mxu0 %v987
      %1185 = vmatpush1.bf16.msra.mxu0 %v986
      %1186 = vmatprep.subr.bf16.mxu0 %v971
      %1187 = vmatpush1.bf16.msra.mxu0 %v970
      %1188 = vmatprep.subr.bf16.mxu0 %v955
      %1189 = vmatpush1.bf16.msra.mxu0 %v954
      %1190 = vmatprep.subr.bf16.mxu0 %v939
      %1191 = vmatpush1.bf16.msra.mxu0 %v938
      %1192 = vmatprep.subr.bf16.mxu0 %v923
      %1193 = vmatpush1.bf16.msra.mxu0 %v922
      %1194 = vmatprep.subr.bf16.mxu0 0
      %1195 = vmatpush2.bf16.msra.mxu0 0
      %1196 = vmatprep.subr.bf16.mxu0 0
      %1197 = vmatpush2.bf16.msra.mxu0 0
      %1198 = vmatprep.subr.bf16.mxu0 0
      %1199 = vmatpush2.bf16.msra.mxu0 0
      %1200 = vmatprep.subr.bf16.mxu0 0
      %1201 = vmatpush2.bf16.msra.mxu0 0
      %1202 = vmatprep.subr.bf16.mxu0 0
      %1203 = vmatpush2.bf16.msra.mxu0 0
      %1204 = vmatprep.subr.bf16.mxu0 0
      %1205 = vmatpush2.bf16.msra.mxu0 0
      %1206 = vmatprep.subr.bf16.mxu0 0
      %1207 = vmatpush2.bf16.msra.mxu0 0
      %1208 = vmatprep.subr.bf16.mxu0 0
      %1209 = vmatpush2.bf16.msra.mxu0 0
      %1210 = vmatprep.mubr.bf16.mxu0 0
      %1211 = vmatmul.mubr.bf16.gmra.mxu0 %v537
      %v1212 = vpop.f32.mrf.mxu0
      %v1213 = vadd.f32 0.0, %v1212
      %v1214 = vpop.f32.mrf.mxu0
      %v1215 = vadd.f32 0.0, %v1214
      %v1216 = vpop.f32.mrf.mxu0
      %v1217 = vpop.f32.mrf.mxu0
      %1218 = vdwg.mxu0
      %1219 = vmatprep.subr.bf16.mxu0 %v1037
      %1220 = vmatpush1.bf16.msra.mxu0 %v1036
      %1221 = vmatprep.subr.bf16.mxu0 %v1021
      %1222 = vmatpush1.bf16.msra.mxu0 %v1020
      %1223 = vmatprep.subr.bf16.mxu0 %v1005
      %1224 = vmatpush1.bf16.msra.mxu0 %v1004
      %1225 = vmatprep.subr.bf16.mxu0 %v989
      %1226 = vmatpush1.bf16.msra.mxu0 %v988
      %1227 = vmatprep.subr.bf16.mxu0 %v973
      %1228 = vmatpush1.bf16.msra.mxu0 %v972
      %1229 = vmatprep.subr.bf16.mxu0 %v957
      %1230 = vmatpush1.bf16.msra.mxu0 %v956
      %1231 = vmatprep.subr.bf16.mxu0 %v941
      %1232 = vmatpush1.bf16.msra.mxu0 %v940
      %1233 = vmatprep.subr.bf16.mxu0 %v925
      %1234 = vmatpush1.bf16.msra.mxu0 %v924
      %1235 = vmatprep.subr.bf16.mxu0 0
      %1236 = vmatpush2.bf16.msra.mxu0 0
      %1237 = vmatprep.subr.bf16.mxu0 0
      %1238 = vmatpush2.bf16.msra.mxu0 0
      %1239 = vmatprep.subr.bf16.mxu0 0
      %1240 = vmatpush2.bf16.msra.mxu0 0
      %1241 = vmatprep.subr.bf16.mxu0 0
      %1242 = vmatpush2.bf16.msra.mxu0 0
      %1243 = vmatprep.subr.bf16.mxu0 0
      %1244 = vmatpush2.bf16.msra.mxu0 0
      %1245 = vmatprep.subr.bf16.mxu0 0
      %1246 = vmatpush2.bf16.msra.mxu0 0
      %1247 = vmatprep.subr.bf16.mxu0 0
      %1248 = vmatpush2.bf16.msra.mxu0 0
      %1249 = vmatprep.subr.bf16.mxu0 0
      %1250 = vmatpush2.bf16.msra.mxu0 0
      %1251 = vmatprep.mubr.bf16.mxu0 0
      %1252 = vmatmul.mubr.bf16.gmra.mxu0 %v537
      %v1253 = vpop.f32.mrf.mxu0
      %v1254 = vadd.f32 0.0, %v1253
      %v1255 = vpop.f32.mrf.mxu0
      %v1256 = vadd.f32 0.0, %v1255
      %v1257 = vpop.f32.mrf.mxu0
      %v1258 = vpop.f32.mrf.mxu0
      %1259 = vdwg.mxu0
      %1260 = vmatprep.subr.bf16.mxu0 %v1039
      %1261 = vmatpush1.bf16.msra.mxu0 %v1038
      %1262 = vmatprep.subr.bf16.mxu0 %v1023
      %1263 = vmatpush1.bf16.msra.mxu0 %v1022
      %1264 = vmatprep.subr.bf16.mxu0 %v1007
      %1265 = vmatpush1.bf16.msra.mxu0 %v1006
      %1266 = vmatprep.subr.bf16.mxu0 %v991
      %1267 = vmatpush1.bf16.msra.mxu0 %v990
      %1268 = vmatprep.subr.bf16.mxu0 %v975
      %1269 = vmatpush1.bf16.msra.mxu0 %v974
      %1270 = vmatprep.subr.bf16.mxu0 %v959
      %1271 = vmatpush1.bf16.msra.mxu0 %v958
      %1272 = vmatprep.subr.bf16.mxu0 %v943
      %1273 = vmatpush1.bf16.msra.mxu0 %v942
      %1274 = vmatprep.subr.bf16.mxu0 %v927
      %1275 = vmatpush1.bf16.msra.mxu0 %v926
      %1276 = vmatprep.subr.bf16.mxu0 0
      %1277 = vmatpush2.bf16.msra.mxu0 0
      %1278 = vmatprep.subr.bf16.mxu0 0
      %1279 = vmatpush2.bf16.msra.mxu0 0
      %1280 = vmatprep.subr.bf16.mxu0 0
      %1281 = vmatpush2.bf16.msra.mxu0 0
      %1282 = vmatprep.subr.bf16.mxu0 0
      %1283 = vmatpush2.bf16.msra.mxu0 0
      %1284 = vmatprep.subr.bf16.mxu0 0
      %1285 = vmatpush2.bf16.msra.mxu0 0
      %1286 = vmatprep.subr.bf16.mxu0 0
      %1287 = vmatpush2.bf16.msra.mxu0 0
      %1288 = vmatprep.subr.bf16.mxu0 0
      %1289 = vmatpush2.bf16.msra.mxu0 0
      %1290 = vmatprep.subr.bf16.mxu0 0
      %1291 = vmatpush2.bf16.msra.mxu0 0
      %1292 = vmatprep.mubr.bf16.mxu0 0
      %1293 = vmatmul.mubr.bf16.gmra.mxu0 %v537
      %v1294 = vpop.f32.mrf.mxu0
      %v1295 = vadd.f32 0.0, %v1294
      %v1296 = vpop.f32.mrf.mxu0
      %v1297 = vadd.f32 0.0, %v1296
      %v1298 = vpop.f32.mrf.mxu0
      %v1299 = vpop.f32.mrf.mxu0
      %1300 = vdwg.mxu0
      %1301 = vmatprep.subr.bf16.mxu0 %v1041
      %1302 = vmatpush1.bf16.msra.mxu0 %v1040
      %1303 = vmatprep.subr.bf16.mxu0 %v1025
      %1304 = vmatpush1.bf16.msra.mxu0 %v1024
      %1305 = vmatprep.subr.bf16.mxu0 %v1009
      %1306 = vmatpush1.bf16.msra.mxu0 %v1008
      %1307 = vmatprep.subr.bf16.mxu0 %v993
      %1308 = vmatpush1.bf16.msra.mxu0 %v992
      %1309 = vmatprep.subr.bf16.mxu0 %v977
      %1310 = vmatpush1.bf16.msra.mxu0 %v976
      %1311 = vmatprep.subr.bf16.mxu0 %v961
      %1312 = vmatpush1.bf16.msra.mxu0 %v960
      %1313 = vmatprep.subr.bf16.mxu0 %v945
      %1314 = vmatpush1.bf16.msra.mxu0 %v944
      %1315 = vmatprep.subr.bf16.mxu0 %v929
      %1316 = vmatpush1.bf16.msra.mxu0 %v928
      %1317 = vmatprep.subr.bf16.mxu0 0
      %1318 = vmatpush2.bf16.msra.mxu0 0
      %1319 = vmatprep.subr.bf16.mxu0 0
      %1320 = vmatpush2.bf16.msra.mxu0 0
      %1321 = vmatprep.subr.bf16.mxu0 0
      %1322 = vmatpush2.bf16.msra.mxu0 0
      %1323 = vmatprep.subr.bf16.mxu0 0
      %1324 = vmatpush2.bf16.msra.mxu0 0
      %1325 = vmatprep.subr.bf16.mxu0 0
      %1326 = vmatpush2.bf16.msra.mxu0 0
      %1327 = vmatprep.subr.bf16.mxu0 0
      %1328 = vmatpush2.bf16.msra.mxu0 0
      %1329 = vmatprep.subr.bf16.mxu0 0
      %1330 = vmatpush2.bf16.msra.mxu0 0
      %1331 = vmatprep.subr.bf16.mxu0 0
      %1332 = vmatpush2.bf16.msra.mxu0 0
      %1333 = vmatprep.mubr.bf16.mxu0 0
      %1334 = vmatmul.mubr.bf16.gmra.mxu0 %v537
      %v1335 = vpop.f32.mrf.mxu0
      %v1336 = vadd.f32 0.0, %v1335
      %v1337 = vpop.f32.mrf.mxu0
      %v1338 = vadd.f32 0.0, %v1337
      %v1339 = vpop.f32.mrf.mxu0
      %v1340 = vpop.f32.mrf.mxu0
      %1341 = vdwg.mxu0
      %1342 = vmatprep.subr.bf16.mxu0 %v1043
      %1343 = vmatpush1.bf16.msra.mxu0 %v1042
      %1344 = vmatprep.subr.bf16.mxu0 %v1027
      %1345 = vmatpush1.bf16.msra.mxu0 %v1026
      %1346 = vmatprep.subr.bf16.mxu0 %v1011
      %1347 = vmatpush1.bf16.msra.mxu0 %v1010
      %1348 = vmatprep.subr.bf16.mxu0 %v995
      %1349 = vmatpush1.bf16.msra.mxu0 %v994
      %1350 = vmatprep.subr.bf16.mxu0 %v979
      %1351 = vmatpush1.bf16.msra.mxu0 %v978
      %1352 = vmatprep.subr.bf16.mxu0 %v963
      %1353 = vmatpush1.bf16.msra.mxu0 %v962
      %1354 = vmatprep.subr.bf16.mxu0 %v947
      %1355 = vmatpush1.bf16.msra.mxu0 %v946
      %1356 = vmatprep.subr.bf16.mxu0 %v931
      %1357 = vmatpush1.bf16.msra.mxu0 %v930
      %1358 = vmatprep.subr.bf16.mxu0 0
      %1359 = vmatpush2.bf16.msra.mxu0 0
      %1360 = vmatprep.subr.bf16.mxu0 0
      %1361 = vmatpush2.bf16.msra.mxu0 0
      %1362 = vmatprep.subr.bf16.mxu0 0
      %1363 = vmatpush2.bf16.msra.mxu0 0
      %1364 = vmatprep.subr.bf16.mxu0 0
      %1365 = vmatpush2.bf16.msra.mxu0 0
      %1366 = vmatprep.subr.bf16.mxu0 0
      %1367 = vmatpush2.bf16.msra.mxu0 0
      %1368 = vmatprep.subr.bf16.mxu0 0
      %1369 = vmatpush2.bf16.msra.mxu0 0
      %1370 = vmatprep.subr.bf16.mxu0 0
      %1371 = vmatpush2.bf16.msra.mxu0 0
      %1372 = vmatprep.subr.bf16.mxu0 0
      %1373 = vmatpush2.bf16.msra.mxu0 0
      %1374 = vmatprep.mubr.bf16.mxu0 0
      %1375 = vmatmul.mubr.bf16.gmra.mxu0 %v537
      %v1376 = vpop.f32.mrf.mxu0
      %v1377 = vadd.f32 0.0, %v1376
      %v1378 = vpop.f32.mrf.mxu0
      %v1379 = vadd.f32 0.0, %v1378
      %v1380 = vpop.f32.mrf.mxu0
      %v1381 = vpop.f32.mrf.mxu0
      %1382 = vdwg.mxu0
      %1383 = vmatprep.subr.bf16.mxu0 %v1045
      %1384 = vmatpush1.bf16.msra.mxu0 %v1044
      %1385 = vmatprep.subr.bf16.mxu0 %v1029
      %1386 = vmatpush1.bf16.msra.mxu0 %v1028
      %1387 = vmatprep.subr.bf16.mxu0 %v1013
      %1388 = vmatpush1.bf16.msra.mxu0 %v1012
      %1389 = vmatprep.subr.bf16.mxu0 %v997
      %1390 = vmatpush1.bf16.msra.mxu0 %v996
      %1391 = vmatprep.subr.bf16.mxu0 %v981
      %1392 = vmatpush1.bf16.msra.mxu0 %v980
      %1393 = vmatprep.subr.bf16.mxu0 %v965
      %1394 = vmatpush1.bf16.msra.mxu0 %v964
      %1395 = vmatprep.subr.bf16.mxu0 %v949
      %1396 = vmatpush1.bf16.msra.mxu0 %v948
      %1397 = vmatprep.subr.bf16.mxu0 %v933
      %1398 = vmatpush1.bf16.msra.mxu0 %v932
      %1399 = vmatprep.subr.bf16.mxu0 0
      %1400 = vmatpush2.bf16.msra.mxu0 0
      %1401 = vmatprep.subr.bf16.mxu0 0
      %1402 = vmatpush2.bf16.msra.mxu0 0
      %1403 = vmatprep.subr.bf16.mxu0 0
      %1404 = vmatpush2.bf16.msra.mxu0 0
      %1405 = vmatprep.subr.bf16.mxu0 0
      %1406 = vmatpush2.bf16.msra.mxu0 0
      %1407 = vmatprep.subr.bf16.mxu0 0
      %1408 = vmatpush2.bf16.msra.mxu0 0
      %1409 = vmatprep.subr.bf16.mxu0 0
      %1410 = vmatpush2.bf16.msra.mxu0 0
      %1411 = vmatprep.subr.bf16.mxu0 0
      %1412 = vmatpush2.bf16.msra.mxu0 0
      %1413 = vmatprep.subr.bf16.mxu0 0
      %1414 = vmatpush2.bf16.msra.mxu0 0
      %1415 = vmatprep.mubr.bf16.mxu0 0
      %1416 = vmatmul.mubr.bf16.gmra.mxu0 %v537
      %v1417 = vpop.f32.mrf.mxu0
      %v1418 = vadd.f32 0.0, %v1417
      %v1419 = vpop.f32.mrf.mxu0
      %v1420 = vadd.f32 0.0, %v1419
      %v1421 = vpop.f32.mrf.mxu0
      %v1422 = vpop.f32.mrf.mxu0
      %1423 = vdwg.mxu0
      %1424 = vmatprep.subr.bf16.mxu0 %v1047
      %1425 = vmatpush1.bf16.msra.mxu0 %v1046
      %1426 = vmatprep.subr.bf16.mxu0 %v1031
      %1427 = vmatpush1.bf16.msra.mxu0 %v1030
      %1428 = vmatprep.subr.bf16.mxu0 %v1015
      %1429 = vmatpush1.bf16.msra.mxu0 %v1014
      %1430 = vmatprep.subr.bf16.mxu0 %v999
      %1431 = vmatpush1.bf16.msra.mxu0 %v998
      %1432 = vmatprep.subr.bf16.mxu0 %v983
      %1433 = vmatpush1.bf16.msra.mxu0 %v982
      %1434 = vmatprep.subr.bf16.mxu0 %v967
      %1435 = vmatpush1.bf16.msra.mxu0 %v966
      %1436 = vmatprep.subr.bf16.mxu0 %v951
      %1437 = vmatpush1.bf16.msra.mxu0 %v950
      %1438 = vmatprep.subr.bf16.mxu0 %v935
      %1439 = vmatpush1.bf16.msra.mxu0 %v934
      %1440 = vmatprep.subr.bf16.mxu0 0
      %1441 = vmatpush2.bf16.msra.mxu0 0
      %1442 = vmatprep.subr.bf16.mxu0 0
      %1443 = vmatpush2.bf16.msra.mxu0 0
      %1444 = vmatprep.subr.bf16.mxu0 0
      %1445 = vmatpush2.bf16.msra.mxu0 0
      %1446 = vmatprep.subr.bf16.mxu0 0
      %1447 = vmatpush2.bf16.msra.mxu0 0
      %1448 = vmatprep.subr.bf16.mxu0 0
      %1449 = vmatpush2.bf16.msra.mxu0 0
      %1450 = vmatprep.subr.bf16.mxu0 0
      %1451 = vmatpush2.bf16.msra.mxu0 0
      %1452 = vmatprep.subr.bf16.mxu0 0
      %1453 = vmatpush2.bf16.msra.mxu0 0
      %1454 = vmatprep.subr.bf16.mxu0 0
      %1455 = vmatpush2.bf16.msra.mxu0 0
      %1456 = vmatprep.mubr.bf16.mxu0 0
      %1457 = vmatmul.mubr.bf16.gmra.mxu0 %v537
      %v1458 = vpop.f32.mrf.mxu0
      %v1459 = vadd.f32 0.0, %v1458
      %v1460 = vpop.f32.mrf.mxu0
      %v1461 = vadd.f32 0.0, %v1460
      %v1462 = vpop.f32.mrf.mxu0
      %v1463 = vpop.f32.mrf.mxu0
      %1464 = vdwg.mxu0
      %1465 = vmatprep.subr.bf16.mxu0 %v1049
      %1466 = vmatpush1.bf16.msra.mxu0 %v1048
      %1467 = vmatprep.subr.bf16.mxu0 %v1033
      %1468 = vmatpush1.bf16.msra.mxu0 %v1032
      %1469 = vmatprep.subr.bf16.mxu0 %v1017
      %1470 = vmatpush1.bf16.msra.mxu0 %v1016
      %1471 = vmatprep.subr.bf16.mxu0 %v1001
      %1472 = vmatpush1.bf16.msra.mxu0 %v1000
      %1473 = vmatprep.subr.bf16.mxu0 %v985
      %1474 = vmatpush1.bf16.msra.mxu0 %v984
      %1475 = vmatprep.subr.bf16.mxu0 %v969
      %1476 = vmatpush1.bf16.msra.mxu0 %v968
      %1477 = vmatprep.subr.bf16.mxu0 %v953
      %1478 = vmatpush1.bf16.msra.mxu0 %v952
      %1479 = vmatprep.subr.bf16.mxu0 %v937
      %1480 = vmatpush1.bf16.msra.mxu0 %v936
      %1481 = vmatprep.subr.bf16.mxu0 0
      %1482 = vmatpush2.bf16.msra.mxu0 0
      %1483 = vmatprep.subr.bf16.mxu0 0
      %1484 = vmatpush2.bf16.msra.mxu0 0
      %1485 = vmatprep.subr.bf16.mxu0 0
      %1486 = vmatpush2.bf16.msra.mxu0 0
      %1487 = vmatprep.subr.bf16.mxu0 0
      %1488 = vmatpush2.bf16.msra.mxu0 0
      %1489 = vmatprep.subr.bf16.mxu0 0
      %1490 = vmatpush2.bf16.msra.mxu0 0
      %1491 = vmatprep.subr.bf16.mxu0 0
      %1492 = vmatpush2.bf16.msra.mxu0 0
      %1493 = vmatprep.subr.bf16.mxu0 0
      %1494 = vmatpush2.bf16.msra.mxu0 0
      %1495 = vmatprep.subr.bf16.mxu0 0
      %1496 = vmatpush2.bf16.msra.mxu0 0
      %1497 = vmatprep.mubr.bf16.mxu0 0
      %1498 = vmatmul.mubr.bf16.gmra.mxu0 %v537
      %v1499 = vpop.f32.mrf.mxu0
      %v1500 = vadd.f32 0.0, %v1499
      %v1501 = vpop.f32.mrf.mxu0
      %v1502 = vadd.f32 0.0, %v1501
      %v1503 = vpop.f32.mrf.mxu0
      %v1504 = vpop.f32.mrf.mxu0
      %1505 = vdwg.mxu0
      %v1506 = vadd.f32 %v445, %v1213
      %v1507 = vadd.f32 %v446, %v1215
      %v1508 = vadd.f32 %v447, %v1254
      %v1509 = vadd.f32 %v448, %v1256
      %v1510 = vadd.f32 %v449, %v1295
      %v1511 = vadd.f32 %v450, %v1297
      %v1512 = vadd.f32 %v451, %v1336
      %v1513 = vadd.f32 %v452, %v1338
      %v1514 = vadd.f32 %v453, %v1377
      %v1515 = vadd.f32 %v454, %v1379
      %v1516 = vadd.f32 %v455, %v1418
      %v1517 = vadd.f32 %v456, %v1420
      %v1518 = vadd.f32 %v457, %v1459
      %v1519 = vadd.f32 %v458, %v1461
      %v1520 = vadd.f32 %v459, %v1500
      %v1521 = vadd.f32 %v460, %v1502
      %v1522 = vpack.c.bf16 %v484, %v484
      %v1523 = vpack.c.bf16 %v485, %v485
      %v1524 = vpack.c.bf16 %v486, %v486
      %v1525 = vpack.c.bf16 %v487, %v487
      %v1526 = vpack.c.bf16 %v488, %v488
      %v1527 = vpack.c.bf16 %v489, %v489
      %v1528 = vpack.c.bf16 %v490, %v490
      %v1529 = vpack.c.bf16 %v491, %v491
      %v1530 = vpack.c.bf16 %v492, %v492
      %v1531 = vpack.c.bf16 %v493, %v493
      %v1532 = vpack.c.bf16 %v494, %v494
      %v1533 = vpack.c.bf16 %v495, %v495
      %v1534 = vpack.c.bf16 %v496, %v496
      %v1535 = vpack.c.bf16 %v497, %v497
      %v1536 = vpack.c.bf16 %v498, %v498
      %v1537 = vpack.c.bf16 %v499, %v499
      %v1539 = vlaneseq
      %v1540 = vshrl.u32 %v1539, 7
      %v1541 = vsub.s32 0, %v1540
      %v1542 = vrot.slane %v444, %v1541
      %v1800 = vunpack.c.l.b16 %v60
      %v1801 = vunpack.c.l.b16 %v61
      %v1802 = vunpack.c.l.b16 %v62
      %v1803 = vunpack.c.l.b16 %v63
      %v1804 = vunpack.c.l.b16 %v64
      %v1805 = vunpack.c.l.b16 %v65
      %v1806 = vunpack.c.l.b16 %v66
      %v1807 = vunpack.c.l.b16 %v67
      %v1808 = vunpack.c.l.b16 %v68
      %v1809 = vunpack.c.l.b16 %v69
      %v1810 = vunpack.c.l.b16 %v70
      %v1811 = vunpack.c.l.b16 %v71
      %v1812 = vunpack.c.l.b16 %v72
      %v1813 = vunpack.c.l.b16 %v73
      %v1814 = vunpack.c.l.b16 %v74
      %v1815 = vunpack.c.l.b16 %v75
      %v1816 = vunpack.c.l.b16 %v76
      %v1817 = vunpack.c.l.b16 %v77
      %v1818 = vunpack.c.l.b16 %v78
      %v1819 = vunpack.c.l.b16 %v79
      %v1820 = vunpack.c.l.b16 %v80
      %v1821 = vunpack.c.l.b16 %v81
      %v1822 = vunpack.c.l.b16 %v82
      %v1823 = vunpack.c.l.b16 %v83
      %v1824 = vunpack.c.l.b16 %v84
      %v1825 = vunpack.c.l.b16 %v85
      %v1826 = vunpack.c.l.b16 %v86
      %v1827 = vunpack.c.l.b16 %v87
      %v1828 = vunpack.c.l.b16 %v88
      %v1829 = vunpack.c.l.b16 %v89
      %v1830 = vunpack.c.l.b16 %v90
      %v1831 = vunpack.c.l.b16 %v91
      %v1832 = vunpack.c.l.b16 %v92
      %v1833 = vunpack.c.l.b16 %v93
      %v1834 = vunpack.c.l.b16 %v94
      %v1835 = vunpack.c.l.b16 %v95
      %v1836 = vunpack.c.l.b16 %v96
      %v1837 = vunpack.c.l.b16 %v97
      %v1838 = vunpack.c.l.b16 %v98
      %v1839 = vunpack.c.l.b16 %v99
      %v1840 = vunpack.c.l.b16 %v100
      %v1841 = vunpack.c.l.b16 %v101
      %v1842 = vunpack.c.l.b16 %v102
      %v1843 = vunpack.c.l.b16 %v103
      %v1844 = vunpack.c.l.b16 %v104
      %v1845 = vunpack.c.l.b16 %v105
      %v1846 = vunpack.c.l.b16 %v106
      %v1847 = vunpack.c.l.b16 %v107
      %v1848 = vunpack.c.l.b16 %v108
      %v1849 = vunpack.c.l.b16 %v109
      %v1850 = vunpack.c.l.b16 %v110
      %v1851 = vunpack.c.l.b16 %v111
      %v1852 = vunpack.c.l.b16 %v112
      %v1853 = vunpack.c.l.b16 %v113
      %v1854 = vunpack.c.l.b16 %v114
      %v1855 = vunpack.c.l.b16 %v115
      %v1856 = vunpack.c.l.b16 %v116
      %v1857 = vunpack.c.l.b16 %v117
      %v1858 = vunpack.c.l.b16 %v118
      %v1859 = vunpack.c.l.b16 %v119
      %v1860 = vunpack.c.l.b16 %v120
      %v1861 = vunpack.c.l.b16 %v121
      %v1862 = vunpack.c.l.b16 %v122
      %v1863 = vunpack.c.l.b16 %v123
      %v1864 = vunpack.c.l.b16 %v124
      %v1865 = vunpack.c.l.b16 %v125
      %v1866 = vunpack.c.l.b16 %v126
      %v1867 = vunpack.c.l.b16 %v127
      %v1868 = vunpack.c.l.b16 %v128
      %v1869 = vunpack.c.l.b16 %v129
      %v1870 = vunpack.c.l.b16 %v130
      %v1871 = vunpack.c.l.b16 %v131
      %v1872 = vunpack.c.l.b16 %v132
      %v1873 = vunpack.c.l.b16 %v133
      %v1874 = vunpack.c.l.b16 %v134
      %v1875 = vunpack.c.l.b16 %v135
      %v1876 = vunpack.c.l.b16 %v136
      %v1877 = vunpack.c.l.b16 %v137
      %v1878 = vunpack.c.l.b16 %v138
      %v1879 = vunpack.c.l.b16 %v139
      %v1880 = vunpack.c.l.b16 %v140
      %v1881 = vunpack.c.l.b16 %v141
      %v1882 = vunpack.c.l.b16 %v142
      %v1883 = vunpack.c.l.b16 %v143
      %v1884 = vunpack.c.l.b16 %v144
      %v1885 = vunpack.c.l.b16 %v145
      %v1886 = vunpack.c.l.b16 %v146
      %v1887 = vunpack.c.l.b16 %v147
      %v1888 = vunpack.c.l.b16 %v148
      %v1889 = vunpack.c.l.b16 %v149
      %v1890 = vunpack.c.l.b16 %v150
      %v1891 = vunpack.c.l.b16 %v151
      %v1892 = vunpack.c.l.b16 %v152
      %v1893 = vunpack.c.l.b16 %v153
      %v1894 = vunpack.c.l.b16 %v154
      %v1895 = vunpack.c.l.b16 %v155
      %v1896 = vunpack.c.l.b16 %v156
      %v1897 = vunpack.c.l.b16 %v157
      %v1898 = vunpack.c.l.b16 %v158
      %v1899 = vunpack.c.l.b16 %v159
      %v1900 = vunpack.c.l.b16 %v160
      %v1901 = vunpack.c.l.b16 %v161
      %v1902 = vunpack.c.l.b16 %v162
      %v1903 = vunpack.c.l.b16 %v163
      %v1904 = vunpack.c.l.b16 %v164
      %v1905 = vunpack.c.l.b16 %v165
      %v1906 = vunpack.c.l.b16 %v166
      %v1907 = vunpack.c.l.b16 %v167
      %v1908 = vunpack.c.l.b16 %v168
      %v1909 = vunpack.c.l.b16 %v169
      %v1910 = vunpack.c.l.b16 %v170
      %v1911 = vunpack.c.l.b16 %v171
      %v1912 = vunpack.c.l.b16 %v172
      %v1913 = vunpack.c.l.b16 %v173
      %v1914 = vunpack.c.l.b16 %v174
      %v1915 = vunpack.c.l.b16 %v175
      %v1916 = vunpack.c.l.b16 %v176
      %v1917 = vunpack.c.l.b16 %v177
      %v1918 = vunpack.c.l.b16 %v178
      %v1919 = vunpack.c.l.b16 %v179
      %v1920 = vunpack.c.l.b16 %v180
      %v1921 = vunpack.c.l.b16 %v181
      %v1922 = vunpack.c.l.b16 %v182
      %v1923 = vunpack.c.l.b16 %v183
      %v1924 = vunpack.c.l.b16 %v184
      %v1925 = vunpack.c.l.b16 %v185
      %v1926 = vunpack.c.l.b16 %v186
      %v1927 = vunpack.c.l.b16 %v187
      %v1928 = vunpack.c.l.b16 %v188
      %v1929 = vunpack.c.l.b16 %v189
      %v1930 = vunpack.c.l.b16 %v190
      %v1931 = vunpack.c.l.b16 %v191
      %v1932 = vunpack.c.l.b16 %v192
      %v1933 = vunpack.c.l.b16 %v193
      %v1934 = vunpack.c.l.b16 %v194
      %v1935 = vunpack.c.l.b16 %v195
      %v1936 = vunpack.c.l.b16 %v196
      %v1937 = vunpack.c.l.b16 %v197
      %v1938 = vunpack.c.l.b16 %v198
      %v1939 = vunpack.c.l.b16 %v199
      %v1940 = vunpack.c.l.b16 %v200
      %v1941 = vunpack.c.l.b16 %v201
      %v1942 = vunpack.c.l.b16 %v202
      %v1943 = vunpack.c.l.b16 %v203
      %v1944 = vunpack.c.l.b16 %v204
      %v1945 = vunpack.c.l.b16 %v205
      %v1946 = vunpack.c.l.b16 %v206
      %v1947 = vunpack.c.l.b16 %v207
      %v1948 = vunpack.c.l.b16 %v208
      %v1949 = vunpack.c.l.b16 %v209
      %v1950 = vunpack.c.l.b16 %v210
      %v1951 = vunpack.c.l.b16 %v211
      %v1952 = vunpack.c.l.b16 %v212
      %v1953 = vunpack.c.l.b16 %v213
      %v1954 = vunpack.c.l.b16 %v214
      %v1955 = vunpack.c.l.b16 %v215
      %v1956 = vunpack.c.l.b16 %v216
      %v1957 = vunpack.c.l.b16 %v217
      %v1958 = vunpack.c.l.b16 %v218
      %v1959 = vunpack.c.l.b16 %v219
      %v1960 = vunpack.c.l.b16 %v220
      %v1961 = vunpack.c.l.b16 %v221
      %v1962 = vunpack.c.l.b16 %v222
      %v1963 = vunpack.c.l.b16 %v223
      %v1964 = vunpack.c.l.b16 %v224
      %v1965 = vunpack.c.l.b16 %v225
      %v1966 = vunpack.c.l.b16 %v226
      %v1967 = vunpack.c.l.b16 %v227
      %v1968 = vunpack.c.l.b16 %v228
      %v1969 = vunpack.c.l.b16 %v229
      %v1970 = vunpack.c.l.b16 %v230
      %v1971 = vunpack.c.l.b16 %v231
      %v1972 = vunpack.c.l.b16 %v232
      %v1973 = vunpack.c.l.b16 %v233
      %v1974 = vunpack.c.l.b16 %v234
      %v1975 = vunpack.c.l.b16 %v235
      %v1976 = vunpack.c.l.b16 %v236
      %v1977 = vunpack.c.l.b16 %v237
      %v1978 = vunpack.c.l.b16 %v238
      %v1979 = vunpack.c.l.b16 %v239
      %v1980 = vunpack.c.l.b16 %v240
      %v1981 = vunpack.c.l.b16 %v241
      %v1982 = vunpack.c.l.b16 %v242
      %v1983 = vunpack.c.l.b16 %v243
      %v1984 = vunpack.c.l.b16 %v244
      %v1985 = vunpack.c.l.b16 %v245
      %v1986 = vunpack.c.l.b16 %v246
      %v1987 = vunpack.c.l.b16 %v247
      %v1988 = vunpack.c.l.b16 %v248
      %v1989 = vunpack.c.l.b16 %v249
      %v1990 = vunpack.c.l.b16 %v250
      %v1991 = vunpack.c.l.b16 %v251
      %v1992 = vunpack.c.l.b16 %v252
      %v1993 = vunpack.c.l.b16 %v253
      %v1994 = vunpack.c.l.b16 %v254
      %v1995 = vunpack.c.l.b16 %v255
      %v1996 = vunpack.c.l.b16 %v256
      %v1997 = vunpack.c.l.b16 %v257
      %v1998 = vunpack.c.l.b16 %v258
      %v1999 = vunpack.c.l.b16 %v259
      %v2000 = vunpack.c.l.b16 %v260
      %v2001 = vunpack.c.l.b16 %v261
      %v2002 = vunpack.c.l.b16 %v262
      %v2003 = vunpack.c.l.b16 %v263
      %v2004 = vunpack.c.l.b16 %v264
      %v2005 = vunpack.c.l.b16 %v265
      %v2006 = vunpack.c.l.b16 %v266
      %v2007 = vunpack.c.l.b16 %v267
      %v2008 = vunpack.c.l.b16 %v268
      %v2009 = vunpack.c.l.b16 %v269
      %v2010 = vunpack.c.l.b16 %v270
      %v2011 = vunpack.c.l.b16 %v271
      %v2012 = vunpack.c.l.b16 %v272
      %v2013 = vunpack.c.l.b16 %v273
      %v2014 = vunpack.c.l.b16 %v274
      %v2015 = vunpack.c.l.b16 %v275
      %v2016 = vunpack.c.l.b16 %v276
      %v2017 = vunpack.c.l.b16 %v277
      %v2018 = vunpack.c.l.b16 %v278
      %v2019 = vunpack.c.l.b16 %v279
      %v2020 = vunpack.c.l.b16 %v280
      %v2021 = vunpack.c.l.b16 %v281
      %v2022 = vunpack.c.l.b16 %v282
      %v2023 = vunpack.c.l.b16 %v283
      %v2024 = vunpack.c.l.b16 %v284
      %v2025 = vunpack.c.l.b16 %v285
      %v2026 = vunpack.c.l.b16 %v286
      %v2027 = vunpack.c.l.b16 %v287
      %v2028 = vunpack.c.l.b16 %v288
      %v2029 = vunpack.c.l.b16 %v289
      %v2030 = vunpack.c.l.b16 %v290
      %v2031 = vunpack.c.l.b16 %v291
      %v2032 = vunpack.c.l.b16 %v292
      %v2033 = vunpack.c.l.b16 %v293
      %v2034 = vunpack.c.l.b16 %v294
      %v2035 = vunpack.c.l.b16 %v295
      %v2036 = vunpack.c.l.b16 %v296
      %v2037 = vunpack.c.l.b16 %v297
      %v2038 = vunpack.c.l.b16 %v298
      %v2039 = vunpack.c.l.b16 %v299
      %v2040 = vunpack.c.l.b16 %v300
      %v2041 = vunpack.c.l.b16 %v301
      %v2042 = vunpack.c.l.b16 %v302
      %v2043 = vunpack.c.l.b16 %v303
      %v2044 = vunpack.c.l.b16 %v304
      %v2045 = vunpack.c.l.b16 %v305
      %v2046 = vunpack.c.l.b16 %v306
      %v2047 = vunpack.c.l.b16 %v307
      %v2048 = vunpack.c.l.b16 %v308
      %v2049 = vunpack.c.l.b16 %v309
      %v2050 = vunpack.c.l.b16 %v310
      %v2051 = vunpack.c.l.b16 %v311
      %v2052 = vunpack.c.l.b16 %v312
      %v2053 = vunpack.c.l.b16 %v313
      %v2054 = vunpack.c.l.b16 %v314
      %v2055 = vunpack.c.l.b16 %v315
      %v2056 = vpack.c.b16 %v1801, %v1800
      %v2057 = vpack.c.b16 %v1803, %v1802
      %v2058 = vpack.c.b16 %v1805, %v1804
      %v2059 = vpack.c.b16 %v1807, %v1806
      %v2060 = vpack.c.b16 %v1809, %v1808
      %v2061 = vpack.c.b16 %v1811, %v1810
      %v2062 = vpack.c.b16 %v1813, %v1812
      %v2063 = vpack.c.b16 %v1815, %v1814
      %v2064 = vpack.c.b16 %v1817, %v1816
      %v2065 = vpack.c.b16 %v1819, %v1818
      %v2066 = vpack.c.b16 %v1821, %v1820
      %v2067 = vpack.c.b16 %v1823, %v1822
      %v2068 = vpack.c.b16 %v1825, %v1824
      %v2069 = vpack.c.b16 %v1827, %v1826
      %v2070 = vpack.c.b16 %v1829, %v1828
      %v2071 = vpack.c.b16 %v1831, %v1830
      %v2072 = vpack.c.b16 %v1833, %v1832
      %v2073 = vpack.c.b16 %v1835, %v1834
      %v2074 = vpack.c.b16 %v1837, %v1836
      %v2075 = vpack.c.b16 %v1839, %v1838
      %v2076 = vpack.c.b16 %v1841, %v1840
      %v2077 = vpack.c.b16 %v1843, %v1842
      %v2078 = vpack.c.b16 %v1845, %v1844
      %v2079 = vpack.c.b16 %v1847, %v1846
      %v2080 = vpack.c.b16 %v1849, %v1848
      %v2081 = vpack.c.b16 %v1851, %v1850
      %v2082 = vpack.c.b16 %v1853, %v1852
      %v2083 = vpack.c.b16 %v1855, %v1854
      %v2084 = vpack.c.b16 %v1857, %v1856
      %v2085 = vpack.c.b16 %v1859, %v1858
      %v2086 = vpack.c.b16 %v1861, %v1860
      %v2087 = vpack.c.b16 %v1863, %v1862
      %v2088 = vpack.c.b16 %v1865, %v1864
      %v2089 = vpack.c.b16 %v1867, %v1866
      %v2090 = vpack.c.b16 %v1869, %v1868
      %v2091 = vpack.c.b16 %v1871, %v1870
      %v2092 = vpack.c.b16 %v1873, %v1872
      %v2093 = vpack.c.b16 %v1875, %v1874
      %v2094 = vpack.c.b16 %v1877, %v1876
      %v2095 = vpack.c.b16 %v1879, %v1878
      %v2096 = vpack.c.b16 %v1881, %v1880
      %v2097 = vpack.c.b16 %v1883, %v1882
      %v2098 = vpack.c.b16 %v1885, %v1884
      %v2099 = vpack.c.b16 %v1887, %v1886
      %v2100 = vpack.c.b16 %v1889, %v1888
      %v2101 = vpack.c.b16 %v1891, %v1890
      %v2102 = vpack.c.b16 %v1893, %v1892
      %v2103 = vpack.c.b16 %v1895, %v1894
      %v2104 = vpack.c.b16 %v1897, %v1896
      %v2105 = vpack.c.b16 %v1899, %v1898
      %v2106 = vpack.c.b16 %v1901, %v1900
      %v2107 = vpack.c.b16 %v1903, %v1902
      %v2108 = vpack.c.b16 %v1905, %v1904
      %v2109 = vpack.c.b16 %v1907, %v1906
      %v2110 = vpack.c.b16 %v1909, %v1908
      %v2111 = vpack.c.b16 %v1911, %v1910
      %v2112 = vpack.c.b16 %v1913, %v1912
      %v2113 = vpack.c.b16 %v1915, %v1914
      %v2114 = vpack.c.b16 %v1917, %v1916
      %v2115 = vpack.c.b16 %v1919, %v1918
      %v2116 = vpack.c.b16 %v1921, %v1920
      %v2117 = vpack.c.b16 %v1923, %v1922
      %v2118 = vpack.c.b16 %v1925, %v1924
      %v2119 = vpack.c.b16 %v1927, %v1926
      %v2120 = vpack.c.b16 %v1929, %v1928
      %v2121 = vpack.c.b16 %v1931, %v1930
      %v2122 = vpack.c.b16 %v1933, %v1932
      %v2123 = vpack.c.b16 %v1935, %v1934
      %v2124 = vpack.c.b16 %v1937, %v1936
      %v2125 = vpack.c.b16 %v1939, %v1938
      %v2126 = vpack.c.b16 %v1941, %v1940
      %v2127 = vpack.c.b16 %v1943, %v1942
      %v2128 = vpack.c.b16 %v1945, %v1944
      %v2129 = vpack.c.b16 %v1947, %v1946
      %v2130 = vpack.c.b16 %v1949, %v1948
      %v2131 = vpack.c.b16 %v1951, %v1950
      %v2132 = vpack.c.b16 %v1953, %v1952
      %v2133 = vpack.c.b16 %v1955, %v1954
      %v2134 = vpack.c.b16 %v1957, %v1956
      %v2135 = vpack.c.b16 %v1959, %v1958
      %v2136 = vpack.c.b16 %v1961, %v1960
      %v2137 = vpack.c.b16 %v1963, %v1962
      %v2138 = vpack.c.b16 %v1965, %v1964
      %v2139 = vpack.c.b16 %v1967, %v1966
      %v2140 = vpack.c.b16 %v1969, %v1968
      %v2141 = vpack.c.b16 %v1971, %v1970
      %v2142 = vpack.c.b16 %v1973, %v1972
      %v2143 = vpack.c.b16 %v1975, %v1974
      %v2144 = vpack.c.b16 %v1977, %v1976
      %v2145 = vpack.c.b16 %v1979, %v1978
      %v2146 = vpack.c.b16 %v1981, %v1980
      %v2147 = vpack.c.b16 %v1983, %v1982
      %v2148 = vpack.c.b16 %v1985, %v1984
      %v2149 = vpack.c.b16 %v1987, %v1986
      %v2150 = vpack.c.b16 %v1989, %v1988
      %v2151 = vpack.c.b16 %v1991, %v1990
      %v2152 = vpack.c.b16 %v1993, %v1992
      %v2153 = vpack.c.b16 %v1995, %v1994
      %v2154 = vpack.c.b16 %v1997, %v1996
      %v2155 = vpack.c.b16 %v1999, %v1998
      %v2156 = vpack.c.b16 %v2001, %v2000
      %v2157 = vpack.c.b16 %v2003, %v2002
      %v2158 = vpack.c.b16 %v2005, %v2004
      %v2159 = vpack.c.b16 %v2007, %v2006
      %v2160 = vpack.c.b16 %v2009, %v2008
      %v2161 = vpack.c.b16 %v2011, %v2010
      %v2162 = vpack.c.b16 %v2013, %v2012
      %v2163 = vpack.c.b16 %v2015, %v2014
      %v2164 = vpack.c.b16 %v2017, %v2016
      %v2165 = vpack.c.b16 %v2019, %v2018
      %v2166 = vpack.c.b16 %v2021, %v2020
      %v2167 = vpack.c.b16 %v2023, %v2022
      %v2168 = vpack.c.b16 %v2025, %v2024
      %v2169 = vpack.c.b16 %v2027, %v2026
      %v2170 = vpack.c.b16 %v2029, %v2028
      %v2171 = vpack.c.b16 %v2031, %v2030
      %v2172 = vpack.c.b16 %v2033, %v2032
      %v2173 = vpack.c.b16 %v2035, %v2034
      %v2174 = vpack.c.b16 %v2037, %v2036
      %v2175 = vpack.c.b16 %v2039, %v2038
      %v2176 = vpack.c.b16 %v2041, %v2040
      %v2177 = vpack.c.b16 %v2043, %v2042
      %v2178 = vpack.c.b16 %v2045, %v2044
      %v2179 = vpack.c.b16 %v2047, %v2046
      %v2180 = vpack.c.b16 %v2049, %v2048
      %v2181 = vpack.c.b16 %v2051, %v2050
      %v2182 = vpack.c.b16 %v2053, %v2052
      %v2183 = vpack.c.b16 %v2055, %v2054
      %2312 = vmatprep.subr.bf16.mxu0 0
      %2313 = vmatpush1.bf16.msra.mxu0 %v2063
      %2314 = vmatprep.subr.bf16.mxu0 0
      %2315 = vmatpush1.bf16.msra.mxu0 %v2062
      %2316 = vmatprep.subr.bf16.mxu0 0
      %2317 = vmatpush1.bf16.msra.mxu0 %v2061
      %2318 = vmatprep.subr.bf16.mxu0 0
      %2319 = vmatpush1.bf16.msra.mxu0 %v2060
      %2320 = vmatprep.subr.bf16.mxu0 0
      %2321 = vmatpush1.bf16.msra.mxu0 %v2059
      %2322 = vmatprep.subr.bf16.mxu0 0
      %2323 = vmatpush1.bf16.msra.mxu0 %v2058
      %2324 = vmatprep.subr.bf16.mxu0 0
      %2325 = vmatpush1.bf16.msra.mxu0 %v2057
      %2326 = vmatprep.subr.bf16.mxu0 0
      %2327 = vmatpush1.bf16.msra.mxu0 %v2056
      %2328 = vmatprep.subr.bf16.mxu0 0
      %2329 = vmatpush2.bf16.msra.mxu0 %v2071
      %2330 = vmatprep.subr.bf16.mxu0 0
      %2331 = vmatpush2.bf16.msra.mxu0 %v2070
      %2332 = vmatprep.subr.bf16.mxu0 0
      %2333 = vmatpush2.bf16.msra.mxu0 %v2069
      %2334 = vmatprep.subr.bf16.mxu0 0
      %2335 = vmatpush2.bf16.msra.mxu0 %v2068
      %2336 = vmatprep.subr.bf16.mxu0 0
      %2337 = vmatpush2.bf16.msra.mxu0 %v2067
      %2338 = vmatprep.subr.bf16.mxu0 0
      %2339 = vmatpush2.bf16.msra.mxu0 %v2066
      %2340 = vmatprep.subr.bf16.mxu0 0
      %2341 = vmatpush2.bf16.msra.mxu0 %v2065
      %2342 = vmatprep.subr.bf16.mxu0 0
      %2343 = vmatpush2.bf16.msra.mxu0 %v2064
      %2344 = vmatprep.mubr.bf16.mxu0 %v1523
      %2345 = vmatmul.mubr.bf16.gmra.mxu0 %v1522
      %v2346 = vpop.f32.mrf.mxu0
      %v2347 = vadd.f32 %v1542, %v2346
      %v2348 = vpop.f32.mrf.mxu0
      %v2349 = vpop.f32.mrf.mxu0
      %v2350 = vpop.f32.mrf.mxu0
      %2351 = vdwg.mxu0
      %2352 = vmatprep.subr.bf16.mxu0 0
      %2353 = vmatpush1.bf16.msra.mxu0 %v2079
      %2354 = vmatprep.subr.bf16.mxu0 0
      %2355 = vmatpush1.bf16.msra.mxu0 %v2078
      %2356 = vmatprep.subr.bf16.mxu0 0
      %2357 = vmatpush1.bf16.msra.mxu0 %v2077
      %2358 = vmatprep.subr.bf16.mxu0 0
      %2359 = vmatpush1.bf16.msra.mxu0 %v2076
      %2360 = vmatprep.subr.bf16.mxu0 0
      %2361 = vmatpush1.bf16.msra.mxu0 %v2075
      %2362 = vmatprep.subr.bf16.mxu0 0
      %2363 = vmatpush1.bf16.msra.mxu0 %v2074
      %2364 = vmatprep.subr.bf16.mxu0 0
      %2365 = vmatpush1.bf16.msra.mxu0 %v2073
      %2366 = vmatprep.subr.bf16.mxu0 0
      %2367 = vmatpush1.bf16.msra.mxu0 %v2072
      %2368 = vmatprep.subr.bf16.mxu0 0
      %2369 = vmatpush2.bf16.msra.mxu0 %v2087
      %2370 = vmatprep.subr.bf16.mxu0 0
      %2371 = vmatpush2.bf16.msra.mxu0 %v2086
      %2372 = vmatprep.subr.bf16.mxu0 0
      %2373 = vmatpush2.bf16.msra.mxu0 %v2085
      %2374 = vmatprep.subr.bf16.mxu0 0
      %2375 = vmatpush2.bf16.msra.mxu0 %v2084
      %2376 = vmatprep.subr.bf16.mxu0 0
      %2377 = vmatpush2.bf16.msra.mxu0 %v2083
      %2378 = vmatprep.subr.bf16.mxu0 0
      %2379 = vmatpush2.bf16.msra.mxu0 %v2082
      %2380 = vmatprep.subr.bf16.mxu0 0
      %2381 = vmatpush2.bf16.msra.mxu0 %v2081
      %2382 = vmatprep.subr.bf16.mxu0 0
      %2383 = vmatpush2.bf16.msra.mxu0 %v2080
      %2384 = vmatprep.mubr.bf16.mxu0 %v1525
      %2385 = vmatmul.mubr.bf16.gmra.mxu0 %v1524
      %v2386 = vpop.f32.mrf.mxu0
      %v2387 = vadd.f32 %v2347, %v2386
      %v2388 = vpop.f32.mrf.mxu0
      %v2389 = vpop.f32.mrf.mxu0
      %v2390 = vpop.f32.mrf.mxu0
      %2391 = vdwg.mxu0
      %2392 = vmatprep.subr.bf16.mxu0 0
      %2393 = vmatpush1.bf16.msra.mxu0 %v2095
      %2394 = vmatprep.subr.bf16.mxu0 0
      %2395 = vmatpush1.bf16.msra.mxu0 %v2094
      %2396 = vmatprep.subr.bf16.mxu0 0
      %2397 = vmatpush1.bf16.msra.mxu0 %v2093
      %2398 = vmatprep.subr.bf16.mxu0 0
      %2399 = vmatpush1.bf16.msra.mxu0 %v2092
      %2400 = vmatprep.subr.bf16.mxu0 0
      %2401 = vmatpush1.bf16.msra.mxu0 %v2091
      %2402 = vmatprep.subr.bf16.mxu0 0
      %2403 = vmatpush1.bf16.msra.mxu0 %v2090
      %2404 = vmatprep.subr.bf16.mxu0 0
      %2405 = vmatpush1.bf16.msra.mxu0 %v2089
      %2406 = vmatprep.subr.bf16.mxu0 0
      %2407 = vmatpush1.bf16.msra.mxu0 %v2088
      %2408 = vmatprep.subr.bf16.mxu0 0
      %2409 = vmatpush2.bf16.msra.mxu0 %v2103
      %2410 = vmatprep.subr.bf16.mxu0 0
      %2411 = vmatpush2.bf16.msra.mxu0 %v2102
      %2412 = vmatprep.subr.bf16.mxu0 0
      %2413 = vmatpush2.bf16.msra.mxu0 %v2101
      %2414 = vmatprep.subr.bf16.mxu0 0
      %2415 = vmatpush2.bf16.msra.mxu0 %v2100
      %2416 = vmatprep.subr.bf16.mxu0 0
      %2417 = vmatpush2.bf16.msra.mxu0 %v2099
      %2418 = vmatprep.subr.bf16.mxu0 0
      %2419 = vmatpush2.bf16.msra.mxu0 %v2098
      %2420 = vmatprep.subr.bf16.mxu0 0
      %2421 = vmatpush2.bf16.msra.mxu0 %v2097
      %2422 = vmatprep.subr.bf16.mxu0 0
      %2423 = vmatpush2.bf16.msra.mxu0 %v2096
      %2424 = vmatprep.mubr.bf16.mxu0 %v1527
      %2425 = vmatmul.mubr.bf16.gmra.mxu0 %v1526
      %v2426 = vpop.f32.mrf.mxu0
      %v2427 = vadd.f32 %v2387, %v2426
      %v2428 = vpop.f32.mrf.mxu0
      %v2429 = vpop.f32.mrf.mxu0
      %v2430 = vpop.f32.mrf.mxu0
      %2431 = vdwg.mxu0
      %2432 = vmatprep.subr.bf16.mxu0 0
      %2433 = vmatpush1.bf16.msra.mxu0 %v2111
      %2434 = vmatprep.subr.bf16.mxu0 0
      %2435 = vmatpush1.bf16.msra.mxu0 %v2110
      %2436 = vmatprep.subr.bf16.mxu0 0
      %2437 = vmatpush1.bf16.msra.mxu0 %v2109
      %2438 = vmatprep.subr.bf16.mxu0 0
      %2439 = vmatpush1.bf16.msra.mxu0 %v2108
      %2440 = vmatprep.subr.bf16.mxu0 0
      %2441 = vmatpush1.bf16.msra.mxu0 %v2107
      %2442 = vmatprep.subr.bf16.mxu0 0
      %2443 = vmatpush1.bf16.msra.mxu0 %v2106
      %2444 = vmatprep.subr.bf16.mxu0 0
      %2445 = vmatpush1.bf16.msra.mxu0 %v2105
      %2446 = vmatprep.subr.bf16.mxu0 0
      %2447 = vmatpush1.bf16.msra.mxu0 %v2104
      %2448 = vmatprep.subr.bf16.mxu0 0
      %2449 = vmatpush2.bf16.msra.mxu0 %v2119
      %2450 = vmatprep.subr.bf16.mxu0 0
      %2451 = vmatpush2.bf16.msra.mxu0 %v2118
      %2452 = vmatprep.subr.bf16.mxu0 0
      %2453 = vmatpush2.bf16.msra.mxu0 %v2117
      %2454 = vmatprep.subr.bf16.mxu0 0
      %2455 = vmatpush2.bf16.msra.mxu0 %v2116
      %2456 = vmatprep.subr.bf16.mxu0 0
      %2457 = vmatpush2.bf16.msra.mxu0 %v2115
      %2458 = vmatprep.subr.bf16.mxu0 0
      %2459 = vmatpush2.bf16.msra.mxu0 %v2114
      %2460 = vmatprep.subr.bf16.mxu0 0
      %2461 = vmatpush2.bf16.msra.mxu0 %v2113
      %2462 = vmatprep.subr.bf16.mxu0 0
      %2463 = vmatpush2.bf16.msra.mxu0 %v2112
      %2464 = vmatprep.mubr.bf16.mxu0 %v1529
      %2465 = vmatmul.mubr.bf16.gmra.mxu0 %v1528
      %v2466 = vpop.f32.mrf.mxu0
      %v2467 = vadd.f32 %v2427, %v2466
      %v2468 = vpop.f32.mrf.mxu0
      %v2469 = vpop.f32.mrf.mxu0
      %v2470 = vpop.f32.mrf.mxu0
      %2471 = vdwg.mxu0
      %2472 = vmatprep.subr.bf16.mxu0 0
      %2473 = vmatpush1.bf16.msra.mxu0 %v2127
      %2474 = vmatprep.subr.bf16.mxu0 0
      %2475 = vmatpush1.bf16.msra.mxu0 %v2126
      %2476 = vmatprep.subr.bf16.mxu0 0
      %2477 = vmatpush1.bf16.msra.mxu0 %v2125
      %2478 = vmatprep.subr.bf16.mxu0 0
      %2479 = vmatpush1.bf16.msra.mxu0 %v2124
      %2480 = vmatprep.subr.bf16.mxu0 0
      %2481 = vmatpush1.bf16.msra.mxu0 %v2123
      %2482 = vmatprep.subr.bf16.mxu0 0
      %2483 = vmatpush1.bf16.msra.mxu0 %v2122
      %2484 = vmatprep.subr.bf16.mxu0 0
      %2485 = vmatpush1.bf16.msra.mxu0 %v2121
      %2486 = vmatprep.subr.bf16.mxu0 0
      %2487 = vmatpush1.bf16.msra.mxu0 %v2120
      %2488 = vmatprep.subr.bf16.mxu0 0
      %2489 = vmatpush2.bf16.msra.mxu0 %v2135
      %2490 = vmatprep.subr.bf16.mxu0 0
      %2491 = vmatpush2.bf16.msra.mxu0 %v2134
      %2492 = vmatprep.subr.bf16.mxu0 0
      %2493 = vmatpush2.bf16.msra.mxu0 %v2133
      %2494 = vmatprep.subr.bf16.mxu0 0
      %2495 = vmatpush2.bf16.msra.mxu0 %v2132
      %2496 = vmatprep.subr.bf16.mxu0 0
      %2497 = vmatpush2.bf16.msra.mxu0 %v2131
      %2498 = vmatprep.subr.bf16.mxu0 0
      %2499 = vmatpush2.bf16.msra.mxu0 %v2130
      %2500 = vmatprep.subr.bf16.mxu0 0
      %2501 = vmatpush2.bf16.msra.mxu0 %v2129
      %2502 = vmatprep.subr.bf16.mxu0 0
      %2503 = vmatpush2.bf16.msra.mxu0 %v2128
      %2504 = vmatprep.mubr.bf16.mxu0 %v1531
      %2505 = vmatmul.mubr.bf16.gmra.mxu0 %v1530
      %v2506 = vpop.f32.mrf.mxu0
      %v2507 = vadd.f32 %v2467, %v2506
      %v2508 = vpop.f32.mrf.mxu0
      %v2509 = vpop.f32.mrf.mxu0
      %v2510 = vpop.f32.mrf.mxu0
      %2511 = vdwg.mxu0
      %2512 = vmatprep.subr.bf16.mxu0 0
      %2513 = vmatpush1.bf16.msra.mxu0 %v2143
      %2514 = vmatprep.subr.bf16.mxu0 0
      %2515 = vmatpush1.bf16.msra.mxu0 %v2142
      %2516 = vmatprep.subr.bf16.mxu0 0
      %2517 = vmatpush1.bf16.msra.mxu0 %v2141
      %2518 = vmatprep.subr.bf16.mxu0 0
      %2519 = vmatpush1.bf16.msra.mxu0 %v2140
      %2520 = vmatprep.subr.bf16.mxu0 0
      %2521 = vmatpush1.bf16.msra.mxu0 %v2139
      %2522 = vmatprep.subr.bf16.mxu0 0
      %2523 = vmatpush1.bf16.msra.mxu0 %v2138
      %2524 = vmatprep.subr.bf16.mxu0 0
      %2525 = vmatpush1.bf16.msra.mxu0 %v2137
      %2526 = vmatprep.subr.bf16.mxu0 0
      %2527 = vmatpush1.bf16.msra.mxu0 %v2136
      %2528 = vmatprep.subr.bf16.mxu0 0
      %2529 = vmatpush2.bf16.msra.mxu0 %v2151
      %2530 = vmatprep.subr.bf16.mxu0 0
      %2531 = vmatpush2.bf16.msra.mxu0 %v2150
      %2532 = vmatprep.subr.bf16.mxu0 0
      %2533 = vmatpush2.bf16.msra.mxu0 %v2149
      %2534 = vmatprep.subr.bf16.mxu0 0
      %2535 = vmatpush2.bf16.msra.mxu0 %v2148
      %2536 = vmatprep.subr.bf16.mxu0 0
      %2537 = vmatpush2.bf16.msra.mxu0 %v2147
      %2538 = vmatprep.subr.bf16.mxu0 0
      %2539 = vmatpush2.bf16.msra.mxu0 %v2146
      %2540 = vmatprep.subr.bf16.mxu0 0
      %2541 = vmatpush2.bf16.msra.mxu0 %v2145
      %2542 = vmatprep.subr.bf16.mxu0 0
      %2543 = vmatpush2.bf16.msra.mxu0 %v2144
      %2544 = vmatprep.mubr.bf16.mxu0 %v1533
      %2545 = vmatmul.mubr.bf16.gmra.mxu0 %v1532
      %v2546 = vpop.f32.mrf.mxu0
      %v2547 = vadd.f32 %v2507, %v2546
      %v2548 = vpop.f32.mrf.mxu0
      %v2549 = vpop.f32.mrf.mxu0
      %v2550 = vpop.f32.mrf.mxu0
      %2551 = vdwg.mxu0
      %2552 = vmatprep.subr.bf16.mxu0 0
      %2553 = vmatpush1.bf16.msra.mxu0 %v2159
      %2554 = vmatprep.subr.bf16.mxu0 0
      %2555 = vmatpush1.bf16.msra.mxu0 %v2158
      %2556 = vmatprep.subr.bf16.mxu0 0
      %2557 = vmatpush1.bf16.msra.mxu0 %v2157
      %2558 = vmatprep.subr.bf16.mxu0 0
      %2559 = vmatpush1.bf16.msra.mxu0 %v2156
      %2560 = vmatprep.subr.bf16.mxu0 0
      %2561 = vmatpush1.bf16.msra.mxu0 %v2155
      %2562 = vmatprep.subr.bf16.mxu0 0
      %2563 = vmatpush1.bf16.msra.mxu0 %v2154
      %2564 = vmatprep.subr.bf16.mxu0 0
      %2565 = vmatpush1.bf16.msra.mxu0 %v2153
      %2566 = vmatprep.subr.bf16.mxu0 0
      %2567 = vmatpush1.bf16.msra.mxu0 %v2152
      %2568 = vmatprep.subr.bf16.mxu0 0
      %2569 = vmatpush2.bf16.msra.mxu0 %v2167
      %2570 = vmatprep.subr.bf16.mxu0 0
      %2571 = vmatpush2.bf16.msra.mxu0 %v2166
      %2572 = vmatprep.subr.bf16.mxu0 0
      %2573 = vmatpush2.bf16.msra.mxu0 %v2165
      %2574 = vmatprep.subr.bf16.mxu0 0
      %2575 = vmatpush2.bf16.msra.mxu0 %v2164
      %2576 = vmatprep.subr.bf16.mxu0 0
      %2577 = vmatpush2.bf16.msra.mxu0 %v2163
      %2578 = vmatprep.subr.bf16.mxu0 0
      %2579 = vmatpush2.bf16.msra.mxu0 %v2162
      %2580 = vmatprep.subr.bf16.mxu0 0
      %2581 = vmatpush2.bf16.msra.mxu0 %v2161
      %2582 = vmatprep.subr.bf16.mxu0 0
      %2583 = vmatpush2.bf16.msra.mxu0 %v2160
      %2584 = vmatprep.mubr.bf16.mxu0 %v1535
      %2585 = vmatmul.mubr.bf16.gmra.mxu0 %v1534
      %v2586 = vpop.f32.mrf.mxu0
      %v2587 = vadd.f32 %v2547, %v2586
      %v2588 = vpop.f32.mrf.mxu0
      %v2589 = vpop.f32.mrf.mxu0
      %v2590 = vpop.f32.mrf.mxu0
      %2591 = vdwg.mxu0
      %2592 = vmatprep.subr.bf16.mxu0 0
      %2593 = vmatpush1.bf16.msra.mxu0 %v2175
      %2594 = vmatprep.subr.bf16.mxu0 0
      %2595 = vmatpush1.bf16.msra.mxu0 %v2174
      %2596 = vmatprep.subr.bf16.mxu0 0
      %2597 = vmatpush1.bf16.msra.mxu0 %v2173
      %2598 = vmatprep.subr.bf16.mxu0 0
      %2599 = vmatpush1.bf16.msra.mxu0 %v2172
      %2600 = vmatprep.subr.bf16.mxu0 0
      %2601 = vmatpush1.bf16.msra.mxu0 %v2171
      %2602 = vmatprep.subr.bf16.mxu0 0
      %2603 = vmatpush1.bf16.msra.mxu0 %v2170
      %2604 = vmatprep.subr.bf16.mxu0 0
      %2605 = vmatpush1.bf16.msra.mxu0 %v2169
      %2606 = vmatprep.subr.bf16.mxu0 0
      %2607 = vmatpush1.bf16.msra.mxu0 %v2168
      %2608 = vmatprep.subr.bf16.mxu0 0
      %2609 = vmatpush2.bf16.msra.mxu0 %v2183
      %2610 = vmatprep.subr.bf16.mxu0 0
      %2611 = vmatpush2.bf16.msra.mxu0 %v2182
      %2612 = vmatprep.subr.bf16.mxu0 0
      %2613 = vmatpush2.bf16.msra.mxu0 %v2181
      %2614 = vmatprep.subr.bf16.mxu0 0
      %2615 = vmatpush2.bf16.msra.mxu0 %v2180
      %2616 = vmatprep.subr.bf16.mxu0 0
      %2617 = vmatpush2.bf16.msra.mxu0 %v2179
      %2618 = vmatprep.subr.bf16.mxu0 0
      %2619 = vmatpush2.bf16.msra.mxu0 %v2178
      %2620 = vmatprep.subr.bf16.mxu0 0
      %2621 = vmatpush2.bf16.msra.mxu0 %v2177
      %2622 = vmatprep.subr.bf16.mxu0 0
      %2623 = vmatpush2.bf16.msra.mxu0 %v2176
      %2624 = vmatprep.mubr.bf16.mxu0 %v1537
      %2625 = vmatmul.mubr.bf16.gmra.mxu0 %v1536
      %v2626 = vpop.f32.mrf.mxu0
      %v2627 = vadd.f32 %v2587, %v2626
      %v2628 = vpop.f32.mrf.mxu0
      %v2629 = vpop.f32.mrf.mxu0
      %v2630 = vpop.f32.mrf.mxu0
      %2631 = vdwg.mxu0
      %v2632 = vsub.f32 0.0, %v1506
      %v2633 = vsub.f32 0.0, %v1507
      %v2634 = vsub.f32 0.0, %v1508
      %v2635 = vsub.f32 0.0, %v1509
      %v2636 = vsub.f32 0.0, %v1510
      %v2637 = vsub.f32 0.0, %v1511
      %v2638 = vsub.f32 0.0, %v1512
      %v2639 = vsub.f32 0.0, %v1513
      %v2640 = vsub.f32 0.0, %v1514
      %v2641 = vsub.f32 0.0, %v1515
      %v2642 = vsub.f32 0.0, %v1516
      %v2643 = vsub.f32 0.0, %v1517
      %v2644 = vsub.f32 0.0, %v1518
      %v2645 = vsub.f32 0.0, %v1519
      %v2646 = vsub.f32 0.0, %v1520
      %v2647 = vsub.f32 0.0, %v1521
      %v2648 = vmul.f32 %v484, 0.5
      %v2649 = vmul.f32 %v485, 0.5
      %v2650 = vmul.f32 %v486, 0.5
      %v2651 = vmul.f32 %v487, 0.5
      %v2652 = vmul.f32 %v488, 0.5
      %v2653 = vmul.f32 %v489, 0.5
      %v2654 = vmul.f32 %v490, 0.5
      %v2655 = vmul.f32 %v491, 0.5
      %v2656 = vmul.f32 %v492, 0.5
      %v2657 = vmul.f32 %v493, 0.5
      %v2658 = vmul.f32 %v494, 0.5
      %v2659 = vmul.f32 %v495, 0.5
      %v2660 = vmul.f32 %v496, 0.5
      %v2661 = vmul.f32 %v497, 0.5
      %v2662 = vmul.f32 %v498, 0.5
      %v2663 = vmul.f32 %v499, 0.5
      %v2664 = vadd.f32 %v2632, %v2648
      %v2665 = vadd.f32 %v2633, %v2649
      %v2666 = vadd.f32 %v2634, %v2650
      %v2667 = vadd.f32 %v2635, %v2651
      %v2668 = vadd.f32 %v2636, %v2652
      %v2669 = vadd.f32 %v2637, %v2653
      %v2670 = vadd.f32 %v2638, %v2654
      %v2671 = vadd.f32 %v2639, %v2655
      %v2672 = vadd.f32 %v2640, %v2656
      %v2673 = vadd.f32 %v2641, %v2657
      %v2674 = vadd.f32 %v2642, %v2658
      %v2675 = vadd.f32 %v2643, %v2659
      %v2676 = vadd.f32 %v2644, %v2660
      %v2677 = vadd.f32 %v2645, %v2661
      %v2678 = vadd.f32 %v2646, %v2662
      %v2679 = vadd.f32 %v2647, %v2663
      %v2680 = vmul.f32 %v501, 0.9
      %v2681 = vmul.f32 %v502, 0.9
      %v2682 = vmul.f32 %v503, 0.9
      %v2683 = vmul.f32 %v504, 0.9
      %v2684 = vmul.f32 %v505, 0.9
      %v2685 = vmul.f32 %v506, 0.9
      %v2686 = vmul.f32 %v507, 0.9
      %v2687 = vmul.f32 %v508, 0.9
      %v2688 = vmul.f32 %v509, 0.9
      %v2689 = vmul.f32 %v510, 0.9
      %v2690 = vmul.f32 %v511, 0.9
      %v2691 = vmul.f32 %v512, 0.9
      %v2692 = vmul.f32 %v513, 0.9
      %v2693 = vmul.f32 %v514, 0.9
      %v2694 = vmul.f32 %v515, 0.9
      %v2695 = vmul.f32 %v516, 0.9
      %v2696 = vmul.f32 %v2664, 0.1
      %v2697 = vmul.f32 %v2665, 0.1
      %v2698 = vmul.f32 %v2666, 0.1
      %v2699 = vmul.f32 %v2667, 0.1
      %v2700 = vmul.f32 %v2668, 0.1
      %v2701 = vmul.f32 %v2669, 0.1
      %v2702 = vmul.f32 %v2670, 0.1
      %v2703 = vmul.f32 %v2671, 0.1
      %v2704 = vmul.f32 %v2672, 0.1
      %v2705 = vmul.f32 %v2673, 0.1
      %v2706 = vmul.f32 %v2674, 0.1
      %v2707 = vmul.f32 %v2675, 0.1
      %v2708 = vmul.f32 %v2676, 0.1
      %v2709 = vmul.f32 %v2677, 0.1
      %v2710 = vmul.f32 %v2678, 0.1
      %v2711 = vmul.f32 %v2679, 0.1
      %v2712 = vadd.f32 %v2680, %v2696
      %v2713 = vadd.f32 %v2681, %v2697
      %v2714 = vadd.f32 %v2682, %v2698
      %v2715 = vadd.f32 %v2683, %v2699
      %v2716 = vadd.f32 %v2684, %v2700
      %v2717 = vadd.f32 %v2685, %v2701
      %v2718 = vadd.f32 %v2686, %v2702
      %v2719 = vadd.f32 %v2687, %v2703
      %v2720 = vadd.f32 %v2688, %v2704
      %v2721 = vadd.f32 %v2689, %v2705
      %v2722 = vadd.f32 %v2690, %v2706
      %v2723 = vadd.f32 %v2691, %v2707
      %v2724 = vadd.f32 %v2692, %v2708
      %v2725 = vadd.f32 %v2693, %v2709
      %v2726 = vadd.f32 %v2694, %v2710
      %v2727 = vadd.f32 %v2695, %v2711
      %v2728 = vmul.f32 %v518, 0.999
      %v2729 = vmul.f32 %v519, 0.999
      %v2730 = vmul.f32 %v520, 0.999
      %v2731 = vmul.f32 %v521, 0.999
      %v2732 = vmul.f32 %v522, 0.999
      %v2733 = vmul.f32 %v523, 0.999
      %v2734 = vmul.f32 %v524, 0.999
      %v2735 = vmul.f32 %v525, 0.999
      %v2736 = vmul.f32 %v526, 0.999
      %v2737 = vmul.f32 %v527, 0.999
      %v2738 = vmul.f32 %v528, 0.999
      %v2739 = vmul.f32 %v529, 0.999
      %v2740 = vmul.f32 %v530, 0.999
      %v2741 = vmul.f32 %v531, 0.999
      %v2742 = vmul.f32 %v532, 0.999
      %v2743 = vmul.f32 %v533, 0.999
      %v2744 = vmul.f32 %v2664, %v2664
      %v2745 = vmul.f32 %v2665, %v2665
      %v2746 = vmul.f32 %v2666, %v2666
      %v2747 = vmul.f32 %v2667, %v2667
      %v2748 = vmul.f32 %v2668, %v2668
      %v2749 = vmul.f32 %v2669, %v2669
      %v2750 = vmul.f32 %v2670, %v2670
      %v2751 = vmul.f32 %v2671, %v2671
      %v2752 = vmul.f32 %v2672, %v2672
      %v2753 = vmul.f32 %v2673, %v2673
      %v2754 = vmul.f32 %v2674, %v2674
      %v2755 = vmul.f32 %v2675, %v2675
      %v2756 = vmul.f32 %v2676, %v2676
      %v2757 = vmul.f32 %v2677, %v2677
      %v2758 = vmul.f32 %v2678, %v2678
      %v2759 = vmul.f32 %v2679, %v2679
      %v2760 = vmul.f32 %v2744, 0.001
      %v2761 = vmul.f32 %v2745, 0.001
      %v2762 = vmul.f32 %v2746, 0.001
      %v2763 = vmul.f32 %v2747, 0.001
      %v2764 = vmul.f32 %v2748, 0.001
      %v2765 = vmul.f32 %v2749, 0.001
      %v2766 = vmul.f32 %v2750, 0.001
      %v2767 = vmul.f32 %v2751, 0.001
      %v2768 = vmul.f32 %v2752, 0.001
      %v2769 = vmul.f32 %v2753, 0.001
      %v2770 = vmul.f32 %v2754, 0.001
      %v2771 = vmul.f32 %v2755, 0.001
      %v2772 = vmul.f32 %v2756, 0.001
      %v2773 = vmul.f32 %v2757, 0.001
      %v2774 = vmul.f32 %v2758, 0.001
      %v2775 = vmul.f32 %v2759, 0.001
      %v2776 = vadd.f32 %v2728, %v2760
      %v2777 = vadd.f32 %v2729, %v2761
      %v2778 = vadd.f32 %v2730, %v2762
      %v2779 = vadd.f32 %v2731, %v2763
      %v2780 = vadd.f32 %v2732, %v2764
      %v2781 = vadd.f32 %v2733, %v2765
      %v2782 = vadd.f32 %v2734, %v2766
      %v2783 = vadd.f32 %v2735, %v2767
      %v2784 = vadd.f32 %v2736, %v2768
      %v2785 = vadd.f32 %v2737, %v2769
      %v2786 = vadd.f32 %v2738, %v2770
      %v2787 = vadd.f32 %v2739, %v2771
      %v2788 = vadd.f32 %v2740, %v2772
      %v2789 = vadd.f32 %v2741, %v2773
      %v2790 = vadd.f32 %v2742, %v2774
      %v2791 = vadd.f32 %v2743, %v2775
      %v2792 = vrsqrt.pop %v2776
      %v2793 = vmul.f32 %v2776, %v2792
      %vm2794 = vcmp.eq.f32.partialorder %v2776, inf
      %v2795 = vsel %vm2794, %v2776, %v2793
      %vm2796 = vcmp.eq.f32.partialorder %v2776, 0.0
      %v2797 = vand.u32 %v2776, 2147483648
      %v2798 = vsel %vm2796, %v2797, %v2795
      %v2799 = vrsqrt.pop %v2777
      %v2800 = vmul.f32 %v2777, %v2799
      %vm2801 = vcmp.eq.f32.partialorder %v2777, inf
      %v2802 = vsel %vm2801, %v2777, %v2800
      %vm2803 = vcmp.eq.f32.partialorder %v2777, 0.0
      %v2804 = vand.u32 %v2777, 2147483648
      %v2805 = vsel %vm2803, %v2804, %v2802
      %v2806 = vrsqrt.pop %v2778
      %v2807 = vmul.f32 %v2778, %v2806
      %vm2808 = vcmp.eq.f32.partialorder %v2778, inf
      %v2809 = vsel %vm2808, %v2778, %v2807
      %vm2810 = vcmp.eq.f32.partialorder %v2778, 0.0
      %v2811 = vand.u32 %v2778, 2147483648
      %v2812 = vsel %vm2810, %v2811, %v2809
      %v2813 = vrsqrt.pop %v2779
      %v2814 = vmul.f32 %v2779, %v2813
      %vm2815 = vcmp.eq.f32.partialorder %v2779, inf
      %v2816 = vsel %vm2815, %v2779, %v2814
      %vm2817 = vcmp.eq.f32.partialorder %v2779, 0.0
      %v2818 = vand.u32 %v2779, 2147483648
      %v2819 = vsel %vm2817, %v2818, %v2816
      %v2820 = vrsqrt.pop %v2780
      %v2821 = vmul.f32 %v2780, %v2820
      %vm2822 = vcmp.eq.f32.partialorder %v2780, inf
      %v2823 = vsel %vm2822, %v2780, %v2821
      %vm2824 = vcmp.eq.f32.partialorder %v2780, 0.0
      %v2825 = vand.u32 %v2780, 2147483648
      %v2826 = vsel %vm2824, %v2825, %v2823
      %v2827 = vrsqrt.pop %v2781
      %v2828 = vmul.f32 %v2781, %v2827
      %vm2829 = vcmp.eq.f32.partialorder %v2781, inf
      %v2830 = vsel %vm2829, %v2781, %v2828
      %vm2831 = vcmp.eq.f32.partialorder %v2781, 0.0
      %v2832 = vand.u32 %v2781, 2147483648
      %v2833 = vsel %vm2831, %v2832, %v2830
      %v2834 = vrsqrt.pop %v2782
      %v2835 = vmul.f32 %v2782, %v2834
      %vm2836 = vcmp.eq.f32.partialorder %v2782, inf
      %v2837 = vsel %vm2836, %v2782, %v2835
      %vm2838 = vcmp.eq.f32.partialorder %v2782, 0.0
      %v2839 = vand.u32 %v2782, 2147483648
      %v2840 = vsel %vm2838, %v2839, %v2837
      %v2841 = vrsqrt.pop %v2783
      %v2842 = vmul.f32 %v2783, %v2841
      %vm2843 = vcmp.eq.f32.partialorder %v2783, inf
      %v2844 = vsel %vm2843, %v2783, %v2842
      %vm2845 = vcmp.eq.f32.partialorder %v2783, 0.0
      %v2846 = vand.u32 %v2783, 2147483648
      %v2847 = vsel %vm2845, %v2846, %v2844
      %v2848 = vrsqrt.pop %v2784
      %v2849 = vmul.f32 %v2784, %v2848
      %vm2850 = vcmp.eq.f32.partialorder %v2784, inf
      %v2851 = vsel %vm2850, %v2784, %v2849
      %vm2852 = vcmp.eq.f32.partialorder %v2784, 0.0
      %v2853 = vand.u32 %v2784, 2147483648
      %v2854 = vsel %vm2852, %v2853, %v2851
      %v2855 = vrsqrt.pop %v2785
      %v2856 = vmul.f32 %v2785, %v2855
      %vm2857 = vcmp.eq.f32.partialorder %v2785, inf
      %v2858 = vsel %vm2857, %v2785, %v2856
      %vm2859 = vcmp.eq.f32.partialorder %v2785, 0.0
      %v2860 = vand.u32 %v2785, 2147483648
      %v2861 = vsel %vm2859, %v2860, %v2858
      %v2862 = vrsqrt.pop %v2786
      %v2863 = vmul.f32 %v2786, %v2862
      %vm2864 = vcmp.eq.f32.partialorder %v2786, inf
      %v2865 = vsel %vm2864, %v2786, %v2863
      %vm2866 = vcmp.eq.f32.partialorder %v2786, 0.0
      %v2867 = vand.u32 %v2786, 2147483648
      %v2868 = vsel %vm2866, %v2867, %v2865
      %v2869 = vrsqrt.pop %v2787
      %v2870 = vmul.f32 %v2787, %v2869
      %vm2871 = vcmp.eq.f32.partialorder %v2787, inf
      %v2872 = vsel %vm2871, %v2787, %v2870
      %vm2873 = vcmp.eq.f32.partialorder %v2787, 0.0
      %v2874 = vand.u32 %v2787, 2147483648
      %v2875 = vsel %vm2873, %v2874, %v2872
      %v2876 = vrsqrt.pop %v2788
      %v2877 = vmul.f32 %v2788, %v2876
      %vm2878 = vcmp.eq.f32.partialorder %v2788, inf
      %v2879 = vsel %vm2878, %v2788, %v2877
      %vm2880 = vcmp.eq.f32.partialorder %v2788, 0.0
      %v2881 = vand.u32 %v2788, 2147483648
      %v2882 = vsel %vm2880, %v2881, %v2879
      %v2883 = vrsqrt.pop %v2789
      %v2884 = vmul.f32 %v2789, %v2883
      %vm2885 = vcmp.eq.f32.partialorder %v2789, inf
      %v2886 = vsel %vm2885, %v2789, %v2884
      %vm2887 = vcmp.eq.f32.partialorder %v2789, 0.0
      %v2888 = vand.u32 %v2789, 2147483648
      %v2889 = vsel %vm2887, %v2888, %v2886
      %v2890 = vrsqrt.pop %v2790
      %v2891 = vmul.f32 %v2790, %v2890
      %vm2892 = vcmp.eq.f32.partialorder %v2790, inf
      %v2893 = vsel %vm2892, %v2790, %v2891
      %vm2894 = vcmp.eq.f32.partialorder %v2790, 0.0
      %v2895 = vand.u32 %v2790, 2147483648
      %v2896 = vsel %vm2894, %v2895, %v2893
      %v2897 = vrsqrt.pop %v2791
      %v2898 = vmul.f32 %v2791, %v2897
      %vm2899 = vcmp.eq.f32.partialorder %v2791, inf
      %v2900 = vsel %vm2899, %v2791, %v2898
      %vm2901 = vcmp.eq.f32.partialorder %v2791, 0.0
      %v2902 = vand.u32 %v2791, 2147483648
      %v2903 = vsel %vm2901, %v2902, %v2900
      %v2904 = vstv %s536
      %v2905 = vmul.f32 %v2798, %v2904
      %v2906 = vmul.f32 %v2805, %v2904
      %v2907 = vmul.f32 %v2812, %v2904
      %v2908 = vmul.f32 %v2819, %v2904
      %v2909 = vmul.f32 %v2826, %v2904
      %v2910 = vmul.f32 %v2833, %v2904
      %v2911 = vmul.f32 %v2840, %v2904
      %v2912 = vmul.f32 %v2847, %v2904
      %v2913 = vmul.f32 %v2854, %v2904
      %v2914 = vmul.f32 %v2861, %v2904
      %v2915 = vmul.f32 %v2868, %v2904
      %v2916 = vmul.f32 %v2875, %v2904
      %v2917 = vmul.f32 %v2882, %v2904
      %v2918 = vmul.f32 %v2889, %v2904
      %v2919 = vmul.f32 %v2896, %v2904
      %v2920 = vmul.f32 %v2903, %v2904
      %v2921 = vadd.f32 %v2905, 1e-08
      %v2922 = vadd.f32 %v2906, 1e-08
      %v2923 = vadd.f32 %v2907, 1e-08
      %v2924 = vadd.f32 %v2908, 1e-08
      %v2925 = vadd.f32 %v2909, 1e-08
      %v2926 = vadd.f32 %v2910, 1e-08
      %v2927 = vadd.f32 %v2911, 1e-08
      %v2928 = vadd.f32 %v2912, 1e-08
      %v2929 = vadd.f32 %v2913, 1e-08
      %v2930 = vadd.f32 %v2914, 1e-08
      %v2931 = vadd.f32 %v2915, 1e-08
      %v2932 = vadd.f32 %v2916, 1e-08
      %v2933 = vadd.f32 %v2917, 1e-08
      %v2934 = vadd.f32 %v2918, 1e-08
      %v2935 = vadd.f32 %v2919, 1e-08
      %v2936 = vadd.f32 %v2920, 1e-08
      %v2937 = vrcp.pop %v2921
      %v2938 = vmul.f32 %v2712, %v2937
      %v2939 = vrcp.pop %v2922
      %v2940 = vmul.f32 %v2713, %v2939
      %v2941 = vrcp.pop %v2923
      %v2942 = vmul.f32 %v2714, %v2941
      %v2943 = vrcp.pop %v2924
      %v2944 = vmul.f32 %v2715, %v2943
      %v2945 = vrcp.pop %v2925
      %v2946 = vmul.f32 %v2716, %v2945
      %v2947 = vrcp.pop %v2926
      %v2948 = vmul.f32 %v2717, %v2947
      %v2949 = vrcp.pop %v2927
      %v2950 = vmul.f32 %v2718, %v2949
      %v2951 = vrcp.pop %v2928
      %v2952 = vmul.f32 %v2719, %v2951
      %v2953 = vrcp.pop %v2929
      %v2954 = vmul.f32 %v2720, %v2953
      %v2955 = vrcp.pop %v2930
      %v2956 = vmul.f32 %v2721, %v2955
      %v2957 = vrcp.pop %v2931
      %v2958 = vmul.f32 %v2722, %v2957
      %v2959 = vrcp.pop %v2932
      %v2960 = vmul.f32 %v2723, %v2959
      %v2961 = vrcp.pop %v2933
      %v2962 = vmul.f32 %v2724, %v2961
      %v2963 = vrcp.pop %v2934
      %v2964 = vmul.f32 %v2725, %v2963
      %v2965 = vrcp.pop %v2935
      %v2966 = vmul.f32 %v2726, %v2965
      %v2967 = vrcp.pop %v2936
      %v2968 = vmul.f32 %v2727, %v2967
      %v2969 = vstv %s535
      %v2970 = vmul.f32 %v2969, %v2938
      %v2971 = vmul.f32 %v2969, %v2940
      %v2972 = vmul.f32 %v2969, %v2942
      %v2973 = vmul.f32 %v2969, %v2944
      %v2974 = vmul.f32 %v2969, %v2946
      %v2975 = vmul.f32 %v2969, %v2948
      %v2976 = vmul.f32 %v2969, %v2950
      %v2977 = vmul.f32 %v2969, %v2952
      %v2978 = vmul.f32 %v2969, %v2954
      %v2979 = vmul.f32 %v2969, %v2956
      %v2980 = vmul.f32 %v2969, %v2958
      %v2981 = vmul.f32 %v2969, %v2960
      %v2982 = vmul.f32 %v2969, %v2962
      %v2983 = vmul.f32 %v2969, %v2964
      %v2984 = vmul.f32 %v2969, %v2966
      %v2985 = vmul.f32 %v2969, %v2968
      %v2986 = vsub.f32 %v484, %v2970
      %v2987 = vsub.f32 %v485, %v2971
      %v2988 = vsub.f32 %v486, %v2972
      %v2989 = vsub.f32 %v487, %v2973
      %v2990 = vsub.f32 %v488, %v2974
      %v2991 = vsub.f32 %v489, %v2975
      %v2992 = vsub.f32 %v490, %v2976
      %v2993 = vsub.f32 %v491, %v2977
      %v2994 = vsub.f32 %v492, %v2978
      %v2995 = vsub.f32 %v493, %v2979
      %v2996 = vsub.f32 %v494, %v2980
      %v2997 = vsub.f32 %v495, %v2981
      %v2998 = vsub.f32 %v496, %v2982
      %v2999 = vsub.f32 %v497, %v2983
      %v3000 = vsub.f32 %v498, %v2984
      %v3001 = vsub.f32 %v499, %v2985
      %v3002 = vmax.f32 %v2986, 0.0
      %v3003 = vmax.f32 %v2987, 0.0
      %v3004 = vmax.f32 %v2988, 0.0
      %v3005 = vmax.f32 %v2989, 0.0
      %v3006 = vmax.f32 %v2990, 0.0
      %v3007 = vmax.f32 %v2991, 0.0
      %v3008 = vmax.f32 %v2992, 0.0
      %v3009 = vmax.f32 %v2993, 0.0
      %v3010 = vmax.f32 %v2994, 0.0
      %v3011 = vmax.f32 %v2995, 0.0
      %v3012 = vmax.f32 %v2996, 0.0
      %v3013 = vmax.f32 %v2997, 0.0
      %v3014 = vmax.f32 %v2998, 0.0
      %v3015 = vmax.f32 %v2999, 0.0
      %v3016 = vmax.f32 %v3000, 0.0
      %v3017 = vmax.f32 %v3001, 0.0
      %v3018 = vmin.f32 %v3002, 1.0
      %v3019 = vmin.f32 %v3003, 1.0
      %v3020 = vmin.f32 %v3004, 1.0
      %v3021 = vmin.f32 %v3005, 1.0
      %v3022 = vmin.f32 %v3006, 1.0
      %v3023 = vmin.f32 %v3007, 1.0
      %v3024 = vmin.f32 %v3008, 1.0
      %v3025 = vmin.f32 %v3009, 1.0
      %v3026 = vmin.f32 %v3010, 1.0
      %v3027 = vmin.f32 %v3011, 1.0
      %v3028 = vmin.f32 %v3012, 1.0
      %v3029 = vmin.f32 %v3013, 1.0
      %v3030 = vmin.f32 %v3014, 1.0
      %v3031 = vmin.f32 %v3015, 1.0
      %v3032 = vmin.f32 %v3016, 1.0
      %v3033 = vmin.f32 %v3017, 1.0
      %v3034 = vsub.f32 0.0, %v2627
      %v3035 = vmul.f32 %v500, 0.5
      %v3036 = vadd.f32 %v3034, %v3035
      %v3037 = vmul.f32 %v517, 0.9
      %v3038 = vmul.f32 %v3036, 0.1
      %v3039 = vadd.f32 %v3037, %v3038
      %v3040 = vmul.f32 %v534, 0.999
      %v3041 = vmul.f32 %v3036, %v3036
      %v3042 = vmul.f32 %v3041, 0.001
      %v3043 = vadd.f32 %v3040, %v3042
      %v3044 = vrsqrt.pop %v3043
      %v3045 = vmul.f32 %v3043, %v3044
      %vm3046 = vcmp.eq.f32.partialorder %v3043, inf
      %v3047 = vsel %vm3046, %v3043, %v3045
      %vm3048 = vcmp.eq.f32.partialorder %v3043, 0.0
      %v3049 = vand.u32 %v3043, 2147483648
      %v3050 = vsel %vm3048, %v3049, %v3047
      %v3051 = vmul.f32 %v3050, %v2904
      %v3052 = vadd.f32 %v3051, 1e-08
      %v3053 = vrcp.pop %v3052
      %v3054 = vmul.f32 %v3039, %v3053
      %v3055 = vmul.f32 %v2969, %v3054
      %v3056 = vsub.f32 %v500, %v3055
      %v3057 = vmax.f32 %v3056, 0.0
      %v3058 = vmin.f32 %v3057, 1.0
    $region50: #{_forward_jit.3} parent=1 // loop_footer
      %s483 = sadd.s32 1, %s479
    $region51: #{_forward_jit.3} parent=1 // loop_footer_branch
      %478 = sbr.rel target = $region47
    $region52: #{_forward_jit.3} parent=1 // loop_exit
      _
    %3059 = vst [vmem:[%s9] sm:$0xff] %v484
    %3060 = vst [vmem:[%s9 + $0x8] sm:$0xff] %v485
    %3061 = vst [vmem:[%s9 + $0x10] sm:$0xff] %v486
    %3062 = vst [vmem:[%s9 + $0x18] sm:$0xff] %v487
    %3063 = vst [vmem:[%s9 + $0x20] sm:$0xff] %v488
    %3064 = vst [vmem:[%s9 + $0x28] sm:$0xff] %v489
    %3065 = vst [vmem:[%s9 + $0x30] sm:$0xff] %v490
    %3066 = vst [vmem:[%s9 + $0x38] sm:$0xff] %v491
    %3067 = vst [vmem:[%s9 + $0x40] sm:$0xff] %v492
    %3068 = vst [vmem:[%s9 + $0x48] sm:$0xff] %v493
    %3069 = vst [vmem:[%s9 + $0x50] sm:$0xff] %v494
    %3070 = vst [vmem:[%s9 + $0x58] sm:$0xff] %v495
    %3071 = vst [vmem:[%s9 + $0x60] sm:$0xff] %v496
    %3072 = vst [vmem:[%s9 + $0x68] sm:$0xff] %v497
    %3073 = vst [vmem:[%s9 + $0x70] sm:$0xff] %v498
    %3074 = vst [vmem:[%s9 + $0x78] sm:$0xff] %v499
    %3075 = vst [vmem:[%s10] sm:$0xff] %v500
    // Predicated region
    $region53: #{_forward_jit.3} parent=1 // pred_check
      _
    $region54: #{_forward_jit.3} parent=1 // pred_check_branch
      %3077 = sbr.rel (0) target = $region56
    $region55: #{_forward_jit.3} parent=1 // pred_region
      _
    $region56: #{_forward_jit.3} parent=1 // pred_fallthru
      _
    // Predicated region
    $region57: #{_forward_jit.3} parent=1 // pred_check
      _
    $region58: #{_forward_jit.3} parent=1 // pred_check_branch
      %3079 = sbr.rel (0) target = $region60
    $region59: #{_forward_jit.3} parent=1 // pred_region
      _
    $region60: #{_forward_jit.3} parent=1 // pred_fallthru
      _
    // Predicated region
    $region61: #{_forward_jit.3} parent=1 // pred_check
      _
    $region62: #{_forward_jit.3} parent=1 // pred_check_branch
      %3081 = sbr.rel (0) target = $region64
    $region63: #{_forward_jit.3} parent=1 // pred_region
      _
    $region64: #{_forward_jit.3} parent=1 // pred_fallthru
      _
    // Predicated region
    $region65: #{_forward_jit.3} parent=1 // pred_check
      _
    $region66: #{_forward_jit.3} parent=1 // pred_check_branch
      %3083 = sbr.rel (0) target = $region68
    $region67: #{_forward_jit.3} parent=1 // pred_region
      _
    $region68: #{_forward_jit.3} parent=1 // pred_fallthru
      _
    %3084 = vsyncpa [#allocation3], 1
    %3085 = vsyncpa [#allocation5], 1

</llo_original>
